<compile_context>
chip_gen: v7x
topology: tpu7x:2x2x1
jax: 0.10.0
libtpu: 0.0.40
codegen_flags: <defaults>
</compile_context>

<pallas_src>
import functools

import jax
import jax.numpy as jnp
from jax import lax
from jax.experimental import pallas as pl
from jax.experimental.pallas import tpu as pltpu


def _layernorm(x, gamma, beta, eps=1e-5):
    mean = jnp.mean(x, axis=-1, keepdims=True)
    xc = x - mean
    var = jnp.mean(xc * xc, axis=-1, keepdims=True)
    inv = lax.rsqrt(var + eps)
    return xc * inv * gamma + beta


def block_kernel(x_ref,
                 ln1_g_ref, ln1_b_ref,
                 wq_ref, wk_ref, wv_ref, bq_ref, bk_ref, bv_ref,
                 w_aproj_ref, b_aproj_ref,
                 ln2_g_ref, ln2_b_ref,
                 w_fc_ref, b_fc_ref, w_mproj_ref, b_mproj_ref,
                 o_ref,
                 q_s, k_s, v_s, xa_s,
                 *, n_head, mlp_chunk, gelu_dtype):
    f32 = jnp.float32
    bf16 = jnp.bfloat16

    bb, T, C = x_ref.shape
    hd = C // n_head
    M = bb * T
    scale = 1.0 / (hd ** 0.5)

    # Flatten the batch block so every big GEMM sees bb*T rows (MXU fill).
    x = x_ref[...].reshape(M, C).astype(f32)

    # Residual accumulator lives in VMEM scratch (f32), updated per batch row.
    xa_s[...] = x

    # ---- ln_1 + q/k/v projections -------------------------------------------
    h16 = _layernorm(x, ln1_g_ref[...], ln1_b_ref[...]).astype(bf16)

    # Three big (M,C)x(C,C) GEMMs, bf16 operands, f32 accumulation + bias, then
    # a single cast to bf16 staged in VMEM scratch (no per-head casts later).
    q_s[...] = (jnp.dot(h16, wq_ref[...], preferred_element_type=f32)
                + bq_ref[...]).astype(bf16)
    k_s[...] = (jnp.dot(h16, wk_ref[...], preferred_element_type=f32)
                + bk_ref[...]).astype(bf16)
    v_s[...] = (jnp.dot(h16, wv_ref[...], preferred_element_type=f32)
                + bv_ref[...]).astype(bf16)

    # Causal mask, built once (finite large-negative: no inf arithmetic).
    row = lax.broadcasted_iota(jnp.int32, (T, T), 0)
    col = lax.broadcasted_iota(jnp.int32, (T, T), 1)
    causal = col <= row
    neg = jnp.float32(-1e30)
    b_aproj = b_aproj_ref[...]

    # ---- causal self-attention: dynamic loop over batch rows ----------------
    @pl.loop(0, bb)
    def _(b):
        r0 = pl.multiple_of(b * T, T)
        rows = pl.ds(r0, T)
        qb = q_s[rows, :]                      # (T, C) bf16
        kb = k_s[rows, :]
        vb = v_s[rows, :]

        acc = jnp.zeros((T, C), f32)
        for hh in range(n_head):               # small, unrolled head loop
            c0 = hh * hd
            qh = qb[:, c0:c0 + hd]             # static hd-lane slices (bf16)
            kh = kb[:, c0:c0 + hd]
            vh = vb[:, c0:c0 + hd]

            # scores: contract the last dim of both operands (no kh.T).
            s = lax.dot_general(qh, kh, (((1,), (1,)), ((), ())),
                                preferred_element_type=f32) * scale
            s = jnp.where(causal, s, neg)
            p = jnp.exp(s - jnp.max(s, axis=-1, keepdims=True))
            p = p * pl.reciprocal(jnp.sum(p, axis=-1, keepdims=True),
                                  approx=True)

            oh = jnp.dot(p.astype(bf16), vh, preferred_element_type=f32)  # (T, hd)
            # Fold c_proj per head: project through the matching (hd, C)
            # sublane slice of w_aproj -> no lane-axis concat of head outputs.
            acc = acc + jnp.dot(oh.astype(bf16), w_aproj_ref[c0:c0 + hd, :],
                                preferred_element_type=f32)

        # Fold attn-proj bias + residual for this row into the VMEM accumulator.
        xa_s[rows, :] = xa_s[rows, :] + acc + b_aproj

    # ---- ln_2 + MLP (hidden chunked over the 4C axis) ------------------------
    x2 = xa_s[...]                                              # (M, C) f32
    h2 = _layernorm(x2, ln2_g_ref[...], ln2_b_ref[...]).astype(bf16)

    hidden = w_fc_ref.shape[1]
    n_chunks = hidden // mlp_chunk

    def mlp_body(ci, acc):
        c0 = pl.multiple_of(ci * mlp_chunk, mlp_chunk)
        cols = pl.ds(c0, mlp_chunk)
        hc = (jnp.dot(h2, w_fc_ref[:, cols], preferred_element_type=f32)
              + b_fc_ref[:, cols])
        # GELU in bf16 on v6e/v7x (bf16 VPU/EUP), f32 on v5e.
        hc = jax.nn.gelu(hc.astype(gelu_dtype), approximate=True)
        return acc + jnp.dot(hc.astype(bf16), w_mproj_ref[cols, :],
                             preferred_element_type=f32)

    mlp = lax.fori_loop(0, n_chunks, mlp_body, jnp.zeros((M, C), f32),
                        unroll=True)

    out = x2 + mlp + b_mproj_ref[...]
    o_ref[...] = out.reshape(bb, T, C).astype(o_ref.dtype)


# --------------------------- wrapper / budgeting ------------------------------

_GEN_CONFIG = {
    # vmem_limit leaves headroom for double-buffered I/O blocks + scratch.
    "v7x": dict(vmem_limit=48 * 1024 * 1024, max_rows=1024, min_grid_steps=2,
                gelu_dtype=jnp.bfloat16),
    "v6e": dict(vmem_limit=100 * 1024 * 1024, max_rows=2048, min_grid_steps=1,
                gelu_dtype=jnp.bfloat16),
    "v5e": dict(vmem_limit=96 * 1024 * 1024, max_rows=2048, min_grid_steps=1,
                gelu_dtype=jnp.float32),
    "default": dict(vmem_limit=64 * 1024 * 1024, max_rows=1024, min_grid_steps=1,
                    gelu_dtype=jnp.float32),
}


def _tpu_generation():
    kind = jax.devices()[0].device_kind.lower()
    if "v7" in kind or "7x" in kind:
        return "v7x"
    if "v6" in kind:
        return "v6e"
    if "v5" in kind and ("lite" in kind or "5e" in kind):
        return "v5e"
    return "default"


def _pick_block_b(B, T, *, max_rows, min_grid_steps, target_rows=256):
    """Divisor of B: >= target_rows MXU rows if possible, VMEM-capped, and
    leaving at least `min_grid_steps` grid steps (2 TCs on v7x)."""
    divisors = [d for d in range(1, B + 1) if B % d == 0]
    feasible = [d for d in divisors
                if d * T <= max_rows and (B // d) >= min_grid_steps]
    if not feasible:
        feasible = [d for d in divisors if d * T <= max_rows]
    if not feasible:
        return 1
    for d in feasible:
        if d * T >= target_rows:
            return d
    return max(feasible)


def _const_index(ndim):
    def idx(i):
        return (0,) * ndim
    return idx


def tt_block(x, params, *, n_head, block_b=None):
    B, T, C = x.shape
    assert C % n_head == 0

    gen = _tpu_generation()
    cfg = _GEN_CONFIG[gen]

    bb = (_pick_block_b(B, T, max_rows=cfg["max_rows"],
                        min_grid_steps=cfg["min_grid_steps"])
          if block_b is None else block_b)
    assert B % bb == 0
    M = bb * T

    f32, bf16 = jnp.float32, jnp.bfloat16

    # Split fused c_attn into q/k/v weights on the host (kills the in-kernel
    # C / 2C boundary slices); cast the big GEMM weights to bf16 once.
    w_attn = params["w_attn"]
    b_attn = params["b_attn"].reshape(1, -1)
    wq = w_attn[:, 0 * C:1 * C].astype(bf16)
    wk = w_attn[:, 1 * C:2 * C].astype(bf16)
    wv = w_attn[:, 2 * C:3 * C].astype(bf16)
    bq = b_attn[:, 0 * C:1 * C].astype(f32)
    bk = b_attn[:, 1 * C:2 * C].astype(f32)
    bv = b_attn[:, 2 * C:3 * C].astype(f32)

    param_arrays = [
        params["ln1_g"].reshape(1, C).astype(f32),
        params["ln1_b"].reshape(1, C).astype(f32),
        wq, wk, wv, bq, bk, bv,
        params["w_aproj"].astype(bf16),
        params["b_aproj"].reshape(1, C).astype(f32),
        params["ln2_g"].reshape(1, C).astype(f32),
        params["ln2_b"].reshape(1, C).astype(f32),
        params["w_fc"].astype(bf16),
        params["b_fc"].reshape(1, -1).astype(f32),
        params["w_mproj"].astype(bf16),
        params["b_mproj"].reshape(1, C).astype(f32),
    ]

    hidden = params["w_fc"].shape[1]
    mlp_chunk = next(c for c in (1024, 512, 256, 128, hidden) if hidden % c == 0)
    assert hidden % mlp_chunk == 0

    # Grid-invariant (constant index_map) weight/bias blocks: fetched once.
    weight_specs = [pl.BlockSpec(a.shape, _const_index(a.ndim))
                    for a in param_arrays]
    in_specs = [pl.BlockSpec((bb, T, C), lambda i: (i, 0, 0))] + weight_specs
    out_specs = pl.BlockSpec((bb, T, C), lambda i: (i, 0, 0))

    scratch_shapes = [
        pltpu.VMEM((M, C), bf16),   # q
        pltpu.VMEM((M, C), bf16),   # k
        pltpu.VMEM((M, C), bf16),   # v
        pltpu.VMEM((M, C), f32),    # residual / attention accumulator
    ]

    kernel = functools.partial(block_kernel, n_head=n_head,
                               mlp_chunk=mlp_chunk,
                               gelu_dtype=cfg["gelu_dtype"])

    return pl.pallas_call(
        kernel,
        out_shape=jax.ShapeDtypeStruct((B, T, C), x.dtype),
        grid_spec=pltpu.PrefetchScalarGridSpec(
            num_scalar_prefetch=0,
            grid=(B // bb,),
            in_specs=in_specs,
            out_specs=out_specs,
            scratch_shapes=scratch_shapes,
        ),
        compiler_params=pltpu.CompilerParams(
            dimension_semantics=("parallel",),
            vmem_limit_bytes=cfg["vmem_limit"],
        ),
    )(x, *param_arrays)


# ---------------- pure-JAX f32 reference (for sanity checking) ---------------
def ref_block(x, params, *, n_head):
    B, T, C = x.shape
    hd = C // n_head
    scale = 1.0 / (hd ** 0.5)

    def ln(x, g, b):
        m = jnp.mean(x, -1, keepdims=True)
        v = jnp.mean((x - m) ** 2, -1, keepdims=True)
        return (x - m) * lax.rsqrt(v + 1e-5) * g + b

    h = ln(x, params["ln1_g"], params["ln1_b"])
    qkv = h @ params["w_attn"] + params["b_attn"]
    q, k, v = jnp.split(qkv, 3, axis=-1)
    q = q.reshape(B, T, n_head, hd).transpose(0, 2, 1, 3)
    k = k.reshape(B, T, n_head, hd).transpose(0, 2, 1, 3)
    v = v.reshape(B, T, n_head, hd).transpose(0, 2, 1, 3)
    s = jnp.einsum("bhqd,bhkd->bhqk", q, k) * scale
    mask = jnp.tril(jnp.ones((T, T), bool))
    s = jnp.where(mask, s, -jnp.inf)
    p = jax.nn.softmax(s, axis=-1)
    a = jnp.einsum("bhqk,bhkd->bhqd", p, v).transpose(0, 2, 1, 3).reshape(B, T, C)
    a = a @ params["w_aproj"] + params["b_aproj"]
    x = x + a
    h = ln(x, params["ln2_g"], params["ln2_b"])
    h = jax.nn.gelu(h @ params["w_fc"] + params["b_fc"], approximate=True)
    h = h @ params["w_mproj"] + params["b_mproj"]
    return x + h


if __name__ == "__main__":
    B, T, C, n_head = 2, 32, 128, 4

    key = jax.random.PRNGKey(0)
    ks = jax.random.split(key, 12)
    f32 = jnp.float32

    params = {
        "ln1_g": jax.random.normal(ks[0], (1, C), f32) * 0.1 + 1.0,
        "ln1_b": jax.random.normal(ks[1], (1, C), f32) * 0.1,
        "w_attn": jax.random.normal(ks[2], (C, 3 * C), f32) * 0.02,
        "b_attn": jax.random.normal(ks[3], (1, 3 * C), f32) * 0.02,
        "w_aproj": jax.random.normal(ks[4], (C, C), f32) * 0.02,
        "b_aproj": jax.random.normal(ks[5], (1, C), f32) * 0.02,
        "ln2_g": jax.random.normal(ks[6], (1, C), f32) * 0.1 + 1.0,
        "ln2_b": jax.random.normal(ks[7], (1, C), f32) * 0.1,
        "w_fc": jax.random.normal(ks[8], (C, 4 * C), f32) * 0.02,
        "b_fc": jax.random.normal(ks[9], (1, 4 * C), f32) * 0.02,
        "w_mproj": jax.random.normal(ks[10], (4 * C, C), f32) * 0.02,
        "b_mproj": jax.random.normal(ks[11], (1, C), f32) * 0.02,
    }
    x = jax.random.normal(jax.random.PRNGKey(42), (B, T, C), f32)

    out = jax.block_until_ready(tt_block(x, params, n_head=n_head))
    ref = jax.block_until_ready(ref_block(x, params, n_head=n_head))

    assert out.shape == (B, T, C)
    assert jnp.all(jnp.isfinite(out))
    # bf16 MXU operands with f32 accumulation vs. the pure-f32 reference.
    max_err = float(jnp.max(jnp.abs(out - ref)))
    assert max_err < 3e-2, max_err

    print("KERNEL_OK")
</pallas_src>

<mosaic_0001>
module attributes {stable_mosaic.version = 11 : i64} {
  func.func @block_kernel(%arg0: i32, %arg1: memref<2x32x128xf32, #tpu.memory_space<vmem>>, %arg2: memref<1x128xf32, #tpu.memory_space<vmem>>, %arg3: memref<1x128xf32, #tpu.memory_space<vmem>>, %arg4: memref<128x128xbf16, #tpu.memory_space<vmem>>, %arg5: memref<128x128xbf16, #tpu.memory_space<vmem>>, %arg6: memref<128x128xbf16, #tpu.memory_space<vmem>>, %arg7: memref<1x128xf32, #tpu.memory_space<vmem>>, %arg8: memref<1x128xf32, #tpu.memory_space<vmem>>, %arg9: memref<1x128xf32, #tpu.memory_space<vmem>>, %arg10: memref<128x128xbf16, #tpu.memory_space<vmem>>, %arg11: memref<1x128xf32, #tpu.memory_space<vmem>>, %arg12: memref<1x128xf32, #tpu.memory_space<vmem>>, %arg13: memref<1x128xf32, #tpu.memory_space<vmem>>, %arg14: memref<128x512xbf16, #tpu.memory_space<vmem>>, %arg15: memref<1x512xf32, #tpu.memory_space<vmem>>, %arg16: memref<512x128xbf16, #tpu.memory_space<vmem>>, %arg17: memref<1x128xf32, #tpu.memory_space<vmem>>, %arg18: memref<2x32x128xf32, #tpu.memory_space<vmem>>, %arg19: memref<64x128xbf16, #tpu.memory_space<vmem>>, %arg20: memref<64x128xbf16, #tpu.memory_space<vmem>>, %arg21: memref<64x128xbf16, #tpu.memory_space<vmem>>, %arg22: memref<64x128xf32, #tpu.memory_space<vmem>>) attributes {dimension_semantics = [#tpu.dimension_semantics<parallel>], iteration_bounds = array<i64: 1>, scalar_prefetch = 0 : i64, scratch_operands = 4 : i64, tpu.core_type = #tpu.core_type<tc>, window_params = [{transform_indices = @transform_0, window_bounds = array<i64: 2, 32, 128>}, {pipeline_mode = #tpu.pipeline_mode<synchronous>, transform_indices = @transform_1, window_bounds = array<i64: 1, 128>}, {pipeline_mode = #tpu.pipeline_mode<synchronous>, transform_indices = @transform_2, window_bounds = array<i64: 1, 128>}, {pipeline_mode = #tpu.pipeline_mode<synchronous>, transform_indices = @transform_3, window_bounds = array<i64: 128, 128>}, {pipeline_mode = #tpu.pipeline_mode<synchronous>, transform_indices = @transform_4, window_bounds = array<i64: 128, 128>}, {pipeline_mode = #tpu.pipeline_mode<synchronous>, transform_indices = @transform_5, window_bounds = array<i64: 128, 128>}, {pipeline_mode = #tpu.pipeline_mode<synchronous>, transform_indices = @transform_6, window_bounds = array<i64: 1, 128>}, {pipeline_mode = #tpu.pipeline_mode<synchronous>, transform_indices = @transform_7, window_bounds = array<i64: 1, 128>}, {pipeline_mode = #tpu.pipeline_mode<synchronous>, transform_indices = @transform_8, window_bounds = array<i64: 1, 128>}, {pipeline_mode = #tpu.pipeline_mode<synchronous>, transform_indices = @transform_9, window_bounds = array<i64: 128, 128>}, {pipeline_mode = #tpu.pipeline_mode<synchronous>, transform_indices = @transform_10, window_bounds = array<i64: 1, 128>}, {pipeline_mode = #tpu.pipeline_mode<synchronous>, transform_indices = @transform_11, window_bounds = array<i64: 1, 128>}, {pipeline_mode = #tpu.pipeline_mode<synchronous>, transform_indices = @transform_12, window_bounds = array<i64: 1, 128>}, {pipeline_mode = #tpu.pipeline_mode<synchronous>, transform_indices = @transform_13, window_bounds = array<i64: 128, 512>}, {pipeline_mode = #tpu.pipeline_mode<synchronous>, transform_indices = @transform_14, window_bounds = array<i64: 1, 512>}, {pipeline_mode = #tpu.pipeline_mode<synchronous>, transform_indices = @transform_15, window_bounds = array<i64: 512, 128>}, {pipeline_mode = #tpu.pipeline_mode<synchronous>, transform_indices = @transform_16, window_bounds = array<i64: 1, 128>}, {transform_indices = @transform_17, window_bounds = array<i64: 2, 32, 128>}]} {
    %c0 = arith.constant 0 : index
    %c0_0 = arith.constant 0 : index
    %c0_1 = arith.constant 0 : index
    %0 = vector.load %arg1[%c0, %c0_0, %c0_1] : memref<2x32x128xf32, #tpu.memory_space<vmem>>, vector<2x32x128xf32>
    %1 = vector.shape_cast %0 : vector<2x32x128xf32> to vector<64x128xf32>
    %c0_2 = arith.constant 0 : index
    %c0_3 = arith.constant 0 : index
    %2 = vector.load %arg22[%c0_2, %c0_3] : memref<64x128xf32, #tpu.memory_space<vmem>>, vector<64x128xf32>
    tpu.vector_store %arg22[%c0_2, %c0_3], %1 {strides = array<i32>} : memref<64x128xf32, #tpu.memory_space<vmem>>, vector<64x128xf32>,
    %c0_4 = arith.constant 0 : index
    %c0_5 = arith.constant 0 : index
    %3 = vector.load %arg2[%c0_4, %c0_5] : memref<1x128xf32, #tpu.memory_space<vmem>>, vector<1x128xf32>
    %c0_6 = arith.constant 0 : index
    %c0_7 = arith.constant 0 : index
    %4 = vector.load %arg3[%c0_6, %c0_7] : memref<1x128xf32, #tpu.memory_space<vmem>>, vector<1x128xf32>
    %cst = arith.constant dense<0.000000e+00> : vector<64xf32>
    %5 = vector.multi_reduction <add>, %1, %cst [1] : vector<64x128xf32> to vector<64xf32>
    %6 = vector.shape_cast %5 : vector<64xf32> to vector<64x1xf32>
    %cst_8 = arith.constant 1.280000e+02 : f32
    %7 = vector.broadcast %cst_8 : f32 to vector<64x1xf32>
    %8 = arith.divf %6, %7 : vector<64x1xf32>
    %9 = vector.broadcast %8 : vector<64x1xf32> to vector<64x128xf32>
    %10 = arith.subf %1, %9 : vector<64x128xf32>
    %11 = arith.mulf %10, %10 : vector<64x128xf32>
    %cst_9 = arith.constant dense<0.000000e+00> : vector<64xf32>
    %12 = vector.multi_reduction <add>, %11, %cst_9 [1] : vector<64x128xf32> to vector<64xf32>
    %13 = vector.shape_cast %12 : vector<64xf32> to vector<64x1xf32>
    %cst_10 = arith.constant 1.280000e+02 : f32
    %14 = vector.broadcast %cst_10 : f32 to vector<64x1xf32>
    %15 = arith.divf %13, %14 : vector<64x1xf32>
    %cst_11 = arith.constant 9.99999974E-6 : f32
    %16 = vector.broadcast %cst_11 : f32 to vector<64x1xf32>
    %17 = arith.addf %15, %16 : vector<64x1xf32>
    %18 = math.rsqrt %17 : vector<64x1xf32>
    %19 = vector.broadcast %18 : vector<64x1xf32> to vector<64x128xf32>
    %20 = arith.mulf %10, %19 : vector<64x128xf32>
    %21 = vector.broadcast %3 : vector<1x128xf32> to vector<64x128xf32>
    %22 = arith.mulf %20, %21 : vector<64x128xf32>
    %23 = vector.broadcast %4 : vector<1x128xf32> to vector<64x128xf32>
    %24 = arith.addf %22, %23 : vector<64x128xf32>
    %25 = arith.truncf %24 : vector<64x128xf32> to vector<64x128xbf16>
    %c0_12 = arith.constant 0 : index
    %c0_13 = arith.constant 0 : index
    %26 = vector.load %arg4[%c0_12, %c0_13] : memref<128x128xbf16, #tpu.memory_space<vmem>>, vector<128x128xbf16>
    %cst_14 = arith.constant dense<0.000000e+00> : vector<64x128xf32>
    %27 = tpu.matmul %25, %26, %cst_14 {dimension_numbers = #tpu.dot_dimension_numbers<[1], [0], [0], [1], [0, 0, 1, 1], [], []>} : vector<64x128xbf16>, vector<128x128xbf16>, vector<64x128xf32> -> vector<64x128xf32>
    %c0_15 = arith.constant 0 : index
    %c0_16 = arith.constant 0 : index
    %28 = vector.load %arg7[%c0_15, %c0_16] : memref<1x128xf32, #tpu.memory_space<vmem>>, vector<1x128xf32>
    %29 = vector.broadcast %28 : vector<1x128xf32> to vector<64x128xf32>
    %30 = arith.addf %27, %29 : vector<64x128xf32>
    %31 = arith.truncf %30 : vector<64x128xf32> to vector<64x128xbf16>
    %c0_17 = arith.constant 0 : index
    %c0_18 = arith.constant 0 : index
    %32 = vector.load %arg19[%c0_17, %c0_18] : memref<64x128xbf16, #tpu.memory_space<vmem>>, vector<64x128xbf16>
    tpu.vector_store %arg19[%c0_17, %c0_18], %31 {strides = array<i32>} : memref<64x128xbf16, #tpu.memory_space<vmem>>, vector<64x128xbf16>,
    %c0_19 = arith.constant 0 : index
    %c0_20 = arith.constant 0 : index
    %33 = vector.load %arg5[%c0_19, %c0_20] : memref<128x128xbf16, #tpu.memory_space<vmem>>, vector<128x128xbf16>
    %cst_21 = arith.constant dense<0.000000e+00> : vector<64x128xf32>
    %34 = tpu.matmul %25, %33, %cst_21 {dimension_numbers = #tpu.dot_dimension_numbers<[1], [0], [0], [1], [0, 0, 1, 1], [], []>} : vector<64x128xbf16>, vector<128x128xbf16>, vector<64x128xf32> -> vector<64x128xf32>
    %c0_22 = arith.constant 0 : index
    %c0_23 = arith.constant 0 : index
    %35 = vector.load %arg8[%c0_22, %c0_23] : memref<1x128xf32, #tpu.memory_space<vmem>>, vector<1x128xf32>
    %36 = vector.broadcast %35 : vector<1x128xf32> to vector<64x128xf32>
    %37 = arith.addf %34, %36 : vector<64x128xf32>
    %38 = arith.truncf %37 : vector<64x128xf32> to vector<64x128xbf16>
    %c0_24 = arith.constant 0 : index
    %c0_25 = arith.constant 0 : index
    %39 = vector.load %arg20[%c0_24, %c0_25] : memref<64x128xbf16, #tpu.memory_space<vmem>>, vector<64x128xbf16>
    tpu.vector_store %arg20[%c0_24, %c0_25], %38 {strides = array<i32>} : memref<64x128xbf16, #tpu.memory_space<vmem>>, vector<64x128xbf16>,
    %c0_26 = arith.constant 0 : index
    %c0_27 = arith.constant 0 : index
    %40 = vector.load %arg6[%c0_26, %c0_27] : memref<128x128xbf16, #tpu.memory_space<vmem>>, vector<128x128xbf16>
    %cst_28 = arith.constant dense<0.000000e+00> : vector<64x128xf32>
    %41 = tpu.matmul %25, %40, %cst_28 {dimension_numbers = #tpu.dot_dimension_numbers<[1], [0], [0], [1], [0, 0, 1, 1], [], []>} : vector<64x128xbf16>, vector<128x128xbf16>, vector<64x128xf32> -> vector<64x128xf32>
    %c0_29 = arith.constant 0 : index
    %c0_30 = arith.constant 0 : index
    %42 = vector.load %arg9[%c0_29, %c0_30] : memref<1x128xf32, #tpu.memory_space<vmem>>, vector<1x128xf32>
    %43 = vector.broadcast %42 : vector<1x128xf32> to vector<64x128xf32>
    %44 = arith.addf %41, %43 : vector<64x128xf32>
    %45 = arith.truncf %44 : vector<64x128xf32> to vector<64x128xbf16>
    %c0_31 = arith.constant 0 : index
    %c0_32 = arith.constant 0 : index
    %46 = vector.load %arg21[%c0_31, %c0_32] : memref<64x128xbf16, #tpu.memory_space<vmem>>, vector<64x128xbf16>
    tpu.vector_store %arg21[%c0_31, %c0_32], %45 {strides = array<i32>} : memref<64x128xbf16, #tpu.memory_space<vmem>>, vector<64x128xbf16>,
    %47 = tpu.iota {dimensions = array<i32: 0>} : vector<32x32xi32>
    %48 = tpu.iota {dimensions = array<i32: 1>} : vector<32x32xi32>
    %49 = arith.cmpi sle, %48, %47 : vector<32x32xi32>
    %c0_33 = arith.constant 0 : index
    %c0_34 = arith.constant 0 : index
    %50 = vector.load %arg11[%c0_33, %c0_34] : memref<1x128xf32, #tpu.memory_space<vmem>>, vector<1x128xf32>
    %cst_35 = arith.constant -1.000000e+30 : f32
    %c0_i32 = arith.constant 0 : i32
    %c2_i32 = arith.constant 2 : i32
    %51 = arith.addi %c0_i32, %c2_i32 : i32
    %c1_i32 = arith.constant 1 : i32
    scf.for %arg23 = %c0_i32 to %51 step %c1_i32  : i32 {
      %c1_i32_65 = arith.constant 1 : i32
      %110 = arith.muli %arg23, %c1_i32_65 : i32
      %c0_i32_66 = arith.constant 0 : i32
      %111 = arith.addi %c0_i32_66, %110 : i32
      %c32_i32 = arith.constant 32 : i32
      %112 = arith.muli %111, %c32_i32 : i32
      %113 = tpu.assume_multiple %112, 32 : i32
      %114 = arith.index_cast %113 : i32 to index
      %c0_67 = arith.constant 0 : index
      %115 = vector.load %arg19[%114, %c0_67] : memref<64x128xbf16, #tpu.memory_space<vmem>>, vector<32x128xbf16>
      %116 = arith.index_cast %113 : i32 to index
      %c0_68 = arith.constant 0 : index
      %117 = vector.load %arg20[%116, %c0_68] : memref<64x128xbf16, #tpu.memory_space<vmem>>, vector<32x128xbf16>
      %118 = arith.index_cast %113 : i32 to index
      %c0_69 = arith.constant 0 : index
      %119 = vector.load %arg21[%118, %c0_69] : memref<64x128xbf16, #tpu.memory_space<vmem>>, vector<32x128xbf16>
      %cst_70 = arith.constant 0.000000e+00 : f32
      %120 = vector.broadcast %cst_70 : f32 to vector<32x128xf32>
      %121 = vector.extract_strided_slice %115 {offsets = [0, 0], sizes = [32, 32], strides = [1, 1]} : vector<32x128xbf16> to vector<32x32xbf16>
      %122 = vector.extract_strided_slice %117 {offsets = [0, 0], sizes = [32, 32], strides = [1, 1]} : vector<32x128xbf16> to vector<32x32xbf16>
      %123 = vector.extract_strided_slice %119 {offsets = [0, 0], sizes = [32, 32], strides = [1, 1]} : vector<32x128xbf16> to vector<32x32xbf16>
      %cst_71 = arith.constant dense<0.000000e+00> : vector<32x32xf32>
      %124 = tpu.matmul %121, %122, %cst_71 {dimension_numbers = #tpu.dot_dimension_numbers<[1], [1], [0], [0], [0, 0, 1, 0], [], []>} : vector<32x32xbf16>, vector<32x32xbf16>, vector<32x32xf32> -> vector<32x32xf32>
      %cst_72 = arith.constant 0.176776692 : f32
      %125 = vector.broadcast %cst_72 : f32 to vector<32x32xf32>
      %126 = arith.mulf %124, %125 : vector<32x32xf32>
      %127 = vector.broadcast %cst_35 : f32 to vector<32x32xf32>
      %128 = arith.select %49, %126, %127 : vector<32x32xi1>, vector<32x32xf32>
      %cst_73 = arith.constant dense<0xFF800000> : vector<32xf32>
      %129 = vector.multi_reduction <maximumf>, %128, %cst_73 [1] : vector<32x32xf32> to vector<32xf32>
      %130 = vector.shape_cast %129 : vector<32xf32> to vector<32x1xf32>
      %131 = vector.broadcast %130 : vector<32x1xf32> to vector<32x32xf32>
      %132 = arith.subf %128, %131 : vector<32x32xf32>
      %133 = math.exp %132 : vector<32x32xf32>
      %cst_74 = arith.constant dense<0.000000e+00> : vector<32xf32>
      %134 = vector.multi_reduction <add>, %133, %cst_74 [1] : vector<32x32xf32> to vector<32xf32>
      %135 = vector.shape_cast %134 : vector<32xf32> to vector<32x1xf32>
      %136 = tpu.reciprocal %135 {approx = true} : vector<32x1xf32> -> vector<32x1xf32>
      %137 = vector.broadcast %136 : vector<32x1xf32> to vector<32x32xf32>
      %138 = arith.mulf %133, %137 : vector<32x32xf32>
      %139 = arith.truncf %138 : vector<32x32xf32> to vector<32x32xbf16>
      %cst_75 = arith.constant dense<0.000000e+00> : vector<32x32xf32>
      %140 = tpu.matmul %139, %123, %cst_75 {dimension_numbers = #tpu.dot_dimension_numbers<[1], [0], [0], [1], [0, 0, 1, 1], [], []>} : vector<32x32xbf16>, vector<32x32xbf16>, vector<32x32xf32> -> vector<32x32xf32>
      %141 = arith.truncf %140 : vector<32x32xf32> to vector<32x32xbf16>
      %c0_76 = arith.constant 0 : index
      %c0_77 = arith.constant 0 : index
      %142 = vector.load %arg10[%c0_76, %c0_77] : memref<128x128xbf16, #tpu.memory_space<vmem>>, vector<32x128xbf16>
      %cst_78 = arith.constant dense<0.000000e+00> : vector<32x128xf32>
      %143 = tpu.matmul %141, %142, %cst_78 {dimension_numbers = #tpu.dot_dimension_numbers<[1], [0], [0], [1], [0, 0, 1, 1], [], []>} : vector<32x32xbf16>, vector<32x128xbf16>, vector<32x128xf32> -> vector<32x128xf32>
      %144 = arith.addf %120, %143 : vector<32x128xf32>
      %145 = vector.extract_strided_slice %115 {offsets = [0, 32], sizes = [32, 32], strides = [1, 1]} : vector<32x128xbf16> to vector<32x32xbf16>
      %146 = vector.extract_strided_slice %117 {offsets = [0, 32], sizes = [32, 32], strides = [1, 1]} : vector<32x128xbf16> to vector<32x32xbf16>
      %147 = vector.extract_strided_slice %119 {offsets = [0, 32], sizes = [32, 32], strides = [1, 1]} : vector<32x128xbf16> to vector<32x32xbf16>
      %cst_79 = arith.constant dense<0.000000e+00> : vector<32x32xf32>
      %148 = tpu.matmul %145, %146, %cst_79 {dimension_numbers = #tpu.dot_dimension_numbers<[1], [1], [0], [0], [0, 0, 1, 0], [], []>} : vector<32x32xbf16>, vector<32x32xbf16>, vector<32x32xf32> -> vector<32x32xf32>
      %cst_80 = arith.constant 0.176776692 : f32
      %149 = vector.broadcast %cst_80 : f32 to vector<32x32xf32>
      %150 = arith.mulf %148, %149 : vector<32x32xf32>
      %151 = vector.broadcast %cst_35 : f32 to vector<32x32xf32>
      %152 = arith.select %49, %150, %151 : vector<32x32xi1>, vector<32x32xf32>
      %cst_81 = arith.constant dense<0xFF800000> : vector<32xf32>
      %153 = vector.multi_reduction <maximumf>, %152, %cst_81 [1] : vector<32x32xf32> to vector<32xf32>
      %154 = vector.shape_cast %153 : vector<32xf32> to vector<32x1xf32>
      %155 = vector.broadcast %154 : vector<32x1xf32> to vector<32x32xf32>
      %156 = arith.subf %152, %155 : vector<32x32xf32>
      %157 = math.exp %156 : vector<32x32xf32>
      %cst_82 = arith.constant dense<0.000000e+00> : vector<32xf32>
      %158 = vector.multi_reduction <add>, %157, %cst_82 [1] : vector<32x32xf32> to vector<32xf32>
      %159 = vector.shape_cast %158 : vector<32xf32> to vector<32x1xf32>
      %160 = tpu.reciprocal %159 {approx = true} : vector<32x1xf32> -> vector<32x1xf32>
      %161 = vector.broadcast %160 : vector<32x1xf32> to vector<32x32xf32>
      %162 = arith.mulf %157, %161 : vector<32x32xf32>
      %163 = arith.truncf %162 : vector<32x32xf32> to vector<32x32xbf16>
      %cst_83 = arith.constant dense<0.000000e+00> : vector<32x32xf32>
      %164 = tpu.matmul %163, %147, %cst_83 {dimension_numbers = #tpu.dot_dimension_numbers<[1], [0], [0], [1], [0, 0, 1, 1], [], []>} : vector<32x32xbf16>, vector<32x32xbf16>, vector<32x32xf32> -> vector<32x32xf32>
      %165 = arith.truncf %164 : vector<32x32xf32> to vector<32x32xbf16>
      %c32 = arith.constant 32 : index
      %c0_84 = arith.constant 0 : index
      %166 = vector.load %arg10[%c32, %c0_84] : memref<128x128xbf16, #tpu.memory_space<vmem>>, vector<32x128xbf16>
      %cst_85 = arith.constant dense<0.000000e+00> : vector<32x128xf32>
      %167 = tpu.matmul %165, %166, %cst_85 {dimension_numbers = #tpu.dot_dimension_numbers<[1], [0], [0], [1], [0, 0, 1, 1], [], []>} : vector<32x32xbf16>, vector<32x128xbf16>, vector<32x128xf32> -> vector<32x128xf32>
      %168 = arith.addf %144, %167 : vector<32x128xf32>
      %169 = vector.extract_strided_slice %115 {offsets = [0, 64], sizes = [32, 32], strides = [1, 1]} : vector<32x128xbf16> to vector<32x32xbf16>
      %170 = vector.extract_strided_slice %117 {offsets = [0, 64], sizes = [32, 32], strides = [1, 1]} : vector<32x128xbf16> to vector<32x32xbf16>
      %171 = vector.extract_strided_slice %119 {offsets = [0, 64], sizes = [32, 32], strides = [1, 1]} : vector<32x128xbf16> to vector<32x32xbf16>
      %cst_86 = arith.constant dense<0.000000e+00> : vector<32x32xf32>
      %172 = tpu.matmul %169, %170, %cst_86 {dimension_numbers = #tpu.dot_dimension_numbers<[1], [1], [0], [0], [0, 0, 1, 0], [], []>} : vector<32x32xbf16>, vector<32x32xbf16>, vector<32x32xf32> -> vector<32x32xf32>
      %cst_87 = arith.constant 0.176776692 : f32
      %173 = vector.broadcast %cst_87 : f32 to vector<32x32xf32>
      %174 = arith.mulf %172, %173 : vector<32x32xf32>
      %175 = vector.broadcast %cst_35 : f32 to vector<32x32xf32>
      %176 = arith.select %49, %174, %175 : vector<32x32xi1>, vector<32x32xf32>
      %cst_88 = arith.constant dense<0xFF800000> : vector<32xf32>
      %177 = vector.multi_reduction <maximumf>, %176, %cst_88 [1] : vector<32x32xf32> to vector<32xf32>
      %178 = vector.shape_cast %177 : vector<32xf32> to vector<32x1xf32>
      %179 = vector.broadcast %178 : vector<32x1xf32> to vector<32x32xf32>
      %180 = arith.subf %176, %179 : vector<32x32xf32>
      %181 = math.exp %180 : vector<32x32xf32>
      %cst_89 = arith.constant dense<0.000000e+00> : vector<32xf32>
      %182 = vector.multi_reduction <add>, %181, %cst_89 [1] : vector<32x32xf32> to vector<32xf32>
      %183 = vector.shape_cast %182 : vector<32xf32> to vector<32x1xf32>
      %184 = tpu.reciprocal %183 {approx = true} : vector<32x1xf32> -> vector<32x1xf32>
      %185 = vector.broadcast %184 : vector<32x1xf32> to vector<32x32xf32>
      %186 = arith.mulf %181, %185 : vector<32x32xf32>
      %187 = arith.truncf %186 : vector<32x32xf32> to vector<32x32xbf16>
      %cst_90 = arith.constant dense<0.000000e+00> : vector<32x32xf32>
      %188 = tpu.matmul %187, %171, %cst_90 {dimension_numbers = #tpu.dot_dimension_numbers<[1], [0], [0], [1], [0, 0, 1, 1], [], []>} : vector<32x32xbf16>, vector<32x32xbf16>, vector<32x32xf32> -> vector<32x32xf32>
      %189 = arith.truncf %188 : vector<32x32xf32> to vector<32x32xbf16>
      %c64 = arith.constant 64 : index
      %c0_91 = arith.constant 0 : index
      %190 = vector.load %arg10[%c64, %c0_91] : memref<128x128xbf16, #tpu.memory_space<vmem>>, vector<32x128xbf16>
      %cst_92 = arith.constant dense<0.000000e+00> : vector<32x128xf32>
      %191 = tpu.matmul %189, %190, %cst_92 {dimension_numbers = #tpu.dot_dimension_numbers<[1], [0], [0], [1], [0, 0, 1, 1], [], []>} : vector<32x32xbf16>, vector<32x128xbf16>, vector<32x128xf32> -> vector<32x128xf32>
      %192 = arith.addf %168, %191 : vector<32x128xf32>
      %193 = vector.extract_strided_slice %115 {offsets = [0, 96], sizes = [32, 32], strides = [1, 1]} : vector<32x128xbf16> to vector<32x32xbf16>
      %194 = vector.extract_strided_slice %117 {offsets = [0, 96], sizes = [32, 32], strides = [1, 1]} : vector<32x128xbf16> to vector<32x32xbf16>
      %195 = vector.extract_strided_slice %119 {offsets = [0, 96], sizes = [32, 32], strides = [1, 1]} : vector<32x128xbf16> to vector<32x32xbf16>
      %cst_93 = arith.constant dense<0.000000e+00> : vector<32x32xf32>
      %196 = tpu.matmul %193, %194, %cst_93 {dimension_numbers = #tpu.dot_dimension_numbers<[1], [1], [0], [0], [0, 0, 1, 0], [], []>} : vector<32x32xbf16>, vector<32x32xbf16>, vector<32x32xf32> -> vector<32x32xf32>
      %cst_94 = arith.constant 0.176776692 : f32
      %197 = vector.broadcast %cst_94 : f32 to vector<32x32xf32>
      %198 = arith.mulf %196, %197 : vector<32x32xf32>
      %199 = vector.broadcast %cst_35 : f32 to vector<32x32xf32>
      %200 = arith.select %49, %198, %199 : vector<32x32xi1>, vector<32x32xf32>
      %cst_95 = arith.constant dense<0xFF800000> : vector<32xf32>
      %201 = vector.multi_reduction <maximumf>, %200, %cst_95 [1] : vector<32x32xf32> to vector<32xf32>
      %202 = vector.shape_cast %201 : vector<32xf32> to vector<32x1xf32>
      %203 = vector.broadcast %202 : vector<32x1xf32> to vector<32x32xf32>
      %204 = arith.subf %200, %203 : vector<32x32xf32>
      %205 = math.exp %204 : vector<32x32xf32>
      %cst_96 = arith.constant dense<0.000000e+00> : vector<32xf32>
      %206 = vector.multi_reduction <add>, %205, %cst_96 [1] : vector<32x32xf32> to vector<32xf32>
      %207 = vector.shape_cast %206 : vector<32xf32> to vector<32x1xf32>
      %208 = tpu.reciprocal %207 {approx = true} : vector<32x1xf32> -> vector<32x1xf32>
      %209 = vector.broadcast %208 : vector<32x1xf32> to vector<32x32xf32>
      %210 = arith.mulf %205, %209 : vector<32x32xf32>
      %211 = arith.truncf %210 : vector<32x32xf32> to vector<32x32xbf16>
      %cst_97 = arith.constant dense<0.000000e+00> : vector<32x32xf32>
      %212 = tpu.matmul %211, %195, %cst_97 {dimension_numbers = #tpu.dot_dimension_numbers<[1], [0], [0], [1], [0, 0, 1, 1], [], []>} : vector<32x32xbf16>, vector<32x32xbf16>, vector<32x32xf32> -> vector<32x32xf32>
      %213 = arith.truncf %212 : vector<32x32xf32> to vector<32x32xbf16>
      %c96 = arith.constant 96 : index
      %c0_98 = arith.constant 0 : index
      %214 = vector.load %arg10[%c96, %c0_98] : memref<128x128xbf16, #tpu.memory_space<vmem>>, vector<32x128xbf16>
      %cst_99 = arith.constant dense<0.000000e+00> : vector<32x128xf32>
      %215 = tpu.matmul %213, %214, %cst_99 {dimension_numbers = #tpu.dot_dimension_numbers<[1], [0], [0], [1], [0, 0, 1, 1], [], []>} : vector<32x32xbf16>, vector<32x128xbf16>, vector<32x128xf32> -> vector<32x128xf32>
      %216 = arith.addf %192, %215 : vector<32x128xf32>
      %217 = arith.index_cast %113 : i32 to index
      %c0_100 = arith.constant 0 : index
      %218 = vector.load %arg22[%217, %c0_100] : memref<64x128xf32, #tpu.memory_space<vmem>>, vector<32x128xf32>
      %219 = arith.addf %218, %216 : vector<32x128xf32>
      %220 = vector.broadcast %50 : vector<1x128xf32> to vector<32x128xf32>
      %221 = arith.addf %219, %220 : vector<32x128xf32>
      %222 = arith.index_cast %113 : i32 to index
      %c0_101 = arith.constant 0 : index
      %223 = vector.load %arg22[%222, %c0_101] : memref<64x128xf32, #tpu.memory_space<vmem>>, vector<32x128xf32>
      tpu.vector_store %arg22[%222, %c0_101], %221 {strides = array<i32>} : memref<64x128xf32, #tpu.memory_space<vmem>>, vector<32x128xf32>,
    }
    %c2_i32_36 = arith.constant 2 : i32
    %c0_37 = arith.constant 0 : index
    %c0_38 = arith.constant 0 : index
    %52 = vector.load %arg22[%c0_37, %c0_38] : memref<64x128xf32, #tpu.memory_space<vmem>>, vector<64x128xf32>
    %c0_39 = arith.constant 0 : index
    %c0_40 = arith.constant 0 : index
    %53 = vector.load %arg12[%c0_39, %c0_40] : memref<1x128xf32, #tpu.memory_space<vmem>>, vector<1x128xf32>
    %c0_41 = arith.constant 0 : index
    %c0_42 = arith.constant 0 : index
    %54 = vector.load %arg13[%c0_41, %c0_42] : memref<1x128xf32, #tpu.memory_space<vmem>>, vector<1x128xf32>
    %cst_43 = arith.constant dense<0.000000e+00> : vector<64xf32>
    %55 = vector.multi_reduction <add>, %52, %cst_43 [1] : vector<64x128xf32> to vector<64xf32>
    %56 = vector.shape_cast %55 : vector<64xf32> to vector<64x1xf32>
    %cst_44 = arith.constant 1.280000e+02 : f32
    %57 = vector.broadcast %cst_44 : f32 to vector<64x1xf32>
    %58 = arith.divf %56, %57 : vector<64x1xf32>
    %59 = vector.broadcast %58 : vector<64x1xf32> to vector<64x128xf32>
    %60 = arith.subf %52, %59 : vector<64x128xf32>
    %61 = arith.mulf %60, %60 : vector<64x128xf32>
    %cst_45 = arith.constant dense<0.000000e+00> : vector<64xf32>
    %62 = vector.multi_reduction <add>, %61, %cst_45 [1] : vector<64x128xf32> to vector<64xf32>
    %63 = vector.shape_cast %62 : vector<64xf32> to vector<64x1xf32>
    %cst_46 = arith.constant 1.280000e+02 : f32
    %64 = vector.broadcast %cst_46 : f32 to vector<64x1xf32>
    %65 = arith.divf %63, %64 : vector<64x1xf32>
    %cst_47 = arith.constant 9.99999974E-6 : f32
    %66 = vector.broadcast %cst_47 : f32 to vector<64x1xf32>
    %67 = arith.addf %65, %66 : vector<64x1xf32>
    %68 = math.rsqrt %67 : vector<64x1xf32>
    %69 = vector.broadcast %68 : vector<64x1xf32> to vector<64x128xf32>
    %70 = arith.mulf %60, %69 : vector<64x128xf32>
    %71 = vector.broadcast %53 : vector<1x128xf32> to vector<64x128xf32>
    %72 = arith.mulf %70, %71 : vector<64x128xf32>
    %73 = vector.broadcast %54 : vector<1x128xf32> to vector<64x128xf32>
    %74 = arith.addf %72, %73 : vector<64x128xf32>
    %75 = arith.truncf %74 : vector<64x128xf32> to vector<64x128xbf16>
    %cst_48 = arith.constant 0.000000e+00 : f32
    %76 = vector.broadcast %cst_48 : f32 to vector<64x128xf32>
    %c0_i32_49 = arith.constant 0 : i32
    %c512_i32 = arith.constant 512 : i32
    %77 = arith.muli %c0_i32_49, %c512_i32 : i32
    %78 = tpu.assume_multiple %77, 512 : i32
    %c0_50 = arith.constant 0 : index
    %79 = arith.index_cast %78 : i32 to index
    %80 = vector.load %arg14[%c0_50, %79] : memref<128x512xbf16, #tpu.memory_space<vmem>>, vector<128x512xbf16>
    %cst_51 = arith.constant dense<0.000000e+00> : vector<64x512xf32>
    %81 = tpu.matmul %75, %80, %cst_51 {dimension_numbers = #tpu.dot_dimension_numbers<[1], [0], [0], [1], [0, 0, 1, 1], [], []>} : vector<64x128xbf16>, vector<128x512xbf16>, vector<64x512xf32> -> vector<64x512xf32>
    %c0_52 = arith.constant 0 : index
    %82 = arith.index_cast %78 : i32 to index
    %83 = vector.load %arg15[%c0_52, %82] : memref<1x512xf32, #tpu.memory_space<vmem>>, vector<1x512xf32>
    %84 = vector.broadcast %83 : vector<1x512xf32> to vector<64x512xf32>
    %85 = arith.addf %81, %84 : vector<64x512xf32>
    %86 = arith.mulf %85, %85 : vector<64x512xf32>
    %87 = arith.mulf %85, %86 : vector<64x512xf32>
    %cst_53 = arith.constant 4.471500e-02 : f32
    %88 = vector.broadcast %cst_53 : f32 to vector<64x512xf32>
    %89 = arith.mulf %88, %87 : vector<64x512xf32>
    %90 = arith.addf %85, %89 : vector<64x512xf32>
    %cst_54 = arith.constant 0.797884583 : f32
    %91 = vector.broadcast %cst_54 : f32 to vector<64x512xf32>
    %92 = arith.mulf %91, %90 : vector<64x512xf32>
    %93 = math.tanh %92 : vector<64x512xf32>
    %cst_55 = arith.constant 1.000000e+00 : f32
    %94 = vector.broadcast %cst_55 : f32 to vector<64x512xf32>
    %95 = arith.addf %94, %93 : vector<64x512xf32>
    %cst_56 = arith.constant 5.000000e-01 : f32
    %96 = vector.broadcast %cst_56 : f32 to vector<64x512xf32>
    %97 = arith.mulf %96, %95 : vector<64x512xf32>
    %98 = arith.mulf %85, %97 : vector<64x512xf32>
    %99 = arith.truncf %98 : vector<64x512xf32> to vector<64x512xbf16>
    %100 = arith.index_cast %78 : i32 to index
    %c0_57 = arith.constant 0 : index
    %101 = vector.load %arg16[%100, %c0_57] : memref<512x128xbf16, #tpu.memory_space<vmem>>, vector<512x128xbf16>
    %cst_58 = arith.constant dense<0.000000e+00> : vector<64x128xf32>
    %102 = tpu.matmul %99, %101, %cst_58 {dimension_numbers = #tpu.dot_dimension_numbers<[1], [0], [0], [1], [0, 0, 1, 1], [], []>} : vector<64x512xbf16>, vector<512x128xbf16>, vector<64x128xf32> -> vector<64x128xf32>
    %103 = arith.addf %76, %102 : vector<64x128xf32>
    %c1_i32_59 = arith.constant 1 : i32
    %104 = arith.addf %52, %103 : vector<64x128xf32>
    %c0_60 = arith.constant 0 : index
    %c0_61 = arith.constant 0 : index
    %105 = vector.load %arg17[%c0_60, %c0_61] : memref<1x128xf32, #tpu.memory_space<vmem>>, vector<1x128xf32>
    %106 = vector.broadcast %105 : vector<1x128xf32> to vector<64x128xf32>
    %107 = arith.addf %104, %106 : vector<64x128xf32>
    %108 = vector.shape_cast %107 : vector<64x128xf32> to vector<2x32x128xf32>
    %c0_62 = arith.constant 0 : index
    %c0_63 = arith.constant 0 : index
    %c0_64 = arith.constant 0 : index
    %109 = vector.load %arg18[%c0_62, %c0_63, %c0_64] : memref<2x32x128xf32, #tpu.memory_space<vmem>>, vector<2x32x128xf32>
    tpu.vector_store %arg18[%c0_62, %c0_63, %c0_64], %108 {strides = array<i32>} : memref<2x32x128xf32, #tpu.memory_space<vmem>>, vector<2x32x128xf32>,
    return
  }
  func.func @transform_0(%arg0: i32) -> (i32, i32, i32) {
    %c0_i32 = arith.constant 0 : i32
    %c0_i32_0 = arith.constant 0 : i32
    %c0_i32_1 = arith.constant 0 : i32
    return %arg0, %c0_i32, %c0_i32_0 : i32, i32, i32
  }
  func.func @transform_1(%arg0: i32) -> (i32, i32) {
    %c0_i32 = arith.constant 0 : i32
    %c0_i32_0 = arith.constant 0 : i32
    %c0_i32_1 = arith.constant 0 : i32
    return %c0_i32, %c0_i32_0 : i32, i32
  }
  func.func @transform_2(%arg0: i32) -> (i32, i32) {
    %c0_i32 = arith.constant 0 : i32
    %c0_i32_0 = arith.constant 0 : i32
    %c0_i32_1 = arith.constant 0 : i32
    return %c0_i32, %c0_i32_0 : i32, i32
  }
  func.func @transform_3(%arg0: i32) -> (i32, i32) {
    %c0_i32 = arith.constant 0 : i32
    %c0_i32_0 = arith.constant 0 : i32
    %c0_i32_1 = arith.constant 0 : i32
    return %c0_i32, %c0_i32_0 : i32, i32
  }
  func.func @transform_4(%arg0: i32) -> (i32, i32) {
    %c0_i32 = arith.constant 0 : i32
    %c0_i32_0 = arith.constant 0 : i32
    %c0_i32_1 = arith.constant 0 : i32
    return %c0_i32, %c0_i32_0 : i32, i32
  }
  func.func @transform_5(%arg0: i32) -> (i32, i32) {
    %c0_i32 = arith.constant 0 : i32
    %c0_i32_0 = arith.constant 0 : i32
    %c0_i32_1 = arith.constant 0 : i32
    return %c0_i32, %c0_i32_0 : i32, i32
  }
  func.func @transform_6(%arg0: i32) -> (i32, i32) {
    %c0_i32 = arith.constant 0 : i32
    %c0_i32_0 = arith.constant 0 : i32
    %c0_i32_1 = arith.constant 0 : i32
    return %c0_i32, %c0_i32_0 : i32, i32
  }
  func.func @transform_7(%arg0: i32) -> (i32, i32) {
    %c0_i32 = arith.constant 0 : i32
    %c0_i32_0 = arith.constant 0 : i32
    %c0_i32_1 = arith.constant 0 : i32
    return %c0_i32, %c0_i32_0 : i32, i32
  }
  func.func @transform_8(%arg0: i32) -> (i32, i32) {
    %c0_i32 = arith.constant 0 : i32
    %c0_i32_0 = arith.constant 0 : i32
    %c0_i32_1 = arith.constant 0 : i32
    return %c0_i32, %c0_i32_0 : i32, i32
  }
  func.func @transform_9(%arg0: i32) -> (i32, i32) {
    %c0_i32 = arith.constant 0 : i32
    %c0_i32_0 = arith.constant 0 : i32
    %c0_i32_1 = arith.constant 0 : i32
    return %c0_i32, %c0_i32_0 : i32, i32
  }
  func.func @transform_10(%arg0: i32) -> (i32, i32) {
    %c0_i32 = arith.constant 0 : i32
    %c0_i32_0 = arith.constant 0 : i32
    %c0_i32_1 = arith.constant 0 : i32
    return %c0_i32, %c0_i32_0 : i32, i32
  }
  func.func @transform_11(%arg0: i32) -> (i32, i32) {
    %c0_i32 = arith.constant 0 : i32
    %c0_i32_0 = arith.constant 0 : i32
    %c0_i32_1 = arith.constant 0 : i32
    return %c0_i32, %c0_i32_0 : i32, i32
  }
  func.func @transform_12(%arg0: i32) -> (i32, i32) {
    %c0_i32 = arith.constant 0 : i32
    %c0_i32_0 = arith.constant 0 : i32
    %c0_i32_1 = arith.constant 0 : i32
    return %c0_i32, %c0_i32_0 : i32, i32
  }
  func.func @transform_13(%arg0: i32) -> (i32, i32) {
    %c0_i32 = arith.constant 0 : i32
    %c0_i32_0 = arith.constant 0 : i32
    %c0_i32_1 = arith.constant 0 : i32
    return %c0_i32, %c0_i32_0 : i32, i32
  }
  func.func @transform_14(%arg0: i32) -> (i32, i32) {
    %c0_i32 = arith.constant 0 : i32
    %c0_i32_0 = arith.constant 0 : i32
    %c0_i32_1 = arith.constant 0 : i32
    return %c0_i32, %c0_i32_0 : i32, i32
  }
  func.func @transform_15(%arg0: i32) -> (i32, i32) {
    %c0_i32 = arith.constant 0 : i32
    %c0_i32_0 = arith.constant 0 : i32
    %c0_i32_1 = arith.constant 0 : i32
    return %c0_i32, %c0_i32_0 : i32, i32
  }
  func.func @transform_16(%arg0: i32) -> (i32, i32) {
    %c0_i32 = arith.constant 0 : i32
    %c0_i32_0 = arith.constant 0 : i32
    %c0_i32_1 = arith.constant 0 : i32
    return %c0_i32, %c0_i32_0 : i32, i32
  }
  func.func @transform_17(%arg0: i32) -> (i32, i32, i32) {
    %c0_i32 = arith.constant 0 : i32
    %c0_i32_0 = arith.constant 0 : i32
    %c0_i32_1 = arith.constant 0 : i32
    return %arg0, %c0_i32, %c0_i32_0 : i32, i32, i32
  }
}

</mosaic_0001>

<llo_original>
// kernel: tpu_custom_call.1
$region0: #{tpu_custom_call.1}
  #allocation0 [shape = 'u32[]', space=smem, size = 0x4, offset = 0x4, fixed_abs, tag = 'smem constant byte address 0x4 - core index']
  #allocation1 [shape = 'u32[144,128]{1,0:T(1,128)}', space=vmem, size = 0x12000, scoped, tag = 'internal scratch']
  #allocation2 [shape = 'bf16[64,128]{1,0:T(16,128)(2,1)}', space=vmem, size = 0x4000, scoped, tag = 'scratch operand']
  #allocation3 [shape = 'bf16[64,128]{1,0:T(16,128)(2,1)}', space=vmem, size = 0x4000, scoped, tag = 'scratch operand']
  #allocation4 [shape = 'bf16[64,128]{1,0:T(16,128)(2,1)}', space=vmem, size = 0x4000, scoped, tag = 'scratch operand']
  #allocation5 [shape = 'f32[64,128]{1,0:T(8,128)}', space=vmem, size = 0x8000, scoped, tag = 'scratch operand']
  %s0 = inlined_call_operand.hbm [shape: f32[2,32,128], index: 0, kind: input, shape index: {}]
  %s1 = inlined_call_operand.hbm [shape: f32[1,128], index: 1, kind: input, shape index: {}]
  %s2 = inlined_call_operand.hbm [shape: f32[1,128], index: 2, kind: input, shape index: {}]
  %s3 = inlined_call_operand.hbm [shape: bf16[128,128], index: 3, kind: input, shape index: {}]
  %s4 = inlined_call_operand.hbm [shape: bf16[128,128], index: 4, kind: input, shape index: {}]
  %s5 = inlined_call_operand.hbm [shape: bf16[128,128], index: 5, kind: input, shape index: {}]
  %s6 = inlined_call_operand.hbm [shape: f32[1,128], index: 6, kind: input, shape index: {}]
  %s7 = inlined_call_operand.hbm [shape: f32[1,128], index: 7, kind: input, shape index: {}]
  %s8 = inlined_call_operand.hbm [shape: f32[1,128], index: 8, kind: input, shape index: {}]
  %s9 = inlined_call_operand.hbm [shape: bf16[128,128], index: 9, kind: input, shape index: {}]
  %s10 = inlined_call_operand.hbm [shape: f32[1,128], index: 10, kind: input, shape index: {}]
  %s11 = inlined_call_operand.hbm [shape: f32[1,128], index: 11, kind: input, shape index: {}]
  %s12 = inlined_call_operand.hbm [shape: f32[1,128], index: 12, kind: input, shape index: {}]
  %s13 = inlined_call_operand.hbm [shape: bf16[128,512], index: 13, kind: input, shape index: {}]
  %s14 = inlined_call_operand.hbm [shape: f32[1,512], index: 14, kind: input, shape index: {}]
  %s15 = inlined_call_operand.hbm [shape: bf16[512,128], index: 15, kind: input, shape index: {}]
  %s16 = inlined_call_operand.hbm [shape: f32[1,128], index: 16, kind: input, shape index: {}]
  %s17 = inlined_call_operand.hbm [shape: f32[2,32,128], index: 17, kind: output, shape index: {}]
  %s18 = sld [smem:[#allocation0]]
  $region153: #{tpu_custom_call.1} parent=0
    _
  %s20 = ssub.s32 1, %s18
  %s21 = scalar_select 0, %s20, %s18
  $region1: #{tpu_custom_call.1} parent=0
    #allocation6 [shape = 'u8[32768]{0}', space=vmem, size = 0x8000, scoped, tag = 'input window, operand 0, single buffered']
    #allocation7 [shape = 's32[1]{0}', space=sflag, size = 0x4, scoped, tag = 'scoped memory for tpu_custom_call.1']
    #allocation8 [shape = 's32[1]{0}', space=sflag, size = 0x4, scoped, tag = 'scoped memory for tpu_custom_call.1']
    #allocation9 [shape = 'u8[512]{0}', space=vmem, size = 0x400, scoped, tag = 'input window, operand 1, single buffered']
    #allocation10 [shape = 's32[1]{0}', space=sflag, size = 0x4, scoped, tag = 'scoped memory for tpu_custom_call.1']
    #allocation11 [shape = 'u8[512]{0}', space=vmem, size = 0x400, scoped, tag = 'input window, operand 2, single buffered']
    #allocation12 [shape = 'u8[32768]{0}', space=vmem, size = 0x8000, scoped, tag = 'input window, operand 3, single buffered']
    #allocation13 [shape = 's32[1]{0}', space=sflag, size = 0x4, scoped, tag = 'scoped memory for tpu_custom_call.1']
    #allocation14 [shape = 'u8[32768]{0}', space=vmem, size = 0x8000, scoped, tag = 'input window, operand 4, single buffered']
    #allocation15 [shape = 'u8[32768]{0}', space=vmem, size = 0x8000, scoped, tag = 'input window, operand 5, single buffered']
    #allocation16 [shape = 's32[1]{0}', space=sflag, size = 0x4, scoped, tag = 'scoped memory for tpu_custom_call.1']
    #allocation17 [shape = 'u8[512]{0}', space=vmem, size = 0x400, scoped, tag = 'input window, operand 6, single buffered']
    #allocation18 [shape = 'u8[512]{0}', space=vmem, size = 0x400, scoped, tag = 'input window, operand 7, single buffered']
    #allocation19 [shape = 's32[1]{0}', space=sflag, size = 0x4, scoped, tag = 'scoped memory for tpu_custom_call.1']
    #allocation20 [shape = 'u8[512]{0}', space=vmem, size = 0x400, scoped, tag = 'input window, operand 8, single buffered']
    #allocation21 [shape = 'u8[32768]{0}', space=vmem, size = 0x8000, scoped, tag = 'input window, operand 9, single buffered']
    #allocation22 [shape = 's32[1]{0}', space=sflag, size = 0x4, scoped, tag = 'scoped memory for tpu_custom_call.1']
    #allocation23 [shape = 'u8[512]{0}', space=vmem, size = 0x400, scoped, tag = 'input window, operand 10, single buffered']
    #allocation24 [shape = 'u8[512]{0}', space=vmem, size = 0x400, scoped, tag = 'input window, operand 11, single buffered']
    #allocation25 [shape = 's32[1]{0}', space=sflag, size = 0x4, scoped, tag = 'scoped memory for tpu_custom_call.1']
    #allocation26 [shape = 'u8[512]{0}', space=vmem, size = 0x400, scoped, tag = 'input window, operand 12, single buffered']
    #allocation27 [shape = 'u8[131072]{0}', space=vmem, size = 0x20000, scoped, tag = 'input window, operand 13, single buffered']
    #allocation28 [shape = 's32[1]{0}', space=sflag, size = 0x4, scoped, tag = 'scoped memory for tpu_custom_call.1']
    #allocation29 [shape = 'u8[2048]{0}', space=vmem, size = 0x800, scoped, tag = 'input window, operand 14, single buffered']
    #allocation30 [shape = 'u8[131072]{0}', space=vmem, size = 0x20000, scoped, tag = 'input window, operand 15, single buffered']
    #allocation31 [shape = 's32[1]{0}', space=sflag, size = 0x4, scoped, tag = 'scoped memory for tpu_custom_call.1']
    #allocation32 [shape = 'u8[512]{0}', space=vmem, size = 0x400, scoped, tag = 'input window, operand 16, single buffered']
    #allocation33 [shape = 'u8[32768]{0}', space=vmem, size = 0x8000, scoped, tag = 'output window, operand 0, single buffered']
    %22 = vsyncpa [#allocation7], 0
    %23 = vsyncpa [#allocation10], 0
    %24 = vsyncpa [#allocation13], 0
    %25 = vsyncpa [#allocation16], 0
    %26 = vsyncpa [#allocation19], 0
    %27 = vsyncpa [#allocation22], 0
    %28 = vsyncpa [#allocation25], 0
    %29 = vsyncpa [#allocation28], 0
    %30 = vsyncpa [#allocation31], 0
    %31 = vsyncpa [#allocation8], 0
    // Predicated region
    $region2: #{tpu_custom_call.1} parent=1 // pred_check
      _
    $region3: #{tpu_custom_call.1} parent=1 // pred_check_branch
      %33 = sbr.rel (0) target = $region5
    $region4: #{tpu_custom_call.1} parent=1 // pred_region
      %s35 = ssub.s32 1024, 1024
      %36 = vsyncadd [#allocation7], %s35
      %s37 = sshll.u32 [#allocation6], 4
      %s38 = int_to_ptr.vmem [resolvable:$true] %s37
      %43 = dma.hbm_to_vmem [thread:$0]  %s0, 1024, %s38, [#allocation7], 128, 128, 8
    $region5: #{tpu_custom_call.1} parent=1 // pred_fallthru
      _
    // Predicated region
    $region6: #{tpu_custom_call.1} parent=1 // pred_check
      _
    $region7: #{tpu_custom_call.1} parent=1 // pred_check_branch
      %45 = sbr.rel (0) target = $region9
    $region8: #{tpu_custom_call.1} parent=1 // pred_region
      %s47 = ssub.s32 16, 16
      %48 = vsyncadd [#allocation10], %s47
      %s50 = sshll.u32 [#allocation9], 4
      %s51 = int_to_ptr.vmem [resolvable:$true] %s50
      %53 = dma.hbm_to_vmem [thread:$0]  %s1, 16, %s51, [#allocation10]
    $region9: #{tpu_custom_call.1} parent=1 // pred_fallthru
      _
    // Predicated region
    $region10: #{tpu_custom_call.1} parent=1 // pred_check
      _
    $region11: #{tpu_custom_call.1} parent=1 // pred_check_branch
      %55 = sbr.rel (0) target = $region13
    $region12: #{tpu_custom_call.1} parent=1 // pred_region
      %s57 = ssub.s32 16, 16
      %58 = vsyncadd [#allocation10], %s57
      %s60 = sshll.u32 [#allocation11], 4
      %s61 = int_to_ptr.vmem [resolvable:$true] %s60
      %63 = dma.hbm_to_vmem [thread:$0]  %s2, 16, %s61, [#allocation10]
    $region13: #{tpu_custom_call.1} parent=1 // pred_fallthru
      _
    // Predicated region
    $region14: #{tpu_custom_call.1} parent=1 // pred_check
      _
    $region15: #{tpu_custom_call.1} parent=1 // pred_check_branch
      %65 = sbr.rel (0) target = $region17
    $region16: #{tpu_custom_call.1} parent=1 // pred_region
      %s67 = ssub.s32 1024, 1024
      %68 = vsyncadd [#allocation13], %s67
      %s69 = sshll.u32 [#allocation12], 4
      %s70 = int_to_ptr.vmem [resolvable:$true] %s69
      %75 = dma.hbm_to_vmem [thread:$0]  %s3, 1024, %s70, [#allocation13], 64, 64, 4
    $region17: #{tpu_custom_call.1} parent=1 // pred_fallthru
      _
    // Predicated region
    $region18: #{tpu_custom_call.1} parent=1 // pred_check
      _
    $region19: #{tpu_custom_call.1} parent=1 // pred_check_branch
      %77 = sbr.rel (0) target = $region21
    $region20: #{tpu_custom_call.1} parent=1 // pred_region
      %s79 = ssub.s32 1024, 1024
      %80 = vsyncadd [#allocation13], %s79
      %s81 = sshll.u32 [#allocation14], 4
      %s82 = int_to_ptr.vmem [resolvable:$true] %s81
      %87 = dma.hbm_to_vmem [thread:$0]  %s4, 1024, %s82, [#allocation13], 64, 64, 4
    $region21: #{tpu_custom_call.1} parent=1 // pred_fallthru
      _
    // Predicated region
    $region22: #{tpu_custom_call.1} parent=1 // pred_check
      _
    $region23: #{tpu_custom_call.1} parent=1 // pred_check_branch
      %89 = sbr.rel (0) target = $region25
    $region24: #{tpu_custom_call.1} parent=1 // pred_region
      %s91 = ssub.s32 1024, 1024
      %92 = vsyncadd [#allocation16], %s91
      %s93 = sshll.u32 [#allocation15], 4
      %s94 = int_to_ptr.vmem [resolvable:$true] %s93
      %99 = dma.hbm_to_vmem [thread:$0]  %s5, 1024, %s94, [#allocation16], 64, 64, 4
    $region25: #{tpu_custom_call.1} parent=1 // pred_fallthru
      _
    // Predicated region
    $region26: #{tpu_custom_call.1} parent=1 // pred_check
      _
    $region27: #{tpu_custom_call.1} parent=1 // pred_check_branch
      %101 = sbr.rel (0) target = $region29
    $region28: #{tpu_custom_call.1} parent=1 // pred_region
      %s103 = ssub.s32 16, 16
      %104 = vsyncadd [#allocation16], %s103
      %s106 = sshll.u32 [#allocation17], 4
      %s107 = int_to_ptr.vmem [resolvable:$true] %s106
      %109 = dma.hbm_to_vmem [thread:$0]  %s6, 16, %s107, [#allocation16]
    $region29: #{tpu_custom_call.1} parent=1 // pred_fallthru
      _
    // Predicated region
    $region30: #{tpu_custom_call.1} parent=1 // pred_check
      _
    $region31: #{tpu_custom_call.1} parent=1 // pred_check_branch
      %111 = sbr.rel (0) target = $region33
    $region32: #{tpu_custom_call.1} parent=1 // pred_region
      %s113 = ssub.s32 16, 16
      %114 = vsyncadd [#allocation19], %s113
      %s116 = sshll.u32 [#allocation18], 4
      %s117 = int_to_ptr.vmem [resolvable:$true] %s116
      %119 = dma.hbm_to_vmem [thread:$0]  %s7, 16, %s117, [#allocation19]
    $region33: #{tpu_custom_call.1} parent=1 // pred_fallthru
      _
    // Predicated region
    $region34: #{tpu_custom_call.1} parent=1 // pred_check
      _
    $region35: #{tpu_custom_call.1} parent=1 // pred_check_branch
      %121 = sbr.rel (0) target = $region37
    $region36: #{tpu_custom_call.1} parent=1 // pred_region
      %s123 = ssub.s32 16, 16
      %124 = vsyncadd [#allocation19], %s123
      %s126 = sshll.u32 [#allocation20], 4
      %s127 = int_to_ptr.vmem [resolvable:$true] %s126
      %129 = dma.hbm_to_vmem [thread:$0]  %s8, 16, %s127, [#allocation19]
    $region37: #{tpu_custom_call.1} parent=1 // pred_fallthru
      _
    // Predicated region
    $region38: #{tpu_custom_call.1} parent=1 // pred_check
      _
    $region39: #{tpu_custom_call.1} parent=1 // pred_check_branch
      %131 = sbr.rel (0) target = $region41
    $region40: #{tpu_custom_call.1} parent=1 // pred_region
      %s133 = ssub.s32 1024, 1024
      %134 = vsyncadd [#allocation22], %s133
      %s135 = sshll.u32 [#allocation21], 4
      %s136 = int_to_ptr.vmem [resolvable:$true] %s135
      %141 = dma.hbm_to_vmem [thread:$0]  %s9, 1024, %s136, [#allocation22], 64, 64, 4
    $region41: #{tpu_custom_call.1} parent=1 // pred_fallthru
      _
    // Predicated region
    $region42: #{tpu_custom_call.1} parent=1 // pred_check
      _
    $region43: #{tpu_custom_call.1} parent=1 // pred_check_branch
      %143 = sbr.rel (0) target = $region45
    $region44: #{tpu_custom_call.1} parent=1 // pred_region
      %s145 = ssub.s32 16, 16
      %146 = vsyncadd [#allocation22], %s145
      %s148 = sshll.u32 [#allocation23], 4
      %s149 = int_to_ptr.vmem [resolvable:$true] %s148
      %151 = dma.hbm_to_vmem [thread:$0]  %s10, 16, %s149, [#allocation22]
    $region45: #{tpu_custom_call.1} parent=1 // pred_fallthru
      _
    // Predicated region
    $region46: #{tpu_custom_call.1} parent=1 // pred_check
      _
    $region47: #{tpu_custom_call.1} parent=1 // pred_check_branch
      %153 = sbr.rel (0) target = $region49
    $region48: #{tpu_custom_call.1} parent=1 // pred_region
      %s155 = ssub.s32 16, 16
      %156 = vsyncadd [#allocation25], %s155
      %s158 = sshll.u32 [#allocation24], 4
      %s159 = int_to_ptr.vmem [resolvable:$true] %s158
      %161 = dma.hbm_to_vmem [thread:$0]  %s11, 16, %s159, [#allocation25]
    $region49: #{tpu_custom_call.1} parent=1 // pred_fallthru
      _
    // Predicated region
    $region50: #{tpu_custom_call.1} parent=1 // pred_check
      _
    $region51: #{tpu_custom_call.1} parent=1 // pred_check_branch
      %163 = sbr.rel (0) target = $region53
    $region52: #{tpu_custom_call.1} parent=1 // pred_region
      %s165 = ssub.s32 16, 16
      %166 = vsyncadd [#allocation25], %s165
      %s168 = sshll.u32 [#allocation26], 4
      %s169 = int_to_ptr.vmem [resolvable:$true] %s168
      %171 = dma.hbm_to_vmem [thread:$0]  %s12, 16, %s169, [#allocation25]
    $region53: #{tpu_custom_call.1} parent=1 // pred_fallthru
      _
    // Predicated region
    $region54: #{tpu_custom_call.1} parent=1 // pred_check
      _
    $region55: #{tpu_custom_call.1} parent=1 // pred_check_branch
      %173 = sbr.rel (0) target = $region57
    $region56: #{tpu_custom_call.1} parent=1 // pred_region
      %s175 = ssub.s32 4096, 4096
      %176 = vsyncadd [#allocation28], %s175
      %s177 = sshll.u32 [#allocation27], 4
      %s178 = int_to_ptr.vmem [resolvable:$true] %s177
      %183 = dma.hbm_to_vmem [thread:$0]  %s13, 4096, %s178, [#allocation28], 256, 256, 16
    $region57: #{tpu_custom_call.1} parent=1 // pred_fallthru
      _
    // Predicated region
    $region58: #{tpu_custom_call.1} parent=1 // pred_check
      _
    $region59: #{tpu_custom_call.1} parent=1 // pred_check_branch
      %185 = sbr.rel (0) target = $region61
    $region60: #{tpu_custom_call.1} parent=1 // pred_region
      %s187 = ssub.s32 64, 64
      %188 = vsyncadd [#allocation28], %s187
      %s190 = sshll.u32 [#allocation29], 4
      %s191 = int_to_ptr.vmem [resolvable:$true] %s190
      %193 = dma.hbm_to_vmem [thread:$0]  %s14, 64, %s191, [#allocation28]
    $region61: #{tpu_custom_call.1} parent=1 // pred_fallthru
      _
    // Predicated region
    $region62: #{tpu_custom_call.1} parent=1 // pred_check
      _
    $region63: #{tpu_custom_call.1} parent=1 // pred_check_branch
      %195 = sbr.rel (0) target = $region65
    $region64: #{tpu_custom_call.1} parent=1 // pred_region
      %s197 = ssub.s32 4096, 4096
      %198 = vsyncadd [#allocation31], %s197
      %s199 = sshll.u32 [#allocation30], 4
      %s200 = int_to_ptr.vmem [resolvable:$true] %s199
      %205 = dma.hbm_to_vmem [thread:$0]  %s15, 4096, %s200, [#allocation31], 64, 64, 4
    $region65: #{tpu_custom_call.1} parent=1 // pred_fallthru
      _
    // Predicated region
    $region66: #{tpu_custom_call.1} parent=1 // pred_check
      _
    $region67: #{tpu_custom_call.1} parent=1 // pred_check_branch
      %207 = sbr.rel (0) target = $region69
    $region68: #{tpu_custom_call.1} parent=1 // pred_region
      %s209 = ssub.s32 16, 16
      %210 = vsyncadd [#allocation31], %s209
      %s212 = sshll.u32 [#allocation32], 4
      %s213 = int_to_ptr.vmem [resolvable:$true] %s212
      %215 = dma.hbm_to_vmem [thread:$0]  %s16, 16, %s213, [#allocation31]
    $region69: #{tpu_custom_call.1} parent=1 // pred_fallthru
      _
    // Predicated region
    $region70: #{tpu_custom_call.1} parent=1 // pred_check
      _
    $region71: #{tpu_custom_call.1} parent=1 // pred_check_branch
      %217 = sbr.rel (0) target = $region73
    $region72: #{tpu_custom_call.1} parent=1 // pred_region
      %218 = dma.done [#allocation7], 1024
    $region73: #{tpu_custom_call.1} parent=1 // pred_fallthru
      _
    // Predicated region
    $region74: #{tpu_custom_call.1} parent=1 // pred_check
      _
    $region75: #{tpu_custom_call.1} parent=1 // pred_check_branch
      %220 = sbr.rel (0) target = $region77
    $region76: #{tpu_custom_call.1} parent=1 // pred_region
      %221 = dma.done [#allocation10], 16
    $region77: #{tpu_custom_call.1} parent=1 // pred_fallthru
      _
    // Predicated region
    $region78: #{tpu_custom_call.1} parent=1 // pred_check
      _
    $region79: #{tpu_custom_call.1} parent=1 // pred_check_branch
      %223 = sbr.rel (0) target = $region81
    $region80: #{tpu_custom_call.1} parent=1 // pred_region
      %224 = dma.done [#allocation10], 16
    $region81: #{tpu_custom_call.1} parent=1 // pred_fallthru
      _
    // Predicated region
    $region82: #{tpu_custom_call.1} parent=1 // pred_check
      _
    $region83: #{tpu_custom_call.1} parent=1 // pred_check_branch
      %226 = sbr.rel (0) target = $region85
    $region84: #{tpu_custom_call.1} parent=1 // pred_region
      %227 = dma.done [#allocation13], 1024
    $region85: #{tpu_custom_call.1} parent=1 // pred_fallthru
      _
    // Predicated region
    $region86: #{tpu_custom_call.1} parent=1 // pred_check
      _
    $region87: #{tpu_custom_call.1} parent=1 // pred_check_branch
      %229 = sbr.rel (0) target = $region89
    $region88: #{tpu_custom_call.1} parent=1 // pred_region
      %230 = dma.done [#allocation13], 1024
    $region89: #{tpu_custom_call.1} parent=1 // pred_fallthru
      _
    // Predicated region
    $region90: #{tpu_custom_call.1} parent=1 // pred_check
      _
    $region91: #{tpu_custom_call.1} parent=1 // pred_check_branch
      %232 = sbr.rel (0) target = $region93
    $region92: #{tpu_custom_call.1} parent=1 // pred_region
      %233 = dma.done [#allocation16], 1024
    $region93: #{tpu_custom_call.1} parent=1 // pred_fallthru
      _
    // Predicated region
    $region94: #{tpu_custom_call.1} parent=1 // pred_check
      _
    $region95: #{tpu_custom_call.1} parent=1 // pred_check_branch
      %235 = sbr.rel (0) target = $region97
    $region96: #{tpu_custom_call.1} parent=1 // pred_region
      %236 = dma.done [#allocation16], 16
    $region97: #{tpu_custom_call.1} parent=1 // pred_fallthru
      _
    // Predicated region
    $region98: #{tpu_custom_call.1} parent=1 // pred_check
      _
    $region99: #{tpu_custom_call.1} parent=1 // pred_check_branch
      %238 = sbr.rel (0) target = $region101
    $region100: #{tpu_custom_call.1} parent=1 // pred_region
      %239 = dma.done [#allocation19], 16
    $region101: #{tpu_custom_call.1} parent=1 // pred_fallthru
      _
    // Predicated region
    $region102: #{tpu_custom_call.1} parent=1 // pred_check
      _
    $region103: #{tpu_custom_call.1} parent=1 // pred_check_branch
      %241 = sbr.rel (0) target = $region105
    $region104: #{tpu_custom_call.1} parent=1 // pred_region
      %242 = dma.done [#allocation19], 16
    $region105: #{tpu_custom_call.1} parent=1 // pred_fallthru
      _
    // Predicated region
    $region106: #{tpu_custom_call.1} parent=1 // pred_check
      _
    $region107: #{tpu_custom_call.1} parent=1 // pred_check_branch
      %244 = sbr.rel (0) target = $region109
    $region108: #{tpu_custom_call.1} parent=1 // pred_region
      %245 = dma.done [#allocation22], 1024
    $region109: #{tpu_custom_call.1} parent=1 // pred_fallthru
      _
    // Predicated region
    $region110: #{tpu_custom_call.1} parent=1 // pred_check
      _
    $region111: #{tpu_custom_call.1} parent=1 // pred_check_branch
      %247 = sbr.rel (0) target = $region113
    $region112: #{tpu_custom_call.1} parent=1 // pred_region
      %248 = dma.done [#allocation22], 16
    $region113: #{tpu_custom_call.1} parent=1 // pred_fallthru
      _
    // Predicated region
    $region114: #{tpu_custom_call.1} parent=1 // pred_check
      _
    $region115: #{tpu_custom_call.1} parent=1 // pred_check_branch
      %250 = sbr.rel (0) target = $region117
    $region116: #{tpu_custom_call.1} parent=1 // pred_region
      %251 = dma.done [#allocation25], 16
    $region117: #{tpu_custom_call.1} parent=1 // pred_fallthru
      _
    // Predicated region
    $region118: #{tpu_custom_call.1} parent=1 // pred_check
      _
    $region119: #{tpu_custom_call.1} parent=1 // pred_check_branch
      %253 = sbr.rel (0) target = $region121
    $region120: #{tpu_custom_call.1} parent=1 // pred_region
      %254 = dma.done [#allocation25], 16
    $region121: #{tpu_custom_call.1} parent=1 // pred_fallthru
      _
    // Predicated region
    $region122: #{tpu_custom_call.1} parent=1 // pred_check
      _
    $region123: #{tpu_custom_call.1} parent=1 // pred_check_branch
      %256 = sbr.rel (0) target = $region125
    $region124: #{tpu_custom_call.1} parent=1 // pred_region
      %257 = dma.done [#allocation28], 4096
    $region125: #{tpu_custom_call.1} parent=1 // pred_fallthru
      _
    // Predicated region
    $region126: #{tpu_custom_call.1} parent=1 // pred_check
      _
    $region127: #{tpu_custom_call.1} parent=1 // pred_check_branch
      %259 = sbr.rel (0) target = $region129
    $region128: #{tpu_custom_call.1} parent=1 // pred_region
      %260 = dma.done [#allocation28], 64
    $region129: #{tpu_custom_call.1} parent=1 // pred_fallthru
      _
    // Predicated region
    $region130: #{tpu_custom_call.1} parent=1 // pred_check
      _
    $region131: #{tpu_custom_call.1} parent=1 // pred_check_branch
      %262 = sbr.rel (0) target = $region133
    $region132: #{tpu_custom_call.1} parent=1 // pred_region
      %263 = dma.done [#allocation31], 4096
    $region133: #{tpu_custom_call.1} parent=1 // pred_fallthru
      _
    // Predicated region
    $region134: #{tpu_custom_call.1} parent=1 // pred_check
      _
    $region135: #{tpu_custom_call.1} parent=1 // pred_check_branch
      %265 = sbr.rel (0) target = $region137
    $region136: #{tpu_custom_call.1} parent=1 // pred_region
      %266 = dma.done [#allocation31], 16
    $region137: #{tpu_custom_call.1} parent=1 // pred_fallthru
      _
    %v268 = vld [vmem:[#allocation6] sm:$0xff]
    %v269 = vld [vmem:[#allocation6 + $0x8] sm:$0xff]
    %v270 = vld [vmem:[#allocation6 + $0x10] sm:$0xff]
    %v271 = vld [vmem:[#allocation6 + $0x18] sm:$0xff]
    %v272 = vld [vmem:[#allocation6 + $0x20] sm:$0xff]
    %v273 = vld [vmem:[#allocation6 + $0x28] sm:$0xff]
    %v274 = vld [vmem:[#allocation6 + $0x30] sm:$0xff]
    %v275 = vld [vmem:[#allocation6 + $0x38] sm:$0xff]
    %276 = vst [vmem:[#allocation5] sm:$0xff] %v268
    %277 = vst [vmem:[#allocation5 + $0x8] sm:$0xff] %v269
    %278 = vst [vmem:[#allocation5 + $0x10] sm:$0xff] %v270
    %279 = vst [vmem:[#allocation5 + $0x18] sm:$0xff] %v271
    %280 = vst [vmem:[#allocation5 + $0x20] sm:$0xff] %v272
    %281 = vst [vmem:[#allocation5 + $0x28] sm:$0xff] %v273
    %282 = vst [vmem:[#allocation5 + $0x30] sm:$0xff] %v274
    %283 = vst [vmem:[#allocation5 + $0x38] sm:$0xff] %v275
    %v284 = vld [vmem:[#allocation9] sm:$0x1]
    %v285 = vld [vmem:[#allocation11] sm:$0x1]
    %286 = vadd.xlane.f32.xlu0 %v268
    %v287 = vpop.xlane.xlu0 %286
    %288 = vadd.xlane.f32.xlu0 %v269
    %v289 = vpop.xlane.xlu0 %288
    %290 = vadd.xlane.f32.xlu0 %v270
    %v291 = vpop.xlane.xlu0 %290
    %292 = vadd.xlane.f32.xlu0 %v271
    %v293 = vpop.xlane.xlu0 %292
    %294 = vadd.xlane.f32.xlu0 %v272
    %v295 = vpop.xlane.xlu0 %294
    %296 = vadd.xlane.f32.xlu0 %v273
    %v297 = vpop.xlane.xlu0 %296
    %298 = vadd.xlane.f32.xlu0 %v274
    %v299 = vpop.xlane.xlu0 %298
    %300 = vadd.xlane.f32.xlu0 %v275
    %v301 = vpop.xlane.xlu0 %300
    %v302 = vrcp.pop 128.0
    %v303 = vmul.f32 %v287, %v302
    %v304 = vmul.f32 %v289, %v302
    %v305 = vmul.f32 %v291, %v302
    %v306 = vmul.f32 %v293, %v302
    %v307 = vmul.f32 %v295, %v302
    %v308 = vmul.f32 %v297, %v302
    %v309 = vmul.f32 %v299, %v302
    %v310 = vmul.f32 %v301, %v302
    %v311 = vsub.f32 %v268, %v303
    %v312 = vsub.f32 %v269, %v304
    %v313 = vsub.f32 %v270, %v305
    %v314 = vsub.f32 %v271, %v306
    %v315 = vsub.f32 %v272, %v307
    %v316 = vsub.f32 %v273, %v308
    %v317 = vsub.f32 %v274, %v309
    %v318 = vsub.f32 %v275, %v310
    %v319 = vmul.f32 %v311, %v311
    %v320 = vmul.f32 %v312, %v312
    %v321 = vmul.f32 %v313, %v313
    %v322 = vmul.f32 %v314, %v314
    %v323 = vmul.f32 %v315, %v315
    %v324 = vmul.f32 %v316, %v316
    %v325 = vmul.f32 %v317, %v317
    %v326 = vmul.f32 %v318, %v318
    %327 = vadd.xlane.f32.xlu0 %v319
    %v328 = vpop.xlane.xlu0 %327
    %329 = vadd.xlane.f32.xlu0 %v320
    %v330 = vpop.xlane.xlu0 %329
    %331 = vadd.xlane.f32.xlu0 %v321
    %v332 = vpop.xlane.xlu0 %331
    %333 = vadd.xlane.f32.xlu0 %v322
    %v334 = vpop.xlane.xlu0 %333
    %335 = vadd.xlane.f32.xlu0 %v323
    %v336 = vpop.xlane.xlu0 %335
    %337 = vadd.xlane.f32.xlu0 %v324
    %v338 = vpop.xlane.xlu0 %337
    %339 = vadd.xlane.f32.xlu0 %v325
    %v340 = vpop.xlane.xlu0 %339
    %341 = vadd.xlane.f32.xlu0 %v326
    %v342 = vpop.xlane.xlu0 %341
    %v343 = vmul.f32 %v328, %v302
    %v344 = vmul.f32 %v330, %v302
    %v345 = vmul.f32 %v332, %v302
    %v346 = vmul.f32 %v334, %v302
    %v347 = vmul.f32 %v336, %v302
    %v348 = vmul.f32 %v338, %v302
    %v349 = vmul.f32 %v340, %v302
    %v350 = vmul.f32 %v342, %v302
    %v351 = vadd.f32 %v343, 1e-05
    %v352 = vadd.f32 %v344, 1e-05
    %v353 = vadd.f32 %v345, 1e-05
    %v354 = vadd.f32 %v346, 1e-05
    %v355 = vadd.f32 %v347, 1e-05
    %v356 = vadd.f32 %v348, 1e-05
    %v357 = vadd.f32 %v349, 1e-05
    %v358 = vadd.f32 %v350, 1e-05
    %v359 = vrsqrt.pop %v351
    %v360 = vrsqrt.pop %v352
    %v361 = vrsqrt.pop %v353
    %v362 = vrsqrt.pop %v354
    %v363 = vrsqrt.pop %v355
    %v364 = vrsqrt.pop %v356
    %v365 = vrsqrt.pop %v357
    %v366 = vrsqrt.pop %v358
    %v367 = vmul.f32 %v311, %v359
    %v368 = vmul.f32 %v312, %v360
    %v369 = vmul.f32 %v313, %v361
    %v370 = vmul.f32 %v314, %v362
    %v371 = vmul.f32 %v315, %v363
    %v372 = vmul.f32 %v316, %v364
    %v373 = vmul.f32 %v317, %v365
    %v374 = vmul.f32 %v318, %v366
    %v376 = vlaneseq
    %v377 = vshrl.u32 %v376, 7
    %v378 = vsub.s32 0, %v377
    %v379 = vrot.slane %v284, %v378
    %v381 = vmul.f32 %v367, %v379
    %v382 = vmul.f32 %v368, %v379
    %v383 = vmul.f32 %v369, %v379
    %v384 = vmul.f32 %v370, %v379
    %v385 = vmul.f32 %v371, %v379
    %v386 = vmul.f32 %v372, %v379
    %v387 = vmul.f32 %v373, %v379
    %v388 = vmul.f32 %v374, %v379
    %v390 = vlaneseq
    %v391 = vshrl.u32 %v390, 7
    %v392 = vsub.s32 0, %v391
    %v393 = vrot.slane %v285, %v392
    %v395 = vadd.f32 %v381, %v393
    %v396 = vadd.f32 %v382, %v393
    %v397 = vadd.f32 %v383, %v393
    %v398 = vadd.f32 %v384, %v393
    %v399 = vadd.f32 %v385, %v393
    %v400 = vadd.f32 %v386, %v393
    %v401 = vadd.f32 %v387, %v393
    %v402 = vadd.f32 %v388, %v393
    %v403 = vpack.c.bf16 %v396, %v395
    %v404 = vpack.c.bf16 %v398, %v397
    %v405 = vpack.c.bf16 %v400, %v399
    %v406 = vpack.c.bf16 %v402, %v401
    %v407 = vld [vmem:[#allocation12] sm:$0xf]
    %v408 = vld [vmem:[#allocation12 + $0x4] sm:$0xf]
    %v409 = vld [vmem:[#allocation12 + $0x8] sm:$0xf]
    %v410 = vld [vmem:[#allocation12 + $0xc] sm:$0xf]
    %v411 = vld [vmem:[#allocation12 + $0x10] sm:$0xf]
    %v412 = vld [vmem:[#allocation12 + $0x14] sm:$0xf]
    %v413 = vld [vmem:[#allocation12 + $0x18] sm:$0xf]
    %v414 = vld [vmem:[#allocation12 + $0x1c] sm:$0xf]
    %v415 = vld [vmem:[#allocation12 + $0x20] sm:$0xf]
    %v416 = vld [vmem:[#allocation12 + $0x24] sm:$0xf]
    %v417 = vld [vmem:[#allocation12 + $0x28] sm:$0xf]
    %v418 = vld [vmem:[#allocation12 + $0x2c] sm:$0xf]
    %v419 = vld [vmem:[#allocation12 + $0x30] sm:$0xf]
    %v420 = vld [vmem:[#allocation12 + $0x34] sm:$0xf]
    %v421 = vld [vmem:[#allocation12 + $0x38] sm:$0xf]
    %v422 = vld [vmem:[#allocation12 + $0x3c] sm:$0xf]
    %v423 = vld [vmem:[#allocation17] sm:$0x1]
    %v425 = vlaneseq
    %v426 = vshrl.u32 %v425, 7
    %v427 = vsub.s32 0, %v426
    %v428 = vrot.slane %v423, %v427
    %v446 = vunpack.c.l.b16 %v407
    %v447 = vunpack.c.l.b16 %v408
    %v448 = vunpack.c.l.b16 %v409
    %v449 = vunpack.c.l.b16 %v410
    %v450 = vunpack.c.l.b16 %v411
    %v451 = vunpack.c.l.b16 %v412
    %v452 = vunpack.c.l.b16 %v413
    %v453 = vunpack.c.l.b16 %v414
    %v454 = vunpack.c.l.b16 %v415
    %v455 = vunpack.c.l.b16 %v416
    %v456 = vunpack.c.l.b16 %v417
    %v457 = vunpack.c.l.b16 %v418
    %v458 = vunpack.c.l.b16 %v419
    %v459 = vunpack.c.l.b16 %v420
    %v460 = vunpack.c.l.b16 %v421
    %v461 = vunpack.c.l.b16 %v422
    %v462 = vpack.c.b16 %v447, %v446
    %v463 = vpack.c.b16 %v449, %v448
    %v464 = vpack.c.b16 %v451, %v450
    %v465 = vpack.c.b16 %v453, %v452
    %v466 = vpack.c.b16 %v455, %v454
    %v467 = vpack.c.b16 %v457, %v456
    %v468 = vpack.c.b16 %v459, %v458
    %v469 = vpack.c.b16 %v461, %v460
    %478 = vmatprep.subr.bf16.mxu0 0
    %479 = vmatpush1.bf16.msra.mxu0 %v462
    %480 = vmatprep.subr.bf16.mxu0 0
    %481 = vmatpush1.bf16.msra.mxu0 %v463
    %482 = vmatprep.subr.bf16.mxu0 0
    %483 = vmatpush1.bf16.msra.mxu0 %v464
    %484 = vmatprep.subr.bf16.mxu0 0
    %485 = vmatpush1.bf16.msra.mxu0 %v465
    %486 = vmatprep.subr.bf16.mxu0 0
    %487 = vmatpush1.bf16.msra.mxu0 %v466
    %488 = vmatprep.subr.bf16.mxu0 0
    %489 = vmatpush1.bf16.msra.mxu0 %v467
    %490 = vmatprep.subr.bf16.mxu0 0
    %491 = vmatpush1.bf16.msra.mxu0 %v468
    %492 = vmatprep.subr.bf16.mxu0 0
    %493 = vmatpush1.bf16.msra.mxu0 %v469
    %494 = vmatprep.subr.bf16.mxu0 0
    %495 = vmatpush1.bf16.msra.mxu0 0
    %496 = vmatprep.subr.bf16.mxu0 0
    %497 = vmatpush1.bf16.msra.mxu0 0
    %498 = vmatprep.subr.bf16.mxu0 0
    %499 = vmatpush1.bf16.msra.mxu0 0
    %500 = vmatprep.subr.bf16.mxu0 0
    %501 = vmatpush1.bf16.msra.mxu0 0
    %502 = vmatprep.subr.bf16.mxu0 0
    %503 = vmatpush1.bf16.msra.mxu0 0
    %504 = vmatprep.subr.bf16.mxu0 0
    %505 = vmatpush1.bf16.msra.mxu0 0
    %506 = vmatprep.subr.bf16.mxu0 0
    %507 = vmatpush1.bf16.msra.mxu0 0
    %508 = vmatprep.subr.bf16.mxu0 0
    %509 = vmatpush1.bf16.msra.mxu0 0
    %510 = vmatprep.mubr.bf16.mxu0 0
    %511 = vmatmul.mubr.bf16.gmra.mrb[0].mxu0 %v403
    %v512 = vpop.f32.mrb[0].mxu0
    %v513 = vadd.f32 %v428, %v512
    %v514 = vpop.f32.mrb[0].mxu0
    %v515 = vpop.f32.mrb[0].mxu0
    %v516 = vadd.f32 %v428, %v515
    %v517 = vpop.f32.mrb[0].mxu0
    %518 = vmatprep.mubr.bf16.mxu0 0
    %519 = vmatmul.mubr.bf16.gmra.mrb[0].mxu0 %v404
    %v520 = vpop.f32.mrb[0].mxu0
    %v521 = vadd.f32 %v428, %v520
    %v522 = vpop.f32.mrb[0].mxu0
    %v523 = vpop.f32.mrb[0].mxu0
    %v524 = vadd.f32 %v428, %v523
    %v525 = vpop.f32.mrb[0].mxu0
    %526 = vmatprep.mubr.bf16.mxu0 0
    %527 = vmatmul.mubr.bf16.gmra.mrb[0].mxu0 %v405
    %v528 = vpop.f32.mrb[0].mxu0
    %v529 = vadd.f32 %v428, %v528
    %v530 = vpop.f32.mrb[0].mxu0
    %v531 = vpop.f32.mrb[0].mxu0
    %v532 = vadd.f32 %v428, %v531
    %v533 = vpop.f32.mrb[0].mxu0
    %534 = vmatprep.mubr.bf16.mxu0 0
    %535 = vmatmul.mubr.bf16.gmra.mrb[0].mxu0 %v406
    %v536 = vpop.f32.mrb[0].mxu0
    %v537 = vadd.f32 %v428, %v536
    %v538 = vpop.f32.mrb[0].mxu0
    %v539 = vpop.f32.mrb[0].mxu0
    %v540 = vadd.f32 %v428, %v539
    %v541 = vpop.f32.mrb[0].mxu0
    %542 = vdwg.mxu0
    %v543 = vpack.c.bf16 %v516, %v513
    %v544 = vpack.c.bf16 %v524, %v521
    %v545 = vpack.c.bf16 %v532, %v529
    %v546 = vpack.c.bf16 %v540, %v537
    %547 = vst [vmem:[#allocation2] sm:$0xff] %v543
    %548 = vst [vmem:[#allocation2 + $0x8] sm:$0xff] %v544
    %549 = vst [vmem:[#allocation2 + $0x10] sm:$0xff] %v545
    %550 = vst [vmem:[#allocation2 + $0x18] sm:$0xff] %v546
    %v551 = vld [vmem:[#allocation14] sm:$0xf]
    %v552 = vld [vmem:[#allocation14 + $0x4] sm:$0xf]
    %v553 = vld [vmem:[#allocation14 + $0x8] sm:$0xf]
    %v554 = vld [vmem:[#allocation14 + $0xc] sm:$0xf]
    %v555 = vld [vmem:[#allocation14 + $0x10] sm:$0xf]
    %v556 = vld [vmem:[#allocation14 + $0x14] sm:$0xf]
    %v557 = vld [vmem:[#allocation14 + $0x18] sm:$0xf]
    %v558 = vld [vmem:[#allocation14 + $0x1c] sm:$0xf]
    %v559 = vld [vmem:[#allocation14 + $0x20] sm:$0xf]
    %v560 = vld [vmem:[#allocation14 + $0x24] sm:$0xf]
    %v561 = vld [vmem:[#allocation14 + $0x28] sm:$0xf]
    %v562 = vld [vmem:[#allocation14 + $0x2c] sm:$0xf]
    %v563 = vld [vmem:[#allocation14 + $0x30] sm:$0xf]
    %v564 = vld [vmem:[#allocation14 + $0x34] sm:$0xf]
    %v565 = vld [vmem:[#allocation14 + $0x38] sm:$0xf]
    %v566 = vld [vmem:[#allocation14 + $0x3c] sm:$0xf]
    %v567 = vld [vmem:[#allocation18] sm:$0x1]
    %v569 = vlaneseq
    %v570 = vshrl.u32 %v569, 7
    %v571 = vsub.s32 0, %v570
    %v572 = vrot.slane %v567, %v571
    %v590 = vunpack.c.l.b16 %v551
    %v591 = vunpack.c.l.b16 %v552
    %v592 = vunpack.c.l.b16 %v553
    %v593 = vunpack.c.l.b16 %v554
    %v594 = vunpack.c.l.b16 %v555
    %v595 = vunpack.c.l.b16 %v556
    %v596 = vunpack.c.l.b16 %v557
    %v597 = vunpack.c.l.b16 %v558
    %v598 = vunpack.c.l.b16 %v559
    %v599 = vunpack.c.l.b16 %v560
    %v600 = vunpack.c.l.b16 %v561
    %v601 = vunpack.c.l.b16 %v562
    %v602 = vunpack.c.l.b16 %v563
    %v603 = vunpack.c.l.b16 %v564
    %v604 = vunpack.c.l.b16 %v565
    %v605 = vunpack.c.l.b16 %v566
    %v606 = vpack.c.b16 %v591, %v590
    %v607 = vpack.c.b16 %v593, %v592
    %v608 = vpack.c.b16 %v595, %v594
    %v609 = vpack.c.b16 %v597, %v596
    %v610 = vpack.c.b16 %v599, %v598
    %v611 = vpack.c.b16 %v601, %v600
    %v612 = vpack.c.b16 %v603, %v602
    %v613 = vpack.c.b16 %v605, %v604
    %622 = vmatprep.subr.bf16.mxu0 0
    %623 = vmatpush1.bf16.msra.mxu0 %v606
    %624 = vmatprep.subr.bf16.mxu0 0
    %625 = vmatpush1.bf16.msra.mxu0 %v607
    %626 = vmatprep.subr.bf16.mxu0 0
    %627 = vmatpush1.bf16.msra.mxu0 %v608
    %628 = vmatprep.subr.bf16.mxu0 0
    %629 = vmatpush1.bf16.msra.mxu0 %v609
    %630 = vmatprep.subr.bf16.mxu0 0
    %631 = vmatpush1.bf16.msra.mxu0 %v610
    %632 = vmatprep.subr.bf16.mxu0 0
    %633 = vmatpush1.bf16.msra.mxu0 %v611
    %634 = vmatprep.subr.bf16.mxu0 0
    %635 = vmatpush1.bf16.msra.mxu0 %v612
    %636 = vmatprep.subr.bf16.mxu0 0
    %637 = vmatpush1.bf16.msra.mxu0 %v613
    %638 = vmatprep.subr.bf16.mxu0 0
    %639 = vmatpush1.bf16.msra.mxu0 0
    %640 = vmatprep.subr.bf16.mxu0 0
    %641 = vmatpush1.bf16.msra.mxu0 0
    %642 = vmatprep.subr.bf16.mxu0 0
    %643 = vmatpush1.bf16.msra.mxu0 0
    %644 = vmatprep.subr.bf16.mxu0 0
    %645 = vmatpush1.bf16.msra.mxu0 0
    %646 = vmatprep.subr.bf16.mxu0 0
    %647 = vmatpush1.bf16.msra.mxu0 0
    %648 = vmatprep.subr.bf16.mxu0 0
    %649 = vmatpush1.bf16.msra.mxu0 0
    %650 = vmatprep.subr.bf16.mxu0 0
    %651 = vmatpush1.bf16.msra.mxu0 0
    %652 = vmatprep.subr.bf16.mxu0 0
    %653 = vmatpush1.bf16.msra.mxu0 0
    %654 = vmatprep.mubr.bf16.mxu0 0
    %655 = vmatmul.mubr.bf16.gmra.mrb[0].mxu0 %v403
    %v656 = vpop.f32.mrb[0].mxu0
    %v657 = vadd.f32 %v572, %v656
    %v658 = vpop.f32.mrb[0].mxu0
    %v659 = vpop.f32.mrb[0].mxu0
    %v660 = vadd.f32 %v572, %v659
    %v661 = vpop.f32.mrb[0].mxu0
    %662 = vmatprep.mubr.bf16.mxu0 0
    %663 = vmatmul.mubr.bf16.gmra.mrb[0].mxu0 %v404
    %v664 = vpop.f32.mrb[0].mxu0
    %v665 = vadd.f32 %v572, %v664
    %v666 = vpop.f32.mrb[0].mxu0
    %v667 = vpop.f32.mrb[0].mxu0
    %v668 = vadd.f32 %v572, %v667
    %v669 = vpop.f32.mrb[0].mxu0
    %670 = vmatprep.mubr.bf16.mxu0 0
    %671 = vmatmul.mubr.bf16.gmra.mrb[0].mxu0 %v405
    %v672 = vpop.f32.mrb[0].mxu0
    %v673 = vadd.f32 %v572, %v672
    %v674 = vpop.f32.mrb[0].mxu0
    %v675 = vpop.f32.mrb[0].mxu0
    %v676 = vadd.f32 %v572, %v675
    %v677 = vpop.f32.mrb[0].mxu0
    %678 = vmatprep.mubr.bf16.mxu0 0
    %679 = vmatmul.mubr.bf16.gmra.mrb[0].mxu0 %v406
    %v680 = vpop.f32.mrb[0].mxu0
    %v681 = vadd.f32 %v572, %v680
    %v682 = vpop.f32.mrb[0].mxu0
    %v683 = vpop.f32.mrb[0].mxu0
    %v684 = vadd.f32 %v572, %v683
    %v685 = vpop.f32.mrb[0].mxu0
    %686 = vdwg.mxu0
    %v687 = vpack.c.bf16 %v660, %v657
    %v688 = vpack.c.bf16 %v668, %v665
    %v689 = vpack.c.bf16 %v676, %v673
    %v690 = vpack.c.bf16 %v684, %v681
    %691 = vst [vmem:[#allocation3] sm:$0xff] %v687
    %692 = vst [vmem:[#allocation3 + $0x8] sm:$0xff] %v688
    %693 = vst [vmem:[#allocation3 + $0x10] sm:$0xff] %v689
    %694 = vst [vmem:[#allocation3 + $0x18] sm:$0xff] %v690
    %v695 = vld [vmem:[#allocation15] sm:$0xf]
    %v696 = vld [vmem:[#allocation15 + $0x4] sm:$0xf]
    %v697 = vld [vmem:[#allocation15 + $0x8] sm:$0xf]
    %v698 = vld [vmem:[#allocation15 + $0xc] sm:$0xf]
    %v699 = vld [vmem:[#allocation15 + $0x10] sm:$0xf]
    %v700 = vld [vmem:[#allocation15 + $0x14] sm:$0xf]
    %v701 = vld [vmem:[#allocation15 + $0x18] sm:$0xf]
    %v702 = vld [vmem:[#allocation15 + $0x1c] sm:$0xf]
    %v703 = vld [vmem:[#allocation15 + $0x20] sm:$0xf]
    %v704 = vld [vmem:[#allocation15 + $0x24] sm:$0xf]
    %v705 = vld [vmem:[#allocation15 + $0x28] sm:$0xf]
    %v706 = vld [vmem:[#allocation15 + $0x2c] sm:$0xf]
    %v707 = vld [vmem:[#allocation15 + $0x30] sm:$0xf]
    %v708 = vld [vmem:[#allocation15 + $0x34] sm:$0xf]
    %v709 = vld [vmem:[#allocation15 + $0x38] sm:$0xf]
    %v710 = vld [vmem:[#allocation15 + $0x3c] sm:$0xf]
    %v711 = vld [vmem:[#allocation20] sm:$0x1]
    %v713 = vlaneseq
    %v714 = vshrl.u32 %v713, 7
    %v715 = vsub.s32 0, %v714
    %v716 = vrot.slane %v711, %v715
    %v734 = vunpack.c.l.b16 %v695
    %v735 = vunpack.c.l.b16 %v696
    %v736 = vunpack.c.l.b16 %v697
    %v737 = vunpack.c.l.b16 %v698
    %v738 = vunpack.c.l.b16 %v699
    %v739 = vunpack.c.l.b16 %v700
    %v740 = vunpack.c.l.b16 %v701
    %v741 = vunpack.c.l.b16 %v702
    %v742 = vunpack.c.l.b16 %v703
    %v743 = vunpack.c.l.b16 %v704
    %v744 = vunpack.c.l.b16 %v705
    %v745 = vunpack.c.l.b16 %v706
    %v746 = vunpack.c.l.b16 %v707
    %v747 = vunpack.c.l.b16 %v708
    %v748 = vunpack.c.l.b16 %v709
    %v749 = vunpack.c.l.b16 %v710
    %v750 = vpack.c.b16 %v735, %v734
    %v751 = vpack.c.b16 %v737, %v736
    %v752 = vpack.c.b16 %v739, %v738
    %v753 = vpack.c.b16 %v741, %v740
    %v754 = vpack.c.b16 %v743, %v742
    %v755 = vpack.c.b16 %v745, %v744
    %v756 = vpack.c.b16 %v747, %v746
    %v757 = vpack.c.b16 %v749, %v748
    %766 = vmatprep.subr.bf16.mxu0 0
    %767 = vmatpush1.bf16.msra.mxu0 %v750
    %768 = vmatprep.subr.bf16.mxu0 0
    %769 = vmatpush1.bf16.msra.mxu0 %v751
    %770 = vmatprep.subr.bf16.mxu0 0
    %771 = vmatpush1.bf16.msra.mxu0 %v752
    %772 = vmatprep.subr.bf16.mxu0 0
    %773 = vmatpush1.bf16.msra.mxu0 %v753
    %774 = vmatprep.subr.bf16.mxu0 0
    %775 = vmatpush1.bf16.msra.mxu0 %v754
    %776 = vmatprep.subr.bf16.mxu0 0
    %777 = vmatpush1.bf16.msra.mxu0 %v755
    %778 = vmatprep.subr.bf16.mxu0 0
    %779 = vmatpush1.bf16.msra.mxu0 %v756
    %780 = vmatprep.subr.bf16.mxu0 0
    %781 = vmatpush1.bf16.msra.mxu0 %v757
    %782 = vmatprep.subr.bf16.mxu0 0
    %783 = vmatpush1.bf16.msra.mxu0 0
    %784 = vmatprep.subr.bf16.mxu0 0
    %785 = vmatpush1.bf16.msra.mxu0 0
    %786 = vmatprep.subr.bf16.mxu0 0
    %787 = vmatpush1.bf16.msra.mxu0 0
    %788 = vmatprep.subr.bf16.mxu0 0
    %789 = vmatpush1.bf16.msra.mxu0 0
    %790 = vmatprep.subr.bf16.mxu0 0
    %791 = vmatpush1.bf16.msra.mxu0 0
    %792 = vmatprep.subr.bf16.mxu0 0
    %793 = vmatpush1.bf16.msra.mxu0 0
    %794 = vmatprep.subr.bf16.mxu0 0
    %795 = vmatpush1.bf16.msra.mxu0 0
    %796 = vmatprep.subr.bf16.mxu0 0
    %797 = vmatpush1.bf16.msra.mxu0 0
    %798 = vmatprep.mubr.bf16.mxu0 0
    %799 = vmatmul.mubr.bf16.gmra.mrb[0].mxu0 %v403
    %v800 = vpop.f32.mrb[0].mxu0
    %v801 = vadd.f32 %v716, %v800
    %v802 = vpop.f32.mrb[0].mxu0
    %v803 = vpop.f32.mrb[0].mxu0
    %v804 = vadd.f32 %v716, %v803
    %v805 = vpop.f32.mrb[0].mxu0
    %806 = vmatprep.mubr.bf16.mxu0 0
    %807 = vmatmul.mubr.bf16.gmra.mrb[0].mxu0 %v404
    %v808 = vpop.f32.mrb[0].mxu0
    %v809 = vadd.f32 %v716, %v808
    %v810 = vpop.f32.mrb[0].mxu0
    %v811 = vpop.f32.mrb[0].mxu0
    %v812 = vadd.f32 %v716, %v811
    %v813 = vpop.f32.mrb[0].mxu0
    %814 = vmatprep.mubr.bf16.mxu0 0
    %815 = vmatmul.mubr.bf16.gmra.mrb[0].mxu0 %v405
    %v816 = vpop.f32.mrb[0].mxu0
    %v817 = vadd.f32 %v716, %v816
    %v818 = vpop.f32.mrb[0].mxu0
    %v819 = vpop.f32.mrb[0].mxu0
    %v820 = vadd.f32 %v716, %v819
    %v821 = vpop.f32.mrb[0].mxu0
    %822 = vmatprep.mubr.bf16.mxu0 0
    %823 = vmatmul.mubr.bf16.gmra.mrb[0].mxu0 %v406
    %v824 = vpop.f32.mrb[0].mxu0
    %v825 = vadd.f32 %v716, %v824
    %v826 = vpop.f32.mrb[0].mxu0
    %v827 = vpop.f32.mrb[0].mxu0
    %v828 = vadd.f32 %v716, %v827
    %v829 = vpop.f32.mrb[0].mxu0
    %830 = vdwg.mxu0
    %v831 = vpack.c.bf16 %v804, %v801
    %v832 = vpack.c.bf16 %v812, %v809
    %v833 = vpack.c.bf16 %v820, %v817
    %v834 = vpack.c.bf16 %v828, %v825
    %835 = vst [vmem:[#allocation4] sm:$0xff] %v831
    %836 = vst [vmem:[#allocation4 + $0x8] sm:$0xff] %v832
    %837 = vst [vmem:[#allocation4 + $0x10] sm:$0xff] %v833
    %838 = vst [vmem:[#allocation4 + $0x18] sm:$0xff] %v834
    %v839 = vlaneseq
    %v840 = vshrl.u32 %v839, 7
    %v841 = vadd.s32 %v840, 8
    %v842 = vadd.s32 %v840, 16
    %v843 = vadd.s32 %v840, 24
    %v844 = vlaneseq
    %v845 = vand.u32 %v844, 127
    %vm846 = vcmp.le.s32.totalorder %v845, %v840
    %vm847 = vcmp.le.s32.totalorder %v845, %v841
    %vm848 = vcmp.le.s32.totalorder %v845, %v842
    %vm849 = vcmp.le.s32.totalorder %v845, %v843
    %v850 = vld [vmem:[#allocation23] sm:$0x1]
    loop: start=0, step=1, limit=2
    $region138: #{tpu_custom_call.1} parent=1 // loop_pre_header
      _
    $region139: #{tpu_custom_call.1} parent=1 // loop_header
      %s852 = sphi 0, %s856
      %p853 = scmp.ge.s32.totalorder %s852, 2
    $region140: #{tpu_custom_call.1} parent=1 // loop_header_branch
      %855 = sbr.rel (%p853) target = $region144
    $region141: #{tpu_custom_call.1} parent=1 // loop_body
      %s857 = smul.u32 %s852, 32
      %s858 = sshra.s32 %s857, 4
      %s859 = sand.u32 %s857, 15
      %s860 = smul.addr %s858, 8
      %s861 = scalar_lea.vmem [#allocation2], %s860
      %v862 = vld [vmem:[%s861] sm:$0xff]
      %v863 = vld [vmem:[%s861 + $0x8] sm:$0xff]
      %s864 = smul.addr %s858, 8
      %s865 = scalar_lea.vmem [#allocation3], %s864
      %v866 = vld [vmem:[%s865] sm:$0xff]
      %v867 = vld [vmem:[%s865 + $0x8] sm:$0xff]
      %s868 = smul.addr %s858, 8
      %s869 = scalar_lea.vmem [#allocation4], %s868
      %v870 = vld [vmem:[%s869] sm:$0xff]
      %v871 = vld [vmem:[%s869 + $0x8] sm:$0xff]
      %vm872 = vcmask 261120
      %v874 = vsel %vm872, %v862, 0
      %v877 = vsel %vm872, %v863, 0
      %v880 = vsel %vm872, %v866, 0
      %v883 = vsel %vm872, %v867, 0
      %885 = vmatprep.subr.bf16.mxu0 0
      %886 = vmatpush1.bf16.xpose.msra.mxu0 %v880
      %887 = vmatprep.subr.bf16.mxu0 0
      %888 = vmatpush1.bf16.xpose.msra.mxu0 %v883
      %889 = vmatprep.subr.bf16.mxu0 0
      %890 = vmatpush1.bf16.xpose.msra.mxu0 0
      %891 = vmatprep.subr.bf16.mxu0 0
      %892 = vmatpush1.bf16.xpose.msra.mxu0 0
      %893 = vmatprep.subr.bf16.mxu0 0
      %894 = vmatpush1.bf16.xpose.msra.mxu0 0
      %895 = vmatprep.subr.bf16.mxu0 0
      %896 = vmatpush1.bf16.xpose.msra.mxu0 0
      %897 = vmatprep.subr.bf16.mxu0 0
      %898 = vmatpush1.bf16.xpose.msra.mxu0 0
      %899 = vmatprep.subr.bf16.mxu0 0
      %900 = vmatpush1.bf16.xpose.msra.mxu0 0
      %901 = vmatprep.subr.bf16.mxu0 0
      %902 = vmatpush1.bf16.xpose.msra.mxu0 0
      %903 = vmatprep.subr.bf16.mxu0 0
      %904 = vmatpush1.bf16.xpose.msra.mxu0 0
      %905 = vmatprep.subr.bf16.mxu0 0
      %906 = vmatpush1.bf16.xpose.msra.mxu0 0
      %907 = vmatprep.subr.bf16.mxu0 0
      %908 = vmatpush1.bf16.xpose.msra.mxu0 0
      %909 = vmatprep.subr.bf16.mxu0 0
      %910 = vmatpush1.bf16.xpose.msra.mxu0 0
      %911 = vmatprep.subr.bf16.mxu0 0
      %912 = vmatpush1.bf16.xpose.msra.mxu0 0
      %913 = vmatprep.subr.bf16.mxu0 0
      %914 = vmatpush1.bf16.xpose.msra.mxu0 0
      %915 = vmatprep.subr.bf16.mxu0 0
      %916 = vmatpush1.bf16.xpose.msra.mxu0 0
      %917 = vmatprep.mubr.bf16.mxu0 0
      %918 = vmatmul.mubr.bf16.gmra.mrb[0].mxu0 %v874
      %v919 = vpop.f32.mrb[0].mxu0
      %v920 = vadd.f32 0.0, %v919
      %v921 = vpop.f32.mrb[0].mxu0
      %v922 = vpop.f32.mrb[0].mxu0
      %v923 = vadd.f32 0.0, %v922
      %v924 = vpop.f32.mrb[0].mxu0
      %925 = vmatprep.mubr.bf16.mxu0 0
      %926 = vmatmul.mubr.bf16.gmra.mrb[0].mxu0 %v877
      %v927 = vpop.f32.mrb[0].mxu0
      %v928 = vadd.f32 0.0, %v927
      %v929 = vpop.f32.mrb[0].mxu0
      %v930 = vpop.f32.mrb[0].mxu0
      %v931 = vadd.f32 0.0, %v930
      %v932 = vpop.f32.mrb[0].mxu0
      %933 = vdwg.mxu0
      %v934 = vmul.f32 %v920, 0.17677669
      %v935 = vmul.f32 %v923, 0.17677669
      %v936 = vmul.f32 %v928, 0.17677669
      %v937 = vmul.f32 %v931, 0.17677669
      %v938 = vsel %vm846, %v934, -1e+30
      %v939 = vsel %vm847, %v935, -1e+30
      %v940 = vsel %vm848, %v936, -1e+30
      %v941 = vsel %vm849, %v937, -1e+30
      %v942 = vsel %vm872, %v938, -inf
      %943 = vmax.xlane.f32.xlu0 %v942
      %v944 = vpop.xlane.xlu0 %943
      %v945 = vsel %vm872, %v939, -inf
      %946 = vmax.xlane.f32.xlu0 %v945
      %v947 = vpop.xlane.xlu0 %946
      %v948 = vsel %vm872, %v940, -inf
      %949 = vmax.xlane.f32.xlu0 %v948
      %v950 = vpop.xlane.xlu0 %949
      %v951 = vsel %vm872, %v941, -inf
      %952 = vmax.xlane.f32.xlu0 %v951
      %v953 = vpop.xlane.xlu0 %952
      %v954 = vsub.f32 %v938, %v944
      %v955 = vsub.f32 %v939, %v947
      %v956 = vsub.f32 %v940, %v950
      %v957 = vsub.f32 %v941, %v953
      %v958 = vmul.f32 %v954, 1.442695
      %v959 = vpow.pop %v958
      %v960 = vmul.f32 %v955, 1.442695
      %v961 = vpow.pop %v960
      %v962 = vmul.f32 %v956, 1.442695
      %v963 = vpow.pop %v962
      %v964 = vmul.f32 %v957, 1.442695
      %v965 = vpow.pop %v964
      %v966 = vsel %vm872, %v959, 0.0
      %967 = vadd.xlane.f32.xlu0 %v966
      %v968 = vpop.xlane.xlu0 %967
      %v969 = vsel %vm872, %v961, 0.0
      %970 = vadd.xlane.f32.xlu0 %v969
      %v971 = vpop.xlane.xlu0 %970
      %v972 = vsel %vm872, %v963, 0.0
      %973 = vadd.xlane.f32.xlu0 %v972
      %v974 = vpop.xlane.xlu0 %973
      %v975 = vsel %vm872, %v965, 0.0
      %976 = vadd.xlane.f32.xlu0 %v975
      %v977 = vpop.xlane.xlu0 %976
      %v978 = vrcp.pop %v968
      %v979 = vrcp.pop %v971
      %v980 = vrcp.pop %v974
      %v981 = vrcp.pop %v977
      %v982 = vmul.f32 %v959, %v978
      %v983 = vmul.f32 %v961, %v979
      %v984 = vmul.f32 %v963, %v980
      %v985 = vmul.f32 %v965, %v981
      %v986 = vpack.c.bf16 %v983, %v982
      %v987 = vpack.c.bf16 %v985, %v984
      %v989 = vsel %vm872, %v986, 0
      %v992 = vsel %vm872, %v987, 0
      %994 = vmatprep.subr.bf16.mxu0 0
      %995 = vmatpush1.bf16.msra.mxu0 %v870
      %996 = vmatprep.subr.bf16.mxu0 0
      %997 = vmatpush1.bf16.msra.mxu0 %v871
      %998 = vmatprep.subr.bf16.mxu0 0
      %999 = vmatpush1.bf16.msra.mxu0 0
      %1000 = vmatprep.subr.bf16.mxu0 0
      %1001 = vmatpush1.bf16.msra.mxu0 0
      %1002 = vmatprep.subr.bf16.mxu0 0
      %1003 = vmatpush1.bf16.msra.mxu0 0
      %1004 = vmatprep.subr.bf16.mxu0 0
      %1005 = vmatpush1.bf16.msra.mxu0 0
      %1006 = vmatprep.subr.bf16.mxu0 0
      %1007 = vmatpush1.bf16.msra.mxu0 0
      %1008 = vmatprep.subr.bf16.mxu0 0
      %1009 = vmatpush1.bf16.msra.mxu0 0
      %1010 = vmatprep.subr.bf16.mxu0 0
      %1011 = vmatpush1.bf16.msra.mxu0 0
      %1012 = vmatprep.subr.bf16.mxu0 0
      %1013 = vmatpush1.bf16.msra.mxu0 0
      %1014 = vmatprep.subr.bf16.mxu0 0
      %1015 = vmatpush1.bf16.msra.mxu0 0
      %1016 = vmatprep.subr.bf16.mxu0 0
      %1017 = vmatpush1.bf16.msra.mxu0 0
      %1018 = vmatprep.subr.bf16.mxu0 0
      %1019 = vmatpush1.bf16.msra.mxu0 0
      %1020 = vmatprep.subr.bf16.mxu0 0
      %1021 = vmatpush1.bf16.msra.mxu0 0
      %1022 = vmatprep.subr.bf16.mxu0 0
      %1023 = vmatpush1.bf16.msra.mxu0 0
      %1024 = vmatprep.subr.bf16.mxu0 0
      %1025 = vmatpush1.bf16.msra.mxu0 0
      %1026 = vmatprep.mubr.bf16.mxu0 0
      %1027 = vmatmul.mubr.bf16.gmra.mrb[0].mxu0 %v989
      %v1028 = vpop.f32.mrb[0].mxu0
      %v1029 = vadd.f32 0.0, %v1028
      %v1030 = vpop.f32.mrb[0].mxu0
      %v1031 = vpop.f32.mrb[0].mxu0
      %v1032 = vadd.f32 0.0, %v1031
      %v1033 = vpop.f32.mrb[0].mxu0
      %1034 = vmatprep.mubr.bf16.mxu0 0
      %1035 = vmatmul.mubr.bf16.gmra.mrb[0].mxu0 %v992
      %v1036 = vpop.f32.mrb[0].mxu0
      %v1037 = vadd.f32 0.0, %v1036
      %v1038 = vpop.f32.mrb[0].mxu0
      %v1039 = vpop.f32.mrb[0].mxu0
      %v1040 = vadd.f32 0.0, %v1039
      %v1041 = vpop.f32.mrb[0].mxu0
      %1042 = vdwg.mxu0
      %v1043 = vpack.c.bf16 %v1032, %v1029
      %v1044 = vpack.c.bf16 %v1040, %v1037
      %v1045 = vld [vmem:[#allocation21] sm:$0xf]
      %v1046 = vld [vmem:[#allocation21 + $0x4] sm:$0xf]
      %v1047 = vld [vmem:[#allocation21 + $0x8] sm:$0xf]
      %v1048 = vld [vmem:[#allocation21 + $0xc] sm:$0xf]
      %1051 = vrot.lane.b32.xlu0 %v862, 96
      %v1052 = vpop.permute.xlu0 %1051
      %1053 = vrot.lane.b32.xlu0 %v863, 96
      %v1054 = vpop.permute.xlu0 %1053
      %1057 = vrot.lane.b32.xlu0 %v866, 96
      %v1058 = vpop.permute.xlu0 %1057
      %1059 = vrot.lane.b32.xlu0 %v867, 96
      %v1060 = vpop.permute.xlu0 %1059
      %v1062 = vsel %vm872, %v1052, 0
      %v1065 = vsel %vm872, %v1054, 0
      %v1068 = vsel %vm872, %v1058, 0
      %v1071 = vsel %vm872, %v1060, 0
      %1073 = vmatprep.subr.bf16.mxu0 0
      %1074 = vmatpush1.bf16.xpose.msra.mxu0 %v1068
      %1075 = vmatprep.subr.bf16.mxu0 0
      %1076 = vmatpush1.bf16.xpose.msra.mxu0 %v1071
      %1077 = vmatprep.subr.bf16.mxu0 0
      %1078 = vmatpush1.bf16.xpose.msra.mxu0 0
      %1079 = vmatprep.subr.bf16.mxu0 0
      %1080 = vmatpush1.bf16.xpose.msra.mxu0 0
      %1081 = vmatprep.subr.bf16.mxu0 0
      %1082 = vmatpush1.bf16.xpose.msra.mxu0 0
      %1083 = vmatprep.subr.bf16.mxu0 0
      %1084 = vmatpush1.bf16.xpose.msra.mxu0 0
      %1085 = vmatprep.subr.bf16.mxu0 0
      %1086 = vmatpush1.bf16.xpose.msra.mxu0 0
      %1087 = vmatprep.subr.bf16.mxu0 0
      %1088 = vmatpush1.bf16.xpose.msra.mxu0 0
      %1089 = vmatprep.subr.bf16.mxu0 0
      %1090 = vmatpush1.bf16.xpose.msra.mxu0 0
      %1091 = vmatprep.subr.bf16.mxu0 0
      %1092 = vmatpush1.bf16.xpose.msra.mxu0 0
      %1093 = vmatprep.subr.bf16.mxu0 0
      %1094 = vmatpush1.bf16.xpose.msra.mxu0 0
      %1095 = vmatprep.subr.bf16.mxu0 0
      %1096 = vmatpush1.bf16.xpose.msra.mxu0 0
      %1097 = vmatprep.subr.bf16.mxu0 0
      %1098 = vmatpush1.bf16.xpose.msra.mxu0 0
      %1099 = vmatprep.subr.bf16.mxu0 0
      %1100 = vmatpush1.bf16.xpose.msra.mxu0 0
      %1101 = vmatprep.subr.bf16.mxu0 0
      %1102 = vmatpush1.bf16.xpose.msra.mxu0 0
      %1103 = vmatprep.subr.bf16.mxu0 0
      %1104 = vmatpush1.bf16.xpose.msra.mxu0 0
      %1105 = vmatprep.mubr.bf16.mxu0 0
      %1106 = vmatmul.mubr.bf16.gmra.mrb[0].mxu0 %v1062
      %v1107 = vpop.f32.mrb[0].mxu0
      %v1108 = vadd.f32 0.0, %v1107
      %v1109 = vpop.f32.mrb[0].mxu0
      %v1110 = vpop.f32.mrb[0].mxu0
      %v1111 = vadd.f32 0.0, %v1110
      %v1112 = vpop.f32.mrb[0].mxu0
      %1113 = vmatprep.mubr.bf16.mxu0 0
      %1114 = vmatmul.mubr.bf16.gmra.mrb[0].mxu0 %v1065
      %v1115 = vpop.f32.mrb[0].mxu0
      %v1116 = vadd.f32 0.0, %v1115
      %v1117 = vpop.f32.mrb[0].mxu0
      %v1118 = vpop.f32.mrb[0].mxu0
      %v1119 = vadd.f32 0.0, %v1118
      %v1120 = vpop.f32.mrb[0].mxu0
      %1121 = vdwg.mxu0
      %v1122 = vmul.f32 %v1108, 0.17677669
      %v1123 = vmul.f32 %v1111, 0.17677669
      %v1124 = vmul.f32 %v1116, 0.17677669
      %v1125 = vmul.f32 %v1119, 0.17677669
      %v1126 = vsel %vm846, %v1122, -1e+30
      %v1127 = vsel %vm847, %v1123, -1e+30
      %v1128 = vsel %vm848, %v1124, -1e+30
      %v1129 = vsel %vm849, %v1125, -1e+30
      %v1130 = vsel %vm872, %v1126, -inf
      %1131 = vmax.xlane.f32.xlu0 %v1130
      %v1132 = vpop.xlane.xlu0 %1131
      %v1133 = vsel %vm872, %v1127, -inf
      %1134 = vmax.xlane.f32.xlu0 %v1133
      %v1135 = vpop.xlane.xlu0 %1134
      %v1136 = vsel %vm872, %v1128, -inf
      %1137 = vmax.xlane.f32.xlu0 %v1136
      %v1138 = vpop.xlane.xlu0 %1137
      %v1139 = vsel %vm872, %v1129, -inf
      %1140 = vmax.xlane.f32.xlu0 %v1139
      %v1141 = vpop.xlane.xlu0 %1140
      %v1142 = vsub.f32 %v1126, %v1132
      %v1143 = vsub.f32 %v1127, %v1135
      %v1144 = vsub.f32 %v1128, %v1138
      %v1145 = vsub.f32 %v1129, %v1141
      %v1146 = vmul.f32 %v1142, 1.442695
      %v1147 = vpow.pop %v1146
      %v1148 = vmul.f32 %v1143, 1.442695
      %v1149 = vpow.pop %v1148
      %v1150 = vmul.f32 %v1144, 1.442695
      %v1151 = vpow.pop %v1150
      %v1152 = vmul.f32 %v1145, 1.442695
      %v1153 = vpow.pop %v1152
      %v1154 = vsel %vm872, %v1147, 0.0
      %1155 = vadd.xlane.f32.xlu0 %v1154
      %v1156 = vpop.xlane.xlu0 %1155
      %v1157 = vsel %vm872, %v1149, 0.0
      %1158 = vadd.xlane.f32.xlu0 %v1157
      %v1159 = vpop.xlane.xlu0 %1158
      %v1160 = vsel %vm872, %v1151, 0.0
      %1161 = vadd.xlane.f32.xlu0 %v1160
      %v1162 = vpop.xlane.xlu0 %1161
      %v1163 = vsel %vm872, %v1153, 0.0
      %1164 = vadd.xlane.f32.xlu0 %v1163
      %v1165 = vpop.xlane.xlu0 %1164
      %v1166 = vrcp.pop %v1156
      %v1167 = vrcp.pop %v1159
      %v1168 = vrcp.pop %v1162
      %v1169 = vrcp.pop %v1165
      %v1170 = vmul.f32 %v1147, %v1166
      %v1171 = vmul.f32 %v1149, %v1167
      %v1172 = vmul.f32 %v1151, %v1168
      %v1173 = vmul.f32 %v1153, %v1169
      %v1174 = vpack.c.bf16 %v1171, %v1170
      %v1175 = vpack.c.bf16 %v1173, %v1172
      %1178 = vrot.lane.b32.xlu0 %v870, 96
      %v1179 = vpop.permute.xlu0 %1178
      %1180 = vrot.lane.b32.xlu0 %v871, 96
      %v1181 = vpop.permute.xlu0 %1180
      %v1185 = vsel %vm872, %v1174, 0
      %v1188 = vsel %vm872, %v1175, 0
      %1190 = vmatprep.subr.bf16.mxu0 0
      %1191 = vmatpush1.bf16.msra.mxu0 %v1179
      %1192 = vmatprep.subr.bf16.mxu0 0
      %1193 = vmatpush1.bf16.msra.mxu0 %v1181
      %1194 = vmatprep.subr.bf16.mxu0 0
      %1195 = vmatpush1.bf16.msra.mxu0 0
      %1196 = vmatprep.subr.bf16.mxu0 0
      %1197 = vmatpush1.bf16.msra.mxu0 0
      %1198 = vmatprep.subr.bf16.mxu0 0
      %1199 = vmatpush1.bf16.msra.mxu0 0
      %1200 = vmatprep.subr.bf16.mxu0 0
      %1201 = vmatpush1.bf16.msra.mxu0 0
      %1202 = vmatprep.subr.bf16.mxu0 0
      %1203 = vmatpush1.bf16.msra.mxu0 0
      %1204 = vmatprep.subr.bf16.mxu0 0
      %1205 = vmatpush1.bf16.msra.mxu0 0
      %1206 = vmatprep.subr.bf16.mxu0 0
      %1207 = vmatpush1.bf16.msra.mxu0 0
      %1208 = vmatprep.subr.bf16.mxu0 0
      %1209 = vmatpush1.bf16.msra.mxu0 0
      %1210 = vmatprep.subr.bf16.mxu0 0
      %1211 = vmatpush1.bf16.msra.mxu0 0
      %1212 = vmatprep.subr.bf16.mxu0 0
      %1213 = vmatpush1.bf16.msra.mxu0 0
      %1214 = vmatprep.subr.bf16.mxu0 0
      %1215 = vmatpush1.bf16.msra.mxu0 0
      %1216 = vmatprep.subr.bf16.mxu0 0
      %1217 = vmatpush1.bf16.msra.mxu0 0
      %1218 = vmatprep.subr.bf16.mxu0 0
      %1219 = vmatpush1.bf16.msra.mxu0 0
      %1220 = vmatprep.subr.bf16.mxu0 0
      %1221 = vmatpush1.bf16.msra.mxu0 0
      %1222 = vmatprep.mubr.bf16.mxu0 0
      %1223 = vmatmul.mubr.bf16.gmra.mrb[0].mxu0 %v1185
      %v1224 = vpop.f32.mrb[0].mxu0
      %v1225 = vadd.f32 0.0, %v1224
      %v1226 = vpop.f32.mrb[0].mxu0
      %v1227 = vpop.f32.mrb[0].mxu0
      %v1228 = vadd.f32 0.0, %v1227
      %v1229 = vpop.f32.mrb[0].mxu0
      %1230 = vmatprep.mubr.bf16.mxu0 0
      %1231 = vmatmul.mubr.bf16.gmra.mrb[0].mxu0 %v1188
      %v1232 = vpop.f32.mrb[0].mxu0
      %v1233 = vadd.f32 0.0, %v1232
      %v1234 = vpop.f32.mrb[0].mxu0
      %v1235 = vpop.f32.mrb[0].mxu0
      %v1236 = vadd.f32 0.0, %v1235
      %v1237 = vpop.f32.mrb[0].mxu0
      %1238 = vdwg.mxu0
      %v1239 = vpack.c.bf16 %v1228, %v1225
      %v1240 = vpack.c.bf16 %v1236, %v1233
      %v1241 = vld [vmem:[#allocation21 + $0x10] sm:$0xf]
      %v1242 = vld [vmem:[#allocation21 + $0x14] sm:$0xf]
      %v1243 = vld [vmem:[#allocation21 + $0x18] sm:$0xf]
      %v1244 = vld [vmem:[#allocation21 + $0x1c] sm:$0xf]
      %v1249 = vunpack.c.l.b16 %v1241
      %v1250 = vunpack.c.l.b16 %v1242
      %v1251 = vunpack.c.l.b16 %v1243
      %v1252 = vunpack.c.l.b16 %v1244
      %v1253 = vpack.c.b16 %v1250, %v1249
      %v1254 = vpack.c.b16 %v1252, %v1251
      %v1258 = vsel %vm872, %v1239, 0
      %v1261 = vsel %vm872, %v1240, 0
      %1263 = vmatprep.subr.bf16.mxu0 0
      %1264 = vmatpush1.bf16.msra.mxu0 %v1253
      %1265 = vmatprep.subr.bf16.mxu0 0
      %1266 = vmatpush1.bf16.msra.mxu0 %v1254
      %1267 = vmatprep.subr.bf16.mxu0 0
      %1268 = vmatpush1.bf16.msra.mxu0 0
      %1269 = vmatprep.subr.bf16.mxu0 0
      %1270 = vmatpush1.bf16.msra.mxu0 0
      %1271 = vmatprep.subr.bf16.mxu0 0
      %1272 = vmatpush1.bf16.msra.mxu0 0
      %1273 = vmatprep.subr.bf16.mxu0 0
      %1274 = vmatpush1.bf16.msra.mxu0 0
      %1275 = vmatprep.subr.bf16.mxu0 0
      %1276 = vmatpush1.bf16.msra.mxu0 0
      %1277 = vmatprep.subr.bf16.mxu0 0
      %1278 = vmatpush1.bf16.msra.mxu0 0
      %1279 = vmatprep.subr.bf16.mxu0 0
      %1280 = vmatpush1.bf16.msra.mxu0 0
      %1281 = vmatprep.subr.bf16.mxu0 0
      %1282 = vmatpush1.bf16.msra.mxu0 0
      %1283 = vmatprep.subr.bf16.mxu0 0
      %1284 = vmatpush1.bf16.msra.mxu0 0
      %1285 = vmatprep.subr.bf16.mxu0 0
      %1286 = vmatpush1.bf16.msra.mxu0 0
      %1287 = vmatprep.subr.bf16.mxu0 0
      %1288 = vmatpush1.bf16.msra.mxu0 0
      %1289 = vmatprep.subr.bf16.mxu0 0
      %1290 = vmatpush1.bf16.msra.mxu0 0
      %1291 = vmatprep.subr.bf16.mxu0 0
      %1292 = vmatpush1.bf16.msra.mxu0 0
      %1293 = vmatprep.subr.bf16.mxu0 0
      %1294 = vmatpush1.bf16.msra.mxu0 0
      %1295 = vmatprep.mubr.bf16.mxu0 0
      %1296 = vmatmul.mubr.bf16.gmra.mrb[0].mxu0 %v1258
      %v1297 = vpop.f32.mrb[0].mxu0
      %v1298 = vadd.f32 0.0, %v1297
      %v1299 = vpop.f32.mrb[0].mxu0
      %v1300 = vpop.f32.mrb[0].mxu0
      %v1301 = vadd.f32 0.0, %v1300
      %v1302 = vpop.f32.mrb[0].mxu0
      %1303 = vmatprep.mubr.bf16.mxu0 0
      %1304 = vmatmul.mubr.bf16.gmra.mrb[0].mxu0 %v1261
      %v1305 = vpop.f32.mrb[0].mxu0
      %v1306 = vadd.f32 0.0, %v1305
      %v1307 = vpop.f32.mrb[0].mxu0
      %v1308 = vpop.f32.mrb[0].mxu0
      %v1309 = vadd.f32 0.0, %v1308
      %v1310 = vpop.f32.mrb[0].mxu0
      %1311 = vdwg.mxu0
      %v1316 = vunpack.c.l.b16 %v1045
      %v1317 = vunpack.c.l.b16 %v1046
      %v1318 = vunpack.c.l.b16 %v1047
      %v1319 = vunpack.c.l.b16 %v1048
      %v1320 = vpack.c.b16 %v1317, %v1316
      %v1321 = vpack.c.b16 %v1319, %v1318
      %v1325 = vsel %vm872, %v1043, 0
      %v1328 = vsel %vm872, %v1044, 0
      %1330 = vmatprep.subr.bf16.mxu0 0
      %1331 = vmatpush1.bf16.msra.mxu0 %v1320
      %1332 = vmatprep.subr.bf16.mxu0 0
      %1333 = vmatpush1.bf16.msra.mxu0 %v1321
      %1334 = vmatprep.subr.bf16.mxu0 0
      %1335 = vmatpush1.bf16.msra.mxu0 0
      %1336 = vmatprep.subr.bf16.mxu0 0
      %1337 = vmatpush1.bf16.msra.mxu0 0
      %1338 = vmatprep.subr.bf16.mxu0 0
      %1339 = vmatpush1.bf16.msra.mxu0 0
      %1340 = vmatprep.subr.bf16.mxu0 0
      %1341 = vmatpush1.bf16.msra.mxu0 0
      %1342 = vmatprep.subr.bf16.mxu0 0
      %1343 = vmatpush1.bf16.msra.mxu0 0
      %1344 = vmatprep.subr.bf16.mxu0 0
      %1345 = vmatpush1.bf16.msra.mxu0 0
      %1346 = vmatprep.subr.bf16.mxu0 0
      %1347 = vmatpush1.bf16.msra.mxu0 0
      %1348 = vmatprep.subr.bf16.mxu0 0
      %1349 = vmatpush1.bf16.msra.mxu0 0
      %1350 = vmatprep.subr.bf16.mxu0 0
      %1351 = vmatpush1.bf16.msra.mxu0 0
      %1352 = vmatprep.subr.bf16.mxu0 0
      %1353 = vmatpush1.bf16.msra.mxu0 0
      %1354 = vmatprep.subr.bf16.mxu0 0
      %1355 = vmatpush1.bf16.msra.mxu0 0
      %1356 = vmatprep.subr.bf16.mxu0 0
      %1357 = vmatpush1.bf16.msra.mxu0 0
      %1358 = vmatprep.subr.bf16.mxu0 0
      %1359 = vmatpush1.bf16.msra.mxu0 0
      %1360 = vmatprep.subr.bf16.mxu0 0
      %1361 = vmatpush1.bf16.msra.mxu0 0
      %1362 = vmatprep.mubr.bf16.mxu0 0
      %1363 = vmatmul.mubr.bf16.gmra.mrb[0].mxu0 %v1325
      %v1364 = vpop.f32.mrb[0].mxu0
      %v1365 = vadd.f32 %v1298, %v1364
      %v1366 = vpop.f32.mrb[0].mxu0
      %v1367 = vpop.f32.mrb[0].mxu0
      %v1368 = vadd.f32 %v1301, %v1367
      %v1369 = vpop.f32.mrb[0].mxu0
      %1370 = vmatprep.mubr.bf16.mxu0 0
      %1371 = vmatmul.mubr.bf16.gmra.mrb[0].mxu0 %v1328
      %v1372 = vpop.f32.mrb[0].mxu0
      %v1373 = vadd.f32 %v1306, %v1372
      %v1374 = vpop.f32.mrb[0].mxu0
      %v1375 = vpop.f32.mrb[0].mxu0
      %v1376 = vadd.f32 %v1309, %v1375
      %v1377 = vpop.f32.mrb[0].mxu0
      %1378 = vdwg.mxu0
      %1379 = vrot.lane.b32.xlu0 %v862, 64
      %v1380 = vpop.permute.xlu0 %1379
      %1381 = vrot.lane.b32.xlu0 %v863, 64
      %v1382 = vpop.permute.xlu0 %1381
      %1383 = vrot.lane.b32.xlu0 %v866, 64
      %v1384 = vpop.permute.xlu0 %1383
      %1385 = vrot.lane.b32.xlu0 %v867, 64
      %v1386 = vpop.permute.xlu0 %1385
      %v1388 = vsel %vm872, %v1380, 0
      %v1391 = vsel %vm872, %v1382, 0
      %v1394 = vsel %vm872, %v1384, 0
      %v1397 = vsel %vm872, %v1386, 0
      %1399 = vmatprep.subr.bf16.mxu0 0
      %1400 = vmatpush1.bf16.xpose.msra.mxu0 %v1394
      %1401 = vmatprep.subr.bf16.mxu0 0
      %1402 = vmatpush1.bf16.xpose.msra.mxu0 %v1397
      %1403 = vmatprep.subr.bf16.mxu0 0
      %1404 = vmatpush1.bf16.xpose.msra.mxu0 0
      %1405 = vmatprep.subr.bf16.mxu0 0
      %1406 = vmatpush1.bf16.xpose.msra.mxu0 0
      %1407 = vmatprep.subr.bf16.mxu0 0
      %1408 = vmatpush1.bf16.xpose.msra.mxu0 0
      %1409 = vmatprep.subr.bf16.mxu0 0
      %1410 = vmatpush1.bf16.xpose.msra.mxu0 0
      %1411 = vmatprep.subr.bf16.mxu0 0
      %1412 = vmatpush1.bf16.xpose.msra.mxu0 0
      %1413 = vmatprep.subr.bf16.mxu0 0
      %1414 = vmatpush1.bf16.xpose.msra.mxu0 0
      %1415 = vmatprep.subr.bf16.mxu0 0
      %1416 = vmatpush1.bf16.xpose.msra.mxu0 0
      %1417 = vmatprep.subr.bf16.mxu0 0
      %1418 = vmatpush1.bf16.xpose.msra.mxu0 0
      %1419 = vmatprep.subr.bf16.mxu0 0
      %1420 = vmatpush1.bf16.xpose.msra.mxu0 0
      %1421 = vmatprep.subr.bf16.mxu0 0
      %1422 = vmatpush1.bf16.xpose.msra.mxu0 0
      %1423 = vmatprep.subr.bf16.mxu0 0
      %1424 = vmatpush1.bf16.xpose.msra.mxu0 0
      %1425 = vmatprep.subr.bf16.mxu0 0
      %1426 = vmatpush1.bf16.xpose.msra.mxu0 0
      %1427 = vmatprep.subr.bf16.mxu0 0
      %1428 = vmatpush1.bf16.xpose.msra.mxu0 0
      %1429 = vmatprep.subr.bf16.mxu0 0
      %1430 = vmatpush1.bf16.xpose.msra.mxu0 0
      %1431 = vmatprep.mubr.bf16.mxu0 0
      %1432 = vmatmul.mubr.bf16.gmra.mrb[0].mxu0 %v1388
      %v1433 = vpop.f32.mrb[0].mxu0
      %v1434 = vadd.f32 0.0, %v1433
      %v1435 = vpop.f32.mrb[0].mxu0
      %v1436 = vpop.f32.mrb[0].mxu0
      %v1437 = vadd.f32 0.0, %v1436
      %v1438 = vpop.f32.mrb[0].mxu0
      %1439 = vmatprep.mubr.bf16.mxu0 0
      %1440 = vmatmul.mubr.bf16.gmra.mrb[0].mxu0 %v1391
      %v1441 = vpop.f32.mrb[0].mxu0
      %v1442 = vadd.f32 0.0, %v1441
      %v1443 = vpop.f32.mrb[0].mxu0
      %v1444 = vpop.f32.mrb[0].mxu0
      %v1445 = vadd.f32 0.0, %v1444
      %v1446 = vpop.f32.mrb[0].mxu0
      %1447 = vdwg.mxu0
      %v1448 = vmul.f32 %v1434, 0.17677669
      %v1449 = vmul.f32 %v1437, 0.17677669
      %v1450 = vmul.f32 %v1442, 0.17677669
      %v1451 = vmul.f32 %v1445, 0.17677669
      %v1452 = vsel %vm846, %v1448, -1e+30
      %v1453 = vsel %vm847, %v1449, -1e+30
      %v1454 = vsel %vm848, %v1450, -1e+30
      %v1455 = vsel %vm849, %v1451, -1e+30
      %v1456 = vsel %vm872, %v1452, -inf
      %1457 = vmax.xlane.f32.xlu0 %v1456
      %v1458 = vpop.xlane.xlu0 %1457
      %v1459 = vsel %vm872, %v1453, -inf
      %1460 = vmax.xlane.f32.xlu0 %v1459
      %v1461 = vpop.xlane.xlu0 %1460
      %v1462 = vsel %vm872, %v1454, -inf
      %1463 = vmax.xlane.f32.xlu0 %v1462
      %v1464 = vpop.xlane.xlu0 %1463
      %v1465 = vsel %vm872, %v1455, -inf
      %1466 = vmax.xlane.f32.xlu0 %v1465
      %v1467 = vpop.xlane.xlu0 %1466
      %v1468 = vsub.f32 %v1452, %v1458
      %v1469 = vsub.f32 %v1453, %v1461
      %v1470 = vsub.f32 %v1454, %v1464
      %v1471 = vsub.f32 %v1455, %v1467
      %v1472 = vmul.f32 %v1468, 1.442695
      %v1473 = vpow.pop %v1472
      %v1474 = vmul.f32 %v1469, 1.442695
      %v1475 = vpow.pop %v1474
      %v1476 = vmul.f32 %v1470, 1.442695
      %v1477 = vpow.pop %v1476
      %v1478 = vmul.f32 %v1471, 1.442695
      %v1479 = vpow.pop %v1478
      %v1480 = vsel %vm872, %v1473, 0.0
      %1481 = vadd.xlane.f32.xlu0 %v1480
      %v1482 = vpop.xlane.xlu0 %1481
      %v1483 = vsel %vm872, %v1475, 0.0
      %1484 = vadd.xlane.f32.xlu0 %v1483
      %v1485 = vpop.xlane.xlu0 %1484
      %v1486 = vsel %vm872, %v1477, 0.0
      %1487 = vadd.xlane.f32.xlu0 %v1486
      %v1488 = vpop.xlane.xlu0 %1487
      %v1489 = vsel %vm872, %v1479, 0.0
      %1490 = vadd.xlane.f32.xlu0 %v1489
      %v1491 = vpop.xlane.xlu0 %1490
      %v1492 = vrcp.pop %v1482
      %v1493 = vrcp.pop %v1485
      %v1494 = vrcp.pop %v1488
      %v1495 = vrcp.pop %v1491
      %v1496 = vmul.f32 %v1473, %v1492
      %v1497 = vmul.f32 %v1475, %v1493
      %v1498 = vmul.f32 %v1477, %v1494
      %v1499 = vmul.f32 %v1479, %v1495
      %v1500 = vpack.c.bf16 %v1497, %v1496
      %v1501 = vpack.c.bf16 %v1499, %v1498
      %1502 = vrot.lane.b32.xlu0 %v870, 64
      %v1503 = vpop.permute.xlu0 %1502
      %1504 = vrot.lane.b32.xlu0 %v871, 64
      %v1505 = vpop.permute.xlu0 %1504
      %v1509 = vsel %vm872, %v1500, 0
      %v1512 = vsel %vm872, %v1501, 0
      %1514 = vmatprep.subr.bf16.mxu0 0
      %1515 = vmatpush1.bf16.msra.mxu0 %v1503
      %1516 = vmatprep.subr.bf16.mxu0 0
      %1517 = vmatpush1.bf16.msra.mxu0 %v1505
      %1518 = vmatprep.subr.bf16.mxu0 0
      %1519 = vmatpush1.bf16.msra.mxu0 0
      %1520 = vmatprep.subr.bf16.mxu0 0
      %1521 = vmatpush1.bf16.msra.mxu0 0
      %1522 = vmatprep.subr.bf16.mxu0 0
      %1523 = vmatpush1.bf16.msra.mxu0 0
      %1524 = vmatprep.subr.bf16.mxu0 0
      %1525 = vmatpush1.bf16.msra.mxu0 0
      %1526 = vmatprep.subr.bf16.mxu0 0
      %1527 = vmatpush1.bf16.msra.mxu0 0
      %1528 = vmatprep.subr.bf16.mxu0 0
      %1529 = vmatpush1.bf16.msra.mxu0 0
      %1530 = vmatprep.subr.bf16.mxu0 0
      %1531 = vmatpush1.bf16.msra.mxu0 0
      %1532 = vmatprep.subr.bf16.mxu0 0
      %1533 = vmatpush1.bf16.msra.mxu0 0
      %1534 = vmatprep.subr.bf16.mxu0 0
      %1535 = vmatpush1.bf16.msra.mxu0 0
      %1536 = vmatprep.subr.bf16.mxu0 0
      %1537 = vmatpush1.bf16.msra.mxu0 0
      %1538 = vmatprep.subr.bf16.mxu0 0
      %1539 = vmatpush1.bf16.msra.mxu0 0
      %1540 = vmatprep.subr.bf16.mxu0 0
      %1541 = vmatpush1.bf16.msra.mxu0 0
      %1542 = vmatprep.subr.bf16.mxu0 0
      %1543 = vmatpush1.bf16.msra.mxu0 0
      %1544 = vmatprep.subr.bf16.mxu0 0
      %1545 = vmatpush1.bf16.msra.mxu0 0
      %1546 = vmatprep.mubr.bf16.mxu0 0
      %1547 = vmatmul.mubr.bf16.gmra.mrb[0].mxu0 %v1509
      %v1548 = vpop.f32.mrb[0].mxu0
      %v1549 = vadd.f32 0.0, %v1548
      %v1550 = vpop.f32.mrb[0].mxu0
      %v1551 = vpop.f32.mrb[0].mxu0
      %v1552 = vadd.f32 0.0, %v1551
      %v1553 = vpop.f32.mrb[0].mxu0
      %1554 = vmatprep.mubr.bf16.mxu0 0
      %1555 = vmatmul.mubr.bf16.gmra.mrb[0].mxu0 %v1512
      %v1556 = vpop.f32.mrb[0].mxu0
      %v1557 = vadd.f32 0.0, %v1556
      %v1558 = vpop.f32.mrb[0].mxu0
      %v1559 = vpop.f32.mrb[0].mxu0
      %v1560 = vadd.f32 0.0, %v1559
      %v1561 = vpop.f32.mrb[0].mxu0
      %1562 = vdwg.mxu0
      %v1563 = vpack.c.bf16 %v1552, %v1549
      %v1564 = vpack.c.bf16 %v1560, %v1557
      %v1565 = vld [vmem:[#allocation21 + $0x20] sm:$0xf]
      %v1566 = vld [vmem:[#allocation21 + $0x24] sm:$0xf]
      %v1567 = vld [vmem:[#allocation21 + $0x28] sm:$0xf]
      %v1568 = vld [vmem:[#allocation21 + $0x2c] sm:$0xf]
      %v1573 = vunpack.c.l.b16 %v1565
      %v1574 = vunpack.c.l.b16 %v1566
      %v1575 = vunpack.c.l.b16 %v1567
      %v1576 = vunpack.c.l.b16 %v1568
      %v1577 = vpack.c.b16 %v1574, %v1573
      %v1578 = vpack.c.b16 %v1576, %v1575
      %v1582 = vsel %vm872, %v1563, 0
      %v1585 = vsel %vm872, %v1564, 0
      %1587 = vmatprep.subr.bf16.mxu0 0
      %1588 = vmatpush1.bf16.msra.mxu0 %v1577
      %1589 = vmatprep.subr.bf16.mxu0 0
      %1590 = vmatpush1.bf16.msra.mxu0 %v1578
      %1591 = vmatprep.subr.bf16.mxu0 0
      %1592 = vmatpush1.bf16.msra.mxu0 0
      %1593 = vmatprep.subr.bf16.mxu0 0
      %1594 = vmatpush1.bf16.msra.mxu0 0
      %1595 = vmatprep.subr.bf16.mxu0 0
      %1596 = vmatpush1.bf16.msra.mxu0 0
      %1597 = vmatprep.subr.bf16.mxu0 0
      %1598 = vmatpush1.bf16.msra.mxu0 0
      %1599 = vmatprep.subr.bf16.mxu0 0
      %1600 = vmatpush1.bf16.msra.mxu0 0
      %1601 = vmatprep.subr.bf16.mxu0 0
      %1602 = vmatpush1.bf16.msra.mxu0 0
      %1603 = vmatprep.subr.bf16.mxu0 0
      %1604 = vmatpush1.bf16.msra.mxu0 0
      %1605 = vmatprep.subr.bf16.mxu0 0
      %1606 = vmatpush1.bf16.msra.mxu0 0
      %1607 = vmatprep.subr.bf16.mxu0 0
      %1608 = vmatpush1.bf16.msra.mxu0 0
      %1609 = vmatprep.subr.bf16.mxu0 0
      %1610 = vmatpush1.bf16.msra.mxu0 0
      %1611 = vmatprep.subr.bf16.mxu0 0
      %1612 = vmatpush1.bf16.msra.mxu0 0
      %1613 = vmatprep.subr.bf16.mxu0 0
      %1614 = vmatpush1.bf16.msra.mxu0 0
      %1615 = vmatprep.subr.bf16.mxu0 0
      %1616 = vmatpush1.bf16.msra.mxu0 0
      %1617 = vmatprep.subr.bf16.mxu0 0
      %1618 = vmatpush1.bf16.msra.mxu0 0
      %1619 = vmatprep.mubr.bf16.mxu0 0
      %1620 = vmatmul.mubr.bf16.gmra.mrb[0].mxu0 %v1582
      %v1621 = vpop.f32.mrb[0].mxu0
      %v1622 = vadd.f32 0.0, %v1621
      %v1623 = vpop.f32.mrb[0].mxu0
      %v1624 = vpop.f32.mrb[0].mxu0
      %v1625 = vadd.f32 0.0, %v1624
      %v1626 = vpop.f32.mrb[0].mxu0
      %1627 = vmatprep.mubr.bf16.mxu0 0
      %1628 = vmatmul.mubr.bf16.gmra.mrb[0].mxu0 %v1585
      %v1629 = vpop.f32.mrb[0].mxu0
      %v1630 = vadd.f32 0.0, %v1629
      %v1631 = vpop.f32.mrb[0].mxu0
      %v1632 = vpop.f32.mrb[0].mxu0
      %v1633 = vadd.f32 0.0, %v1632
      %v1634 = vpop.f32.mrb[0].mxu0
      %1635 = vdwg.mxu0
      %v1636 = vadd.f32 %v1365, %v1622
      %v1637 = vadd.f32 %v1368, %v1625
      %v1638 = vadd.f32 %v1373, %v1630
      %v1639 = vadd.f32 %v1376, %v1633
      %1640 = vrot.lane.b32.xlu0 %v862, 32
      %v1641 = vpop.permute.xlu0 %1640
      %1642 = vrot.lane.b32.xlu0 %v863, 32
      %v1643 = vpop.permute.xlu0 %1642
      %1644 = vrot.lane.b32.xlu0 %v866, 32
      %v1645 = vpop.permute.xlu0 %1644
      %1646 = vrot.lane.b32.xlu0 %v867, 32
      %v1647 = vpop.permute.xlu0 %1646
      %v1649 = vsel %vm872, %v1641, 0
      %v1652 = vsel %vm872, %v1643, 0
      %v1655 = vsel %vm872, %v1645, 0
      %v1658 = vsel %vm872, %v1647, 0
      %1660 = vmatprep.subr.bf16.mxu0 0
      %1661 = vmatpush1.bf16.xpose.msra.mxu0 %v1655
      %1662 = vmatprep.subr.bf16.mxu0 0
      %1663 = vmatpush1.bf16.xpose.msra.mxu0 %v1658
      %1664 = vmatprep.subr.bf16.mxu0 0
      %1665 = vmatpush1.bf16.xpose.msra.mxu0 0
      %1666 = vmatprep.subr.bf16.mxu0 0
      %1667 = vmatpush1.bf16.xpose.msra.mxu0 0
      %1668 = vmatprep.subr.bf16.mxu0 0
      %1669 = vmatpush1.bf16.xpose.msra.mxu0 0
      %1670 = vmatprep.subr.bf16.mxu0 0
      %1671 = vmatpush1.bf16.xpose.msra.mxu0 0
      %1672 = vmatprep.subr.bf16.mxu0 0
      %1673 = vmatpush1.bf16.xpose.msra.mxu0 0
      %1674 = vmatprep.subr.bf16.mxu0 0
      %1675 = vmatpush1.bf16.xpose.msra.mxu0 0
      %1676 = vmatprep.subr.bf16.mxu0 0
      %1677 = vmatpush1.bf16.xpose.msra.mxu0 0
      %1678 = vmatprep.subr.bf16.mxu0 0
      %1679 = vmatpush1.bf16.xpose.msra.mxu0 0
      %1680 = vmatprep.subr.bf16.mxu0 0
      %1681 = vmatpush1.bf16.xpose.msra.mxu0 0
      %1682 = vmatprep.subr.bf16.mxu0 0
      %1683 = vmatpush1.bf16.xpose.msra.mxu0 0
      %1684 = vmatprep.subr.bf16.mxu0 0
      %1685 = vmatpush1.bf16.xpose.msra.mxu0 0
      %1686 = vmatprep.subr.bf16.mxu0 0
      %1687 = vmatpush1.bf16.xpose.msra.mxu0 0
      %1688 = vmatprep.subr.bf16.mxu0 0
      %1689 = vmatpush1.bf16.xpose.msra.mxu0 0
      %1690 = vmatprep.subr.bf16.mxu0 0
      %1691 = vmatpush1.bf16.xpose.msra.mxu0 0
      %1692 = vmatprep.mubr.bf16.mxu0 0
      %1693 = vmatmul.mubr.bf16.gmra.mrb[0].mxu0 %v1649
      %v1694 = vpop.f32.mrb[0].mxu0
      %v1695 = vadd.f32 0.0, %v1694
      %v1696 = vpop.f32.mrb[0].mxu0
      %v1697 = vpop.f32.mrb[0].mxu0
      %v1698 = vadd.f32 0.0, %v1697
      %v1699 = vpop.f32.mrb[0].mxu0
      %1700 = vmatprep.mubr.bf16.mxu0 0
      %1701 = vmatmul.mubr.bf16.gmra.mrb[0].mxu0 %v1652
      %v1702 = vpop.f32.mrb[0].mxu0
      %v1703 = vadd.f32 0.0, %v1702
      %v1704 = vpop.f32.mrb[0].mxu0
      %v1705 = vpop.f32.mrb[0].mxu0
      %v1706 = vadd.f32 0.0, %v1705
      %v1707 = vpop.f32.mrb[0].mxu0
      %1708 = vdwg.mxu0
      %v1709 = vmul.f32 %v1695, 0.17677669
      %v1710 = vmul.f32 %v1698, 0.17677669
      %v1711 = vmul.f32 %v1703, 0.17677669
      %v1712 = vmul.f32 %v1706, 0.17677669
      %v1713 = vsel %vm846, %v1709, -1e+30
      %v1714 = vsel %vm847, %v1710, -1e+30
      %v1715 = vsel %vm848, %v1711, -1e+30
      %v1716 = vsel %vm849, %v1712, -1e+30
      %v1717 = vsel %vm872, %v1713, -inf
      %1718 = vmax.xlane.f32.xlu0 %v1717
      %v1719 = vpop.xlane.xlu0 %1718
      %v1720 = vsel %vm872, %v1714, -inf
      %1721 = vmax.xlane.f32.xlu0 %v1720
      %v1722 = vpop.xlane.xlu0 %1721
      %v1723 = vsel %vm872, %v1715, -inf
      %1724 = vmax.xlane.f32.xlu0 %v1723
      %v1725 = vpop.xlane.xlu0 %1724
      %v1726 = vsel %vm872, %v1716, -inf
      %1727 = vmax.xlane.f32.xlu0 %v1726
      %v1728 = vpop.xlane.xlu0 %1727
      %v1729 = vsub.f32 %v1713, %v1719
      %v1730 = vsub.f32 %v1714, %v1722
      %v1731 = vsub.f32 %v1715, %v1725
      %v1732 = vsub.f32 %v1716, %v1728
      %v1733 = vmul.f32 %v1729, 1.442695
      %v1734 = vpow.pop %v1733
      %v1735 = vmul.f32 %v1730, 1.442695
      %v1736 = vpow.pop %v1735
      %v1737 = vmul.f32 %v1731, 1.442695
      %v1738 = vpow.pop %v1737
      %v1739 = vmul.f32 %v1732, 1.442695
      %v1740 = vpow.pop %v1739
      %v1741 = vsel %vm872, %v1734, 0.0
      %1742 = vadd.xlane.f32.xlu0 %v1741
      %v1743 = vpop.xlane.xlu0 %1742
      %v1744 = vsel %vm872, %v1736, 0.0
      %1745 = vadd.xlane.f32.xlu0 %v1744
      %v1746 = vpop.xlane.xlu0 %1745
      %v1747 = vsel %vm872, %v1738, 0.0
      %1748 = vadd.xlane.f32.xlu0 %v1747
      %v1749 = vpop.xlane.xlu0 %1748
      %v1750 = vsel %vm872, %v1740, 0.0
      %1751 = vadd.xlane.f32.xlu0 %v1750
      %v1752 = vpop.xlane.xlu0 %1751
      %v1753 = vrcp.pop %v1743
      %v1754 = vrcp.pop %v1746
      %v1755 = vrcp.pop %v1749
      %v1756 = vrcp.pop %v1752
      %v1757 = vmul.f32 %v1734, %v1753
      %v1758 = vmul.f32 %v1736, %v1754
      %v1759 = vmul.f32 %v1738, %v1755
      %v1760 = vmul.f32 %v1740, %v1756
      %v1761 = vpack.c.bf16 %v1758, %v1757
      %v1762 = vpack.c.bf16 %v1760, %v1759
      %1763 = vrot.lane.b32.xlu0 %v870, 32
      %v1764 = vpop.permute.xlu0 %1763
      %1765 = vrot.lane.b32.xlu0 %v871, 32
      %v1766 = vpop.permute.xlu0 %1765
      %v1770 = vsel %vm872, %v1761, 0
      %v1773 = vsel %vm872, %v1762, 0
      %1775 = vmatprep.subr.bf16.mxu0 0
      %1776 = vmatpush1.bf16.msra.mxu0 %v1764
      %1777 = vmatprep.subr.bf16.mxu0 0
      %1778 = vmatpush1.bf16.msra.mxu0 %v1766
      %1779 = vmatprep.subr.bf16.mxu0 0
      %1780 = vmatpush1.bf16.msra.mxu0 0
      %1781 = vmatprep.subr.bf16.mxu0 0
      %1782 = vmatpush1.bf16.msra.mxu0 0
      %1783 = vmatprep.subr.bf16.mxu0 0
      %1784 = vmatpush1.bf16.msra.mxu0 0
      %1785 = vmatprep.subr.bf16.mxu0 0
      %1786 = vmatpush1.bf16.msra.mxu0 0
      %1787 = vmatprep.subr.bf16.mxu0 0
      %1788 = vmatpush1.bf16.msra.mxu0 0
      %1789 = vmatprep.subr.bf16.mxu0 0
      %1790 = vmatpush1.bf16.msra.mxu0 0
      %1791 = vmatprep.subr.bf16.mxu0 0
      %1792 = vmatpush1.bf16.msra.mxu0 0
      %1793 = vmatprep.subr.bf16.mxu0 0
      %1794 = vmatpush1.bf16.msra.mxu0 0
      %1795 = vmatprep.subr.bf16.mxu0 0
      %1796 = vmatpush1.bf16.msra.mxu0 0
      %1797 = vmatprep.subr.bf16.mxu0 0
      %1798 = vmatpush1.bf16.msra.mxu0 0
      %1799 = vmatprep.subr.bf16.mxu0 0
      %1800 = vmatpush1.bf16.msra.mxu0 0
      %1801 = vmatprep.subr.bf16.mxu0 0
      %1802 = vmatpush1.bf16.msra.mxu0 0
      %1803 = vmatprep.subr.bf16.mxu0 0
      %1804 = vmatpush1.bf16.msra.mxu0 0
      %1805 = vmatprep.subr.bf16.mxu0 0
      %1806 = vmatpush1.bf16.msra.mxu0 0
      %1807 = vmatprep.mubr.bf16.mxu0 0
      %1808 = vmatmul.mubr.bf16.gmra.mrb[0].mxu0 %v1770
      %v1809 = vpop.f32.mrb[0].mxu0
      %v1810 = vadd.f32 0.0, %v1809
      %v1811 = vpop.f32.mrb[0].mxu0
      %v1812 = vpop.f32.mrb[0].mxu0
      %v1813 = vadd.f32 0.0, %v1812
      %v1814 = vpop.f32.mrb[0].mxu0
      %1815 = vmatprep.mubr.bf16.mxu0 0
      %1816 = vmatmul.mubr.bf16.gmra.mrb[0].mxu0 %v1773
      %v1817 = vpop.f32.mrb[0].mxu0
      %v1818 = vadd.f32 0.0, %v1817
      %v1819 = vpop.f32.mrb[0].mxu0
      %v1820 = vpop.f32.mrb[0].mxu0
      %v1821 = vadd.f32 0.0, %v1820
      %v1822 = vpop.f32.mrb[0].mxu0
      %1823 = vdwg.mxu0
      %v1824 = vpack.c.bf16 %v1813, %v1810
      %v1825 = vpack.c.bf16 %v1821, %v1818
      %v1826 = vld [vmem:[#allocation21 + $0x30] sm:$0xf]
      %v1827 = vld [vmem:[#allocation21 + $0x34] sm:$0xf]
      %v1828 = vld [vmem:[#allocation21 + $0x38] sm:$0xf]
      %v1829 = vld [vmem:[#allocation21 + $0x3c] sm:$0xf]
      %v1834 = vunpack.c.l.b16 %v1826
      %v1835 = vunpack.c.l.b16 %v1827
      %v1836 = vunpack.c.l.b16 %v1828
      %v1837 = vunpack.c.l.b16 %v1829
      %v1838 = vpack.c.b16 %v1835, %v1834
      %v1839 = vpack.c.b16 %v1837, %v1836
      %v1843 = vsel %vm872, %v1824, 0
      %v1846 = vsel %vm872, %v1825, 0
      %1848 = vmatprep.subr.bf16.mxu0 0
      %1849 = vmatpush1.bf16.msra.mxu0 %v1838
      %1850 = vmatprep.subr.bf16.mxu0 0
      %1851 = vmatpush1.bf16.msra.mxu0 %v1839
      %1852 = vmatprep.subr.bf16.mxu0 0
      %1853 = vmatpush1.bf16.msra.mxu0 0
      %1854 = vmatprep.subr.bf16.mxu0 0
      %1855 = vmatpush1.bf16.msra.mxu0 0
      %1856 = vmatprep.subr.bf16.mxu0 0
      %1857 = vmatpush1.bf16.msra.mxu0 0
      %1858 = vmatprep.subr.bf16.mxu0 0
      %1859 = vmatpush1.bf16.msra.mxu0 0
      %1860 = vmatprep.subr.bf16.mxu0 0
      %1861 = vmatpush1.bf16.msra.mxu0 0
      %1862 = vmatprep.subr.bf16.mxu0 0
      %1863 = vmatpush1.bf16.msra.mxu0 0
      %1864 = vmatprep.subr.bf16.mxu0 0
      %1865 = vmatpush1.bf16.msra.mxu0 0
      %1866 = vmatprep.subr.bf16.mxu0 0
      %1867 = vmatpush1.bf16.msra.mxu0 0
      %1868 = vmatprep.subr.bf16.mxu0 0
      %1869 = vmatpush1.bf16.msra.mxu0 0
      %1870 = vmatprep.subr.bf16.mxu0 0
      %1871 = vmatpush1.bf16.msra.mxu0 0
      %1872 = vmatprep.subr.bf16.mxu0 0
      %1873 = vmatpush1.bf16.msra.mxu0 0
      %1874 = vmatprep.subr.bf16.mxu0 0
      %1875 = vmatpush1.bf16.msra.mxu0 0
      %1876 = vmatprep.subr.bf16.mxu0 0
      %1877 = vmatpush1.bf16.msra.mxu0 0
      %1878 = vmatprep.subr.bf16.mxu0 0
      %1879 = vmatpush1.bf16.msra.mxu0 0
      %1880 = vmatprep.mubr.bf16.mxu0 0
      %1881 = vmatmul.mubr.bf16.gmra.mrb[0].mxu0 %v1843
      %v1882 = vpop.f32.mrb[0].mxu0
      %v1883 = vadd.f32 0.0, %v1882
      %v1884 = vpop.f32.mrb[0].mxu0
      %v1885 = vpop.f32.mrb[0].mxu0
      %v1886 = vadd.f32 0.0, %v1885
      %v1887 = vpop.f32.mrb[0].mxu0
      %1888 = vmatprep.mubr.bf16.mxu0 0
      %1889 = vmatmul.mubr.bf16.gmra.mrb[0].mxu0 %v1846
      %v1890 = vpop.f32.mrb[0].mxu0
      %v1891 = vadd.f32 0.0, %v1890
      %v1892 = vpop.f32.mrb[0].mxu0
      %v1893 = vpop.f32.mrb[0].mxu0
      %v1894 = vadd.f32 0.0, %v1893
      %v1895 = vpop.f32.mrb[0].mxu0
      %1896 = vdwg.mxu0
      %v1897 = vadd.f32 %v1636, %v1883
      %v1898 = vadd.f32 %v1637, %v1886
      %v1899 = vadd.f32 %v1638, %v1891
      %v1900 = vadd.f32 %v1639, %v1894
      %s1901 = scalar_lea.vmem [#allocation5], %s857
      %v1902 = vld [vmem:[%s1901] sm:$0xff]
      %v1903 = vld [vmem:[%s1901 + $0x8] sm:$0xff]
      %v1904 = vld [vmem:[%s1901 + $0x10] sm:$0xff]
      %v1905 = vld [vmem:[%s1901 + $0x18] sm:$0xff]
      %v1906 = vadd.f32 %v1902, %v1897
      %v1907 = vadd.f32 %v1903, %v1898
      %v1908 = vadd.f32 %v1904, %v1899
      %v1909 = vadd.f32 %v1905, %v1900
      %v1911 = vlaneseq
      %v1912 = vshrl.u32 %v1911, 7
      %v1913 = vsub.s32 0, %v1912
      %v1914 = vrot.slane %v850, %v1913
      %v1916 = vadd.f32 %v1906, %v1914
      %v1917 = vadd.f32 %v1907, %v1914
      %v1918 = vadd.f32 %v1908, %v1914
      %v1919 = vadd.f32 %v1909, %v1914
      %1920 = vst [vmem:[%s1901] sm:$0xff] %v1916
      %1921 = vst [vmem:[%s1901 + $0x8] sm:$0xff] %v1917
      %1922 = vst [vmem:[%s1901 + $0x10] sm:$0xff] %v1918
      %1923 = vst [vmem:[%s1901 + $0x18] sm:$0xff] %v1919
    $region142: #{tpu_custom_call.1} parent=1 // loop_footer
      %s856 = sadd.s32 1, %s852
    $region143: #{tpu_custom_call.1} parent=1 // loop_footer_branch
      %851 = sbr.rel target = $region139
    $region144: #{tpu_custom_call.1} parent=1 // loop_exit
      _
    %v1924 = vld [vmem:[#allocation5] sm:$0xff]
    %v1925 = vld [vmem:[#allocation5 + $0x8] sm:$0xff]
    %v1926 = vld [vmem:[#allocation5 + $0x10] sm:$0xff]
    %v1927 = vld [vmem:[#allocation5 + $0x18] sm:$0xff]
    %v1928 = vld [vmem:[#allocation5 + $0x20] sm:$0xff]
    %v1929 = vld [vmem:[#allocation5 + $0x28] sm:$0xff]
    %v1930 = vld [vmem:[#allocation5 + $0x30] sm:$0xff]
    %v1931 = vld [vmem:[#allocation5 + $0x38] sm:$0xff]
    %v1932 = vld [vmem:[#allocation24] sm:$0x1]
    %v1933 = vld [vmem:[#allocation26] sm:$0x1]
    %1934 = vadd.xlane.f32.xlu0 %v1924
    %v1935 = vpop.xlane.xlu0 %1934
    %1936 = vadd.xlane.f32.xlu0 %v1925
    %v1937 = vpop.xlane.xlu0 %1936
    %1938 = vadd.xlane.f32.xlu0 %v1926
    %v1939 = vpop.xlane.xlu0 %1938
    %1940 = vadd.xlane.f32.xlu0 %v1927
    %v1941 = vpop.xlane.xlu0 %1940
    %1942 = vadd.xlane.f32.xlu0 %v1928
    %v1943 = vpop.xlane.xlu0 %1942
    %1944 = vadd.xlane.f32.xlu0 %v1929
    %v1945 = vpop.xlane.xlu0 %1944
    %1946 = vadd.xlane.f32.xlu0 %v1930
    %v1947 = vpop.xlane.xlu0 %1946
    %1948 = vadd.xlane.f32.xlu0 %v1931
    %v1949 = vpop.xlane.xlu0 %1948
    %v1950 = vmul.f32 %v1935, %v302
    %v1951 = vmul.f32 %v1937, %v302
    %v1952 = vmul.f32 %v1939, %v302
    %v1953 = vmul.f32 %v1941, %v302
    %v1954 = vmul.f32 %v1943, %v302
    %v1955 = vmul.f32 %v1945, %v302
    %v1956 = vmul.f32 %v1947, %v302
    %v1957 = vmul.f32 %v1949, %v302
    %v1958 = vsub.f32 %v1924, %v1950
    %v1959 = vsub.f32 %v1925, %v1951
    %v1960 = vsub.f32 %v1926, %v1952
    %v1961 = vsub.f32 %v1927, %v1953
    %v1962 = vsub.f32 %v1928, %v1954
    %v1963 = vsub.f32 %v1929, %v1955
    %v1964 = vsub.f32 %v1930, %v1956
    %v1965 = vsub.f32 %v1931, %v1957
    %v1966 = vmul.f32 %v1958, %v1958
    %v1967 = vmul.f32 %v1959, %v1959
    %v1968 = vmul.f32 %v1960, %v1960
    %v1969 = vmul.f32 %v1961, %v1961
    %v1970 = vmul.f32 %v1962, %v1962
    %v1971 = vmul.f32 %v1963, %v1963
    %v1972 = vmul.f32 %v1964, %v1964
    %v1973 = vmul.f32 %v1965, %v1965
    %1974 = vadd.xlane.f32.xlu0 %v1966
    %v1975 = vpop.xlane.xlu0 %1974
    %1976 = vadd.xlane.f32.xlu0 %v1967
    %v1977 = vpop.xlane.xlu0 %1976
    %1978 = vadd.xlane.f32.xlu0 %v1968
    %v1979 = vpop.xlane.xlu0 %1978
    %1980 = vadd.xlane.f32.xlu0 %v1969
    %v1981 = vpop.xlane.xlu0 %1980
    %1982 = vadd.xlane.f32.xlu0 %v1970
    %v1983 = vpop.xlane.xlu0 %1982
    %1984 = vadd.xlane.f32.xlu0 %v1971
    %v1985 = vpop.xlane.xlu0 %1984
    %1986 = vadd.xlane.f32.xlu0 %v1972
    %v1987 = vpop.xlane.xlu0 %1986
    %1988 = vadd.xlane.f32.xlu0 %v1973
    %v1989 = vpop.xlane.xlu0 %1988
    %v1990 = vmul.f32 %v1975, %v302
    %v1991 = vmul.f32 %v1977, %v302
    %v1992 = vmul.f32 %v1979, %v302
    %v1993 = vmul.f32 %v1981, %v302
    %v1994 = vmul.f32 %v1983, %v302
    %v1995 = vmul.f32 %v1985, %v302
    %v1996 = vmul.f32 %v1987, %v302
    %v1997 = vmul.f32 %v1989, %v302
    %v1998 = vadd.f32 %v1990, 1e-05
    %v1999 = vadd.f32 %v1991, 1e-05
    %v2000 = vadd.f32 %v1992, 1e-05
    %v2001 = vadd.f32 %v1993, 1e-05
    %v2002 = vadd.f32 %v1994, 1e-05
    %v2003 = vadd.f32 %v1995, 1e-05
    %v2004 = vadd.f32 %v1996, 1e-05
    %v2005 = vadd.f32 %v1997, 1e-05
    %v2006 = vrsqrt.pop %v1998
    %v2007 = vrsqrt.pop %v1999
    %v2008 = vrsqrt.pop %v2000
    %v2009 = vrsqrt.pop %v2001
    %v2010 = vrsqrt.pop %v2002
    %v2011 = vrsqrt.pop %v2003
    %v2012 = vrsqrt.pop %v2004
    %v2013 = vrsqrt.pop %v2005
    %v2014 = vmul.f32 %v1958, %v2006
    %v2015 = vmul.f32 %v1959, %v2007
    %v2016 = vmul.f32 %v1960, %v2008
    %v2017 = vmul.f32 %v1961, %v2009
    %v2018 = vmul.f32 %v1962, %v2010
    %v2019 = vmul.f32 %v1963, %v2011
    %v2020 = vmul.f32 %v1964, %v2012
    %v2021 = vmul.f32 %v1965, %v2013
    %v2023 = vlaneseq
    %v2024 = vshrl.u32 %v2023, 7
    %v2025 = vsub.s32 0, %v2024
    %v2026 = vrot.slane %v1932, %v2025
    %v2028 = vmul.f32 %v2014, %v2026
    %v2029 = vmul.f32 %v2015, %v2026
    %v2030 = vmul.f32 %v2016, %v2026
    %v2031 = vmul.f32 %v2017, %v2026
    %v2032 = vmul.f32 %v2018, %v2026
    %v2033 = vmul.f32 %v2019, %v2026
    %v2034 = vmul.f32 %v2020, %v2026
    %v2035 = vmul.f32 %v2021, %v2026
    %v2037 = vlaneseq
    %v2038 = vshrl.u32 %v2037, 7
    %v2039 = vsub.s32 0, %v2038
    %v2040 = vrot.slane %v1933, %v2039
    %v2042 = vadd.f32 %v2028, %v2040
    %v2043 = vadd.f32 %v2029, %v2040
    %v2044 = vadd.f32 %v2030, %v2040
    %v2045 = vadd.f32 %v2031, %v2040
    %v2046 = vadd.f32 %v2032, %v2040
    %v2047 = vadd.f32 %v2033, %v2040
    %v2048 = vadd.f32 %v2034, %v2040
    %v2049 = vadd.f32 %v2035, %v2040
    %v2050 = vpack.c.bf16 %v2043, %v2042
    %v2051 = vpack.c.bf16 %v2045, %v2044
    %v2052 = vpack.c.bf16 %v2047, %v2046
    %v2053 = vpack.c.bf16 %v2049, %v2048
    %v2054 = vld [vmem:[#allocation27] sm:$0xff]
    %v2055 = vld [vmem:[#allocation27 + $0x8] sm:$0xff]
    %v2056 = vld [vmem:[#allocation27 + $0x10] sm:$0xff]
    %v2057 = vld [vmem:[#allocation27 + $0x18] sm:$0xff]
    %v2058 = vld [vmem:[#allocation27 + $0x20] sm:$0xff]
    %v2059 = vld [vmem:[#allocation27 + $0x28] sm:$0xff]
    %v2060 = vld [vmem:[#allocation27 + $0x30] sm:$0xff]
    %v2061 = vld [vmem:[#allocation27 + $0x38] sm:$0xff]
    %v2062 = vld [vmem:[#allocation27 + $0x40] sm:$0xff]
    %v2063 = vld [vmem:[#allocation27 + $0x48] sm:$0xff]
    %v2064 = vld [vmem:[#allocation27 + $0x50] sm:$0xff]
    %v2065 = vld [vmem:[#allocation27 + $0x58] sm:$0xff]
    %v2066 = vld [vmem:[#allocation27 + $0x60] sm:$0xff]
    %v2067 = vld [vmem:[#allocation27 + $0x68] sm:$0xff]
    %v2068 = vld [vmem:[#allocation27 + $0x70] sm:$0xff]
    %v2069 = vld [vmem:[#allocation27 + $0x78] sm:$0xff]
    %v2070 = vld [vmem:[#allocation27 + $0x80] sm:$0xff]
    %v2071 = vld [vmem:[#allocation27 + $0x88] sm:$0xff]
    %v2072 = vld [vmem:[#allocation27 + $0x90] sm:$0xff]
    %v2073 = vld [vmem:[#allocation27 + $0x98] sm:$0xff]
    %v2074 = vld [vmem:[#allocation27 + $0xa0] sm:$0xff]
    %v2075 = vld [vmem:[#allocation27 + $0xa8] sm:$0xff]
    %v2076 = vld [vmem:[#allocation27 + $0xb0] sm:$0xff]
    %v2077 = vld [vmem:[#allocation27 + $0xb8] sm:$0xff]
    %v2078 = vld [vmem:[#allocation27 + $0xc0] sm:$0xff]
    %v2079 = vld [vmem:[#allocation27 + $0xc8] sm:$0xff]
    %v2080 = vld [vmem:[#allocation27 + $0xd0] sm:$0xff]
    %v2081 = vld [vmem:[#allocation27 + $0xd8] sm:$0xff]
    %v2082 = vld [vmem:[#allocation27 + $0xe0] sm:$0xff]
    %v2083 = vld [vmem:[#allocation27 + $0xe8] sm:$0xff]
    %v2084 = vld [vmem:[#allocation27 + $0xf0] sm:$0xff]
    %v2085 = vld [vmem:[#allocation27 + $0xf8] sm:$0xff]
    %v2086 = vld [vmem:[#allocation29] sm:$0xf]
    %v2088 = vlaneseq
    %v2089 = vshrl.u32 %v2088, 7
    %v2090 = vsub.s32 0, %v2089
    %v2091 = vrot.slane %v2086, %v2090
    %v2092 = vlaneseq
    %v2093 = vshrl.u32 %v2092, 7
    %v2094 = vsub.s32 1, %v2093
    %v2095 = vrot.slane %v2086, %v2094
    %v2096 = vlaneseq
    %v2097 = vshrl.u32 %v2096, 7
    %v2098 = vsub.s32 2, %v2097
    %v2099 = vrot.slane %v2086, %v2098
    %v2100 = vlaneseq
    %v2101 = vshrl.u32 %v2100, 7
    %v2102 = vsub.s32 3, %v2101
    %v2103 = vrot.slane %v2086, %v2102
    %v2140 = vunpack.c.l.b16 %v2054
    %v2141 = vunpack.c.h.b16 %v2054
    %v2142 = vunpack.c.l.b16 %v2055
    %v2143 = vunpack.c.h.b16 %v2055
    %v2144 = vunpack.c.l.b16 %v2056
    %v2145 = vunpack.c.h.b16 %v2056
    %v2146 = vunpack.c.l.b16 %v2057
    %v2147 = vunpack.c.h.b16 %v2057
    %v2148 = vunpack.c.l.b16 %v2058
    %v2149 = vunpack.c.h.b16 %v2058
    %v2150 = vunpack.c.l.b16 %v2059
    %v2151 = vunpack.c.h.b16 %v2059
    %v2152 = vunpack.c.l.b16 %v2060
    %v2153 = vunpack.c.h.b16 %v2060
    %v2154 = vunpack.c.l.b16 %v2061
    %v2155 = vunpack.c.h.b16 %v2061
    %v2156 = vunpack.c.l.b16 %v2062
    %v2157 = vunpack.c.h.b16 %v2062
    %v2158 = vunpack.c.l.b16 %v2063
    %v2159 = vunpack.c.h.b16 %v2063
    %v2160 = vunpack.c.l.b16 %v2064
    %v2161 = vunpack.c.h.b16 %v2064
    %v2162 = vunpack.c.l.b16 %v2065
    %v2163 = vunpack.c.h.b16 %v2065
    %v2164 = vunpack.c.l.b16 %v2066
    %v2165 = vunpack.c.h.b16 %v2066
    %v2166 = vunpack.c.l.b16 %v2067
    %v2167 = vunpack.c.h.b16 %v2067
    %v2168 = vunpack.c.l.b16 %v2068
    %v2169 = vunpack.c.h.b16 %v2068
    %v2170 = vunpack.c.l.b16 %v2069
    %v2171 = vunpack.c.h.b16 %v2069
    %v2172 = vunpack.c.l.b16 %v2070
    %v2173 = vunpack.c.h.b16 %v2070
    %v2174 = vunpack.c.l.b16 %v2071
    %v2175 = vunpack.c.h.b16 %v2071
    %v2176 = vunpack.c.l.b16 %v2072
    %v2177 = vunpack.c.h.b16 %v2072
    %v2178 = vunpack.c.l.b16 %v2073
    %v2179 = vunpack.c.h.b16 %v2073
    %v2180 = vunpack.c.l.b16 %v2074
    %v2181 = vunpack.c.h.b16 %v2074
    %v2182 = vunpack.c.l.b16 %v2075
    %v2183 = vunpack.c.h.b16 %v2075
    %v2184 = vunpack.c.l.b16 %v2076
    %v2185 = vunpack.c.h.b16 %v2076
    %v2186 = vunpack.c.l.b16 %v2077
    %v2187 = vunpack.c.h.b16 %v2077
    %v2188 = vunpack.c.l.b16 %v2078
    %v2189 = vunpack.c.h.b16 %v2078
    %v2190 = vunpack.c.l.b16 %v2079
    %v2191 = vunpack.c.h.b16 %v2079
    %v2192 = vunpack.c.l.b16 %v2080
    %v2193 = vunpack.c.h.b16 %v2080
    %v2194 = vunpack.c.l.b16 %v2081
    %v2195 = vunpack.c.h.b16 %v2081
    %v2196 = vunpack.c.l.b16 %v2082
    %v2197 = vunpack.c.h.b16 %v2082
    %v2198 = vunpack.c.l.b16 %v2083
    %v2199 = vunpack.c.h.b16 %v2083
    %v2200 = vunpack.c.l.b16 %v2084
    %v2201 = vunpack.c.h.b16 %v2084
    %v2202 = vunpack.c.l.b16 %v2085
    %v2203 = vunpack.c.h.b16 %v2085
    %v2204 = vpack.c.b16 %v2144, %v2140
    %v2205 = vpack.c.b16 %v2145, %v2141
    %v2206 = vpack.c.b16 %v2146, %v2142
    %v2207 = vpack.c.b16 %v2147, %v2143
    %v2208 = vpack.c.b16 %v2152, %v2148
    %v2209 = vpack.c.b16 %v2153, %v2149
    %v2210 = vpack.c.b16 %v2154, %v2150
    %v2211 = vpack.c.b16 %v2155, %v2151
    %v2212 = vpack.c.b16 %v2160, %v2156
    %v2213 = vpack.c.b16 %v2161, %v2157
    %v2214 = vpack.c.b16 %v2162, %v2158
    %v2215 = vpack.c.b16 %v2163, %v2159
    %v2216 = vpack.c.b16 %v2168, %v2164
    %v2217 = vpack.c.b16 %v2169, %v2165
    %v2218 = vpack.c.b16 %v2170, %v2166
    %v2219 = vpack.c.b16 %v2171, %v2167
    %v2220 = vpack.c.b16 %v2176, %v2172
    %v2221 = vpack.c.b16 %v2177, %v2173
    %v2222 = vpack.c.b16 %v2178, %v2174
    %v2223 = vpack.c.b16 %v2179, %v2175
    %v2224 = vpack.c.b16 %v2184, %v2180
    %v2225 = vpack.c.b16 %v2185, %v2181
    %v2226 = vpack.c.b16 %v2186, %v2182
    %v2227 = vpack.c.b16 %v2187, %v2183
    %v2228 = vpack.c.b16 %v2192, %v2188
    %v2229 = vpack.c.b16 %v2193, %v2189
    %v2230 = vpack.c.b16 %v2194, %v2190
    %v2231 = vpack.c.b16 %v2195, %v2191
    %v2232 = vpack.c.b16 %v2200, %v2196
    %v2233 = vpack.c.b16 %v2201, %v2197
    %v2234 = vpack.c.b16 %v2202, %v2198
    %v2235 = vpack.c.b16 %v2203, %v2199
    %2268 = vmatprep.subr.bf16.mxu0 %v2205
    %2269 = vmatpush1.bf16.msra.mxu0 %v2204
    %2270 = vmatprep.subr.bf16.mxu0 %v2209
    %2271 = vmatpush1.bf16.msra.mxu0 %v2208
    %2272 = vmatprep.subr.bf16.mxu0 %v2213
    %2273 = vmatpush1.bf16.msra.mxu0 %v2212
    %2274 = vmatprep.subr.bf16.mxu0 %v2217
    %2275 = vmatpush1.bf16.msra.mxu0 %v2216
    %2276 = vmatprep.subr.bf16.mxu0 %v2221
    %2277 = vmatpush1.bf16.msra.mxu0 %v2220
    %2278 = vmatprep.subr.bf16.mxu0 %v2225
    %2279 = vmatpush1.bf16.msra.mxu0 %v2224
    %2280 = vmatprep.subr.bf16.mxu0 %v2229
    %2281 = vmatpush1.bf16.msra.mxu0 %v2228
    %2282 = vmatprep.subr.bf16.mxu0 %v2233
    %2283 = vmatpush1.bf16.msra.mxu0 %v2232
    %2284 = vmatprep.subr.bf16.mxu0 0
    %2285 = vmatpush1.bf16.msra.mxu0 0
    %2286 = vmatprep.subr.bf16.mxu0 0
    %2287 = vmatpush1.bf16.msra.mxu0 0
    %2288 = vmatprep.subr.bf16.mxu0 0
    %2289 = vmatpush1.bf16.msra.mxu0 0
    %2290 = vmatprep.subr.bf16.mxu0 0
    %2291 = vmatpush1.bf16.msra.mxu0 0
    %2292 = vmatprep.subr.bf16.mxu0 0
    %2293 = vmatpush1.bf16.msra.mxu0 0
    %2294 = vmatprep.subr.bf16.mxu0 0
    %2295 = vmatpush1.bf16.msra.mxu0 0
    %2296 = vmatprep.subr.bf16.mxu0 0
    %2297 = vmatpush1.bf16.msra.mxu0 0
    %2298 = vmatprep.subr.bf16.mxu0 0
    %2299 = vmatpush1.bf16.msra.mxu0 0
    %2300 = vmatprep.mubr.bf16.mxu0 0
    %2301 = vmatmul.mubr.bf16.gmra.mrb[0].mxu0 %v2050
    %v2302 = vpop.f32.mrb[0].mxu0
    %v2303 = vadd.f32 %v2091, %v2302
    %v2304 = vpop.f32.mrb[0].mxu0
    %v2305 = vadd.f32 %v2095, %v2304
    %v2306 = vpop.f32.mrb[0].mxu0
    %v2307 = vadd.f32 %v2091, %v2306
    %v2308 = vpop.f32.mrb[0].mxu0
    %v2309 = vadd.f32 %v2095, %v2308
    %2310 = vmatprep.mubr.bf16.mxu0 0
    %2311 = vmatmul.mubr.bf16.gmra.mrb[0].mxu0 %v2051
    %v2312 = vpop.f32.mrb[0].mxu0
    %v2313 = vadd.f32 %v2091, %v2312
    %v2314 = vpop.f32.mrb[0].mxu0
    %v2315 = vadd.f32 %v2095, %v2314
    %v2316 = vpop.f32.mrb[0].mxu0
    %v2317 = vadd.f32 %v2091, %v2316
    %v2318 = vpop.f32.mrb[0].mxu0
    %v2319 = vadd.f32 %v2095, %v2318
    %2320 = vmatprep.mubr.bf16.mxu0 0
    %2321 = vmatmul.mubr.bf16.gmra.mrb[0].mxu0 %v2052
    %v2322 = vpop.f32.mrb[0].mxu0
    %v2323 = vadd.f32 %v2091, %v2322
    %v2324 = vpop.f32.mrb[0].mxu0
    %v2325 = vadd.f32 %v2095, %v2324
    %v2326 = vpop.f32.mrb[0].mxu0
    %v2327 = vadd.f32 %v2091, %v2326
    %v2328 = vpop.f32.mrb[0].mxu0
    %v2329 = vadd.f32 %v2095, %v2328
    %2330 = vmatprep.mubr.bf16.mxu0 0
    %2331 = vmatmul.mubr.bf16.gmra.mrb[0].mxu0 %v2053
    %v2332 = vpop.f32.mrb[0].mxu0
    %v2333 = vadd.f32 %v2091, %v2332
    %v2334 = vpop.f32.mrb[0].mxu0
    %v2335 = vadd.f32 %v2095, %v2334
    %v2336 = vpop.f32.mrb[0].mxu0
    %v2337 = vadd.f32 %v2091, %v2336
    %v2338 = vpop.f32.mrb[0].mxu0
    %v2339 = vadd.f32 %v2095, %v2338
    %2340 = vdwg.mxu0
    %2341 = vmatprep.subr.bf16.mxu0 %v2207
    %2342 = vmatpush1.bf16.msra.mxu0 %v2206
    %2343 = vmatprep.subr.bf16.mxu0 %v2211
    %2344 = vmatpush1.bf16.msra.mxu0 %v2210
    %2345 = vmatprep.subr.bf16.mxu0 %v2215
    %2346 = vmatpush1.bf16.msra.mxu0 %v2214
    %2347 = vmatprep.subr.bf16.mxu0 %v2219
    %2348 = vmatpush1.bf16.msra.mxu0 %v2218
    %2349 = vmatprep.subr.bf16.mxu0 %v2223
    %2350 = vmatpush1.bf16.msra.mxu0 %v2222
    %2351 = vmatprep.subr.bf16.mxu0 %v2227
    %2352 = vmatpush1.bf16.msra.mxu0 %v2226
    %2353 = vmatprep.subr.bf16.mxu0 %v2231
    %2354 = vmatpush1.bf16.msra.mxu0 %v2230
    %2355 = vmatprep.subr.bf16.mxu0 %v2235
    %2356 = vmatpush1.bf16.msra.mxu0 %v2234
    %2357 = vmatprep.subr.bf16.mxu0 0
    %2358 = vmatpush1.bf16.msra.mxu0 0
    %2359 = vmatprep.subr.bf16.mxu0 0
    %2360 = vmatpush1.bf16.msra.mxu0 0
    %2361 = vmatprep.subr.bf16.mxu0 0
    %2362 = vmatpush1.bf16.msra.mxu0 0
    %2363 = vmatprep.subr.bf16.mxu0 0
    %2364 = vmatpush1.bf16.msra.mxu0 0
    %2365 = vmatprep.subr.bf16.mxu0 0
    %2366 = vmatpush1.bf16.msra.mxu0 0
    %2367 = vmatprep.subr.bf16.mxu0 0
    %2368 = vmatpush1.bf16.msra.mxu0 0
    %2369 = vmatprep.subr.bf16.mxu0 0
    %2370 = vmatpush1.bf16.msra.mxu0 0
    %2371 = vmatprep.subr.bf16.mxu0 0
    %2372 = vmatpush1.bf16.msra.mxu0 0
    %2373 = vmatprep.mubr.bf16.mxu0 0
    %2374 = vmatmul.mubr.bf16.gmra.mrb[0].mxu0 %v2050
    %v2375 = vpop.f32.mrb[0].mxu0
    %v2376 = vadd.f32 %v2099, %v2375
    %v2377 = vpop.f32.mrb[0].mxu0
    %v2378 = vadd.f32 %v2103, %v2377
    %v2379 = vpop.f32.mrb[0].mxu0
    %v2380 = vadd.f32 %v2099, %v2379
    %v2381 = vpop.f32.mrb[0].mxu0
    %v2382 = vadd.f32 %v2103, %v2381
    %2383 = vmatprep.mubr.bf16.mxu0 0
    %2384 = vmatmul.mubr.bf16.gmra.mrb[0].mxu0 %v2051
    %v2385 = vpop.f32.mrb[0].mxu0
    %v2386 = vadd.f32 %v2099, %v2385
    %v2387 = vpop.f32.mrb[0].mxu0
    %v2388 = vadd.f32 %v2103, %v2387
    %v2389 = vpop.f32.mrb[0].mxu0
    %v2390 = vadd.f32 %v2099, %v2389
    %v2391 = vpop.f32.mrb[0].mxu0
    %v2392 = vadd.f32 %v2103, %v2391
    %2393 = vmatprep.mubr.bf16.mxu0 0
    %2394 = vmatmul.mubr.bf16.gmra.mrb[0].mxu0 %v2052
    %v2395 = vpop.f32.mrb[0].mxu0
    %v2396 = vadd.f32 %v2099, %v2395
    %v2397 = vpop.f32.mrb[0].mxu0
    %v2398 = vadd.f32 %v2103, %v2397
    %v2399 = vpop.f32.mrb[0].mxu0
    %v2400 = vadd.f32 %v2099, %v2399
    %v2401 = vpop.f32.mrb[0].mxu0
    %v2402 = vadd.f32 %v2103, %v2401
    %2403 = vmatprep.mubr.bf16.mxu0 0
    %2404 = vmatmul.mubr.bf16.gmra.mrb[0].mxu0 %v2053
    %v2405 = vpop.f32.mrb[0].mxu0
    %v2406 = vadd.f32 %v2099, %v2405
    %v2407 = vpop.f32.mrb[0].mxu0
    %v2408 = vadd.f32 %v2103, %v2407
    %v2409 = vpop.f32.mrb[0].mxu0
    %v2410 = vadd.f32 %v2099, %v2409
    %v2411 = vpop.f32.mrb[0].mxu0
    %v2412 = vadd.f32 %v2103, %v2411
    %2413 = vdwg.mxu0
    %v2414 = vmul.f32 %v2303, %v2303
    %v2415 = vmul.f32 %v2305, %v2305
    %v2416 = vmul.f32 %v2376, %v2376
    %v2417 = vmul.f32 %v2378, %v2378
    %v2418 = vmul.f32 %v2307, %v2307
    %v2419 = vmul.f32 %v2309, %v2309
    %v2420 = vmul.f32 %v2380, %v2380
    %v2421 = vmul.f32 %v2382, %v2382
    %v2422 = vmul.f32 %v2313, %v2313
    %v2423 = vmul.f32 %v2315, %v2315
    %v2424 = vmul.f32 %v2386, %v2386
    %v2425 = vmul.f32 %v2388, %v2388
    %v2426 = vmul.f32 %v2317, %v2317
    %v2427 = vmul.f32 %v2319, %v2319
    %v2428 = vmul.f32 %v2390, %v2390
    %v2429 = vmul.f32 %v2392, %v2392
    %v2430 = vmul.f32 %v2323, %v2323
    %v2431 = vmul.f32 %v2325, %v2325
    %v2432 = vmul.f32 %v2396, %v2396
    %v2433 = vmul.f32 %v2398, %v2398
    %v2434 = vmul.f32 %v2327, %v2327
    %v2435 = vmul.f32 %v2329, %v2329
    %v2436 = vmul.f32 %v2400, %v2400
    %v2437 = vmul.f32 %v2402, %v2402
    %v2438 = vmul.f32 %v2333, %v2333
    %v2439 = vmul.f32 %v2335, %v2335
    %v2440 = vmul.f32 %v2406, %v2406
    %v2441 = vmul.f32 %v2408, %v2408
    %v2442 = vmul.f32 %v2337, %v2337
    %v2443 = vmul.f32 %v2339, %v2339
    %v2444 = vmul.f32 %v2410, %v2410
    %v2445 = vmul.f32 %v2412, %v2412
    %v2446 = vmul.f32 %v2303, %v2414
    %v2447 = vmul.f32 %v2305, %v2415
    %v2448 = vmul.f32 %v2376, %v2416
    %v2449 = vmul.f32 %v2378, %v2417
    %v2450 = vmul.f32 %v2307, %v2418
    %v2451 = vmul.f32 %v2309, %v2419
    %v2452 = vmul.f32 %v2380, %v2420
    %v2453 = vmul.f32 %v2382, %v2421
    %v2454 = vmul.f32 %v2313, %v2422
    %v2455 = vmul.f32 %v2315, %v2423
    %v2456 = vmul.f32 %v2386, %v2424
    %v2457 = vmul.f32 %v2388, %v2425
    %v2458 = vmul.f32 %v2317, %v2426
    %v2459 = vmul.f32 %v2319, %v2427
    %v2460 = vmul.f32 %v2390, %v2428
    %v2461 = vmul.f32 %v2392, %v2429
    %v2462 = vmul.f32 %v2323, %v2430
    %v2463 = vmul.f32 %v2325, %v2431
    %v2464 = vmul.f32 %v2396, %v2432
    %v2465 = vmul.f32 %v2398, %v2433
    %v2466 = vmul.f32 %v2327, %v2434
    %v2467 = vmul.f32 %v2329, %v2435
    %v2468 = vmul.f32 %v2400, %v2436
    %v2469 = vmul.f32 %v2402, %v2437
    %v2470 = vmul.f32 %v2333, %v2438
    %v2471 = vmul.f32 %v2335, %v2439
    %v2472 = vmul.f32 %v2406, %v2440
    %v2473 = vmul.f32 %v2408, %v2441
    %v2474 = vmul.f32 %v2337, %v2442
    %v2475 = vmul.f32 %v2339, %v2443
    %v2476 = vmul.f32 %v2410, %v2444
    %v2477 = vmul.f32 %v2412, %v2445
    %v2478 = vmul.f32 %v2446, 0.044715
    %v2479 = vmul.f32 %v2447, 0.044715
    %v2480 = vmul.f32 %v2448, 0.044715
    %v2481 = vmul.f32 %v2449, 0.044715
    %v2482 = vmul.f32 %v2450, 0.044715
    %v2483 = vmul.f32 %v2451, 0.044715
    %v2484 = vmul.f32 %v2452, 0.044715
    %v2485 = vmul.f32 %v2453, 0.044715
    %v2486 = vmul.f32 %v2454, 0.044715
    %v2487 = vmul.f32 %v2455, 0.044715
    %v2488 = vmul.f32 %v2456, 0.044715
    %v2489 = vmul.f32 %v2457, 0.044715
    %v2490 = vmul.f32 %v2458, 0.044715
    %v2491 = vmul.f32 %v2459, 0.044715
    %v2492 = vmul.f32 %v2460, 0.044715
    %v2493 = vmul.f32 %v2461, 0.044715
    %v2494 = vmul.f32 %v2462, 0.044715
    %v2495 = vmul.f32 %v2463, 0.044715
    %v2496 = vmul.f32 %v2464, 0.044715
    %v2497 = vmul.f32 %v2465, 0.044715
    %v2498 = vmul.f32 %v2466, 0.044715
    %v2499 = vmul.f32 %v2467, 0.044715
    %v2500 = vmul.f32 %v2468, 0.044715
    %v2501 = vmul.f32 %v2469, 0.044715
    %v2502 = vmul.f32 %v2470, 0.044715
    %v2503 = vmul.f32 %v2471, 0.044715
    %v2504 = vmul.f32 %v2472, 0.044715
    %v2505 = vmul.f32 %v2473, 0.044715
    %v2506 = vmul.f32 %v2474, 0.044715
    %v2507 = vmul.f32 %v2475, 0.044715
    %v2508 = vmul.f32 %v2476, 0.044715
    %v2509 = vmul.f32 %v2477, 0.044715
    %v2510 = vadd.f32 %v2303, %v2478
    %v2511 = vadd.f32 %v2305, %v2479
    %v2512 = vadd.f32 %v2376, %v2480
    %v2513 = vadd.f32 %v2378, %v2481
    %v2514 = vadd.f32 %v2307, %v2482
    %v2515 = vadd.f32 %v2309, %v2483
    %v2516 = vadd.f32 %v2380, %v2484
    %v2517 = vadd.f32 %v2382, %v2485
    %v2518 = vadd.f32 %v2313, %v2486
    %v2519 = vadd.f32 %v2315, %v2487
    %v2520 = vadd.f32 %v2386, %v2488
    %v2521 = vadd.f32 %v2388, %v2489
    %v2522 = vadd.f32 %v2317, %v2490
    %v2523 = vadd.f32 %v2319, %v2491
    %v2524 = vadd.f32 %v2390, %v2492
    %v2525 = vadd.f32 %v2392, %v2493
    %v2526 = vadd.f32 %v2323, %v2494
    %v2527 = vadd.f32 %v2325, %v2495
    %v2528 = vadd.f32 %v2396, %v2496
    %v2529 = vadd.f32 %v2398, %v2497
    %v2530 = vadd.f32 %v2327, %v2498
    %v2531 = vadd.f32 %v2329, %v2499
    %v2532 = vadd.f32 %v2400, %v2500
    %v2533 = vadd.f32 %v2402, %v2501
    %v2534 = vadd.f32 %v2333, %v2502
    %v2535 = vadd.f32 %v2335, %v2503
    %v2536 = vadd.f32 %v2406, %v2504
    %v2537 = vadd.f32 %v2408, %v2505
    %v2538 = vadd.f32 %v2337, %v2506
    %v2539 = vadd.f32 %v2339, %v2507
    %v2540 = vadd.f32 %v2410, %v2508
    %v2541 = vadd.f32 %v2412, %v2509
    %v2542 = vmul.f32 %v2510, 0.7978846
    %v2543 = vmul.f32 %v2511, 0.7978846
    %v2544 = vmul.f32 %v2512, 0.7978846
    %v2545 = vmul.f32 %v2513, 0.7978846
    %v2546 = vmul.f32 %v2514, 0.7978846
    %v2547 = vmul.f32 %v2515, 0.7978846
    %v2548 = vmul.f32 %v2516, 0.7978846
    %v2549 = vmul.f32 %v2517, 0.7978846
    %v2550 = vmul.f32 %v2518, 0.7978846
    %v2551 = vmul.f32 %v2519, 0.7978846
    %v2552 = vmul.f32 %v2520, 0.7978846
    %v2553 = vmul.f32 %v2521, 0.7978846
    %v2554 = vmul.f32 %v2522, 0.7978846
    %v2555 = vmul.f32 %v2523, 0.7978846
    %v2556 = vmul.f32 %v2524, 0.7978846
    %v2557 = vmul.f32 %v2525, 0.7978846
    %v2558 = vmul.f32 %v2526, 0.7978846
    %v2559 = vmul.f32 %v2527, 0.7978846
    %v2560 = vmul.f32 %v2528, 0.7978846
    %v2561 = vmul.f32 %v2529, 0.7978846
    %v2562 = vmul.f32 %v2530, 0.7978846
    %v2563 = vmul.f32 %v2531, 0.7978846
    %v2564 = vmul.f32 %v2532, 0.7978846
    %v2565 = vmul.f32 %v2533, 0.7978846
    %v2566 = vmul.f32 %v2534, 0.7978846
    %v2567 = vmul.f32 %v2535, 0.7978846
    %v2568 = vmul.f32 %v2536, 0.7978846
    %v2569 = vmul.f32 %v2537, 0.7978846
    %v2570 = vmul.f32 %v2538, 0.7978846
    %v2571 = vmul.f32 %v2539, 0.7978846
    %v2572 = vmul.f32 %v2540, 0.7978846
    %v2573 = vmul.f32 %v2541, 0.7978846
    %v2574 = vtanh.pop %v2542
    %v2575 = vtanh.pop %v2543
    %v2576 = vtanh.pop %v2544
    %v2577 = vtanh.pop %v2545
    %v2578 = vtanh.pop %v2546
    %v2579 = vtanh.pop %v2547
    %v2580 = vtanh.pop %v2548
    %v2581 = vtanh.pop %v2549
    %v2582 = vtanh.pop %v2550
    %v2583 = vtanh.pop %v2551
    %v2584 = vtanh.pop %v2552
    %v2585 = vtanh.pop %v2553
    %v2586 = vtanh.pop %v2554
    %v2587 = vtanh.pop %v2555
    %v2588 = vtanh.pop %v2556
    %v2589 = vtanh.pop %v2557
    %v2590 = vtanh.pop %v2558
    %v2591 = vtanh.pop %v2559
    %v2592 = vtanh.pop %v2560
    %v2593 = vtanh.pop %v2561
    %v2594 = vtanh.pop %v2562
    %v2595 = vtanh.pop %v2563
    %v2596 = vtanh.pop %v2564
    %v2597 = vtanh.pop %v2565
    %v2598 = vtanh.pop %v2566
    %v2599 = vtanh.pop %v2567
    %v2600 = vtanh.pop %v2568
    %v2601 = vtanh.pop %v2569
    %v2602 = vtanh.pop %v2570
    %v2603 = vtanh.pop %v2571
    %v2604 = vtanh.pop %v2572
    %v2605 = vtanh.pop %v2573
    %v2606 = vadd.f32 %v2574, 1.0
    %v2607 = vadd.f32 %v2575, 1.0
    %v2608 = vadd.f32 %v2576, 1.0
    %v2609 = vadd.f32 %v2577, 1.0
    %v2610 = vadd.f32 %v2578, 1.0
    %v2611 = vadd.f32 %v2579, 1.0
    %v2612 = vadd.f32 %v2580, 1.0
    %v2613 = vadd.f32 %v2581, 1.0
    %v2614 = vadd.f32 %v2582, 1.0
    %v2615 = vadd.f32 %v2583, 1.0
    %v2616 = vadd.f32 %v2584, 1.0
    %v2617 = vadd.f32 %v2585, 1.0
    %v2618 = vadd.f32 %v2586, 1.0
    %v2619 = vadd.f32 %v2587, 1.0
    %v2620 = vadd.f32 %v2588, 1.0
    %v2621 = vadd.f32 %v2589, 1.0
    %v2622 = vadd.f32 %v2590, 1.0
    %v2623 = vadd.f32 %v2591, 1.0
    %v2624 = vadd.f32 %v2592, 1.0
    %v2625 = vadd.f32 %v2593, 1.0
    %v2626 = vadd.f32 %v2594, 1.0
    %v2627 = vadd.f32 %v2595, 1.0
    %v2628 = vadd.f32 %v2596, 1.0
    %v2629 = vadd.f32 %v2597, 1.0
    %v2630 = vadd.f32 %v2598, 1.0
    %v2631 = vadd.f32 %v2599, 1.0
    %v2632 = vadd.f32 %v2600, 1.0
    %v2633 = vadd.f32 %v2601, 1.0
    %v2634 = vadd.f32 %v2602, 1.0
    %v2635 = vadd.f32 %v2603, 1.0
    %v2636 = vadd.f32 %v2604, 1.0
    %v2637 = vadd.f32 %v2605, 1.0
    %v2638 = vmul.f32 %v2606, 0.5
    %v2639 = vmul.f32 %v2607, 0.5
    %v2640 = vmul.f32 %v2608, 0.5
    %v2641 = vmul.f32 %v2609, 0.5
    %v2642 = vmul.f32 %v2610, 0.5
    %v2643 = vmul.f32 %v2611, 0.5
    %v2644 = vmul.f32 %v2612, 0.5
    %v2645 = vmul.f32 %v2613, 0.5
    %v2646 = vmul.f32 %v2614, 0.5
    %v2647 = vmul.f32 %v2615, 0.5
    %v2648 = vmul.f32 %v2616, 0.5
    %v2649 = vmul.f32 %v2617, 0.5
    %v2650 = vmul.f32 %v2618, 0.5
    %v2651 = vmul.f32 %v2619, 0.5
    %v2652 = vmul.f32 %v2620, 0.5
    %v2653 = vmul.f32 %v2621, 0.5
    %v2654 = vmul.f32 %v2622, 0.5
    %v2655 = vmul.f32 %v2623, 0.5
    %v2656 = vmul.f32 %v2624, 0.5
    %v2657 = vmul.f32 %v2625, 0.5
    %v2658 = vmul.f32 %v2626, 0.5
    %v2659 = vmul.f32 %v2627, 0.5
    %v2660 = vmul.f32 %v2628, 0.5
    %v2661 = vmul.f32 %v2629, 0.5
    %v2662 = vmul.f32 %v2630, 0.5
    %v2663 = vmul.f32 %v2631, 0.5
    %v2664 = vmul.f32 %v2632, 0.5
    %v2665 = vmul.f32 %v2633, 0.5
    %v2666 = vmul.f32 %v2634, 0.5
    %v2667 = vmul.f32 %v2635, 0.5
    %v2668 = vmul.f32 %v2636, 0.5
    %v2669 = vmul.f32 %v2637, 0.5
    %v2670 = vmul.f32 %v2303, %v2638
    %v2671 = vmul.f32 %v2305, %v2639
    %v2672 = vmul.f32 %v2376, %v2640
    %v2673 = vmul.f32 %v2378, %v2641
    %v2674 = vmul.f32 %v2307, %v2642
    %v2675 = vmul.f32 %v2309, %v2643
    %v2676 = vmul.f32 %v2380, %v2644
    %v2677 = vmul.f32 %v2382, %v2645
    %v2678 = vmul.f32 %v2313, %v2646
    %v2679 = vmul.f32 %v2315, %v2647
    %v2680 = vmul.f32 %v2386, %v2648
    %v2681 = vmul.f32 %v2388, %v2649
    %v2682 = vmul.f32 %v2317, %v2650
    %v2683 = vmul.f32 %v2319, %v2651
    %v2684 = vmul.f32 %v2390, %v2652
    %v2685 = vmul.f32 %v2392, %v2653
    %v2686 = vmul.f32 %v2323, %v2654
    %v2687 = vmul.f32 %v2325, %v2655
    %v2688 = vmul.f32 %v2396, %v2656
    %v2689 = vmul.f32 %v2398, %v2657
    %v2690 = vmul.f32 %v2327, %v2658
    %v2691 = vmul.f32 %v2329, %v2659
    %v2692 = vmul.f32 %v2400, %v2660
    %v2693 = vmul.f32 %v2402, %v2661
    %v2694 = vmul.f32 %v2333, %v2662
    %v2695 = vmul.f32 %v2335, %v2663
    %v2696 = vmul.f32 %v2406, %v2664
    %v2697 = vmul.f32 %v2408, %v2665
    %v2698 = vmul.f32 %v2337, %v2666
    %v2699 = vmul.f32 %v2339, %v2667
    %v2700 = vmul.f32 %v2410, %v2668
    %v2701 = vmul.f32 %v2412, %v2669
    %v2702 = vpack.c.bf16 %v2674, %v2670
    %v2703 = vpack.c.bf16 %v2675, %v2671
    %v2704 = vpack.c.bf16 %v2676, %v2672
    %v2705 = vpack.c.bf16 %v2677, %v2673
    %v2706 = vpack.c.bf16 %v2682, %v2678
    %v2707 = vpack.c.bf16 %v2683, %v2679
    %v2708 = vpack.c.bf16 %v2684, %v2680
    %v2709 = vpack.c.bf16 %v2685, %v2681
    %v2710 = vpack.c.bf16 %v2690, %v2686
    %v2711 = vpack.c.bf16 %v2691, %v2687
    %v2712 = vpack.c.bf16 %v2692, %v2688
    %v2713 = vpack.c.bf16 %v2693, %v2689
    %v2714 = vpack.c.bf16 %v2698, %v2694
    %v2715 = vpack.c.bf16 %v2699, %v2695
    %v2716 = vpack.c.bf16 %v2700, %v2696
    %v2717 = vpack.c.bf16 %v2701, %v2697
    %v2718 = vld [vmem:[#allocation30] sm:$0xf]
    %v2719 = vld [vmem:[#allocation30 + $0x4] sm:$0xf]
    %v2720 = vld [vmem:[#allocation30 + $0x8] sm:$0xf]
    %v2721 = vld [vmem:[#allocation30 + $0xc] sm:$0xf]
    %v2722 = vld [vmem:[#allocation30 + $0x10] sm:$0xf]
    %v2723 = vld [vmem:[#allocation30 + $0x14] sm:$0xf]
    %v2724 = vld [vmem:[#allocation30 + $0x18] sm:$0xf]
    %v2725 = vld [vmem:[#allocation30 + $0x1c] sm:$0xf]
    %v2726 = vld [vmem:[#allocation30 + $0x20] sm:$0xf]
    %v2727 = vld [vmem:[#allocation30 + $0x24] sm:$0xf]
    %v2728 = vld [vmem:[#allocation30 + $0x28] sm:$0xf]
    %v2729 = vld [vmem:[#allocation30 + $0x2c] sm:$0xf]
    %v2730 = vld [vmem:[#allocation30 + $0x30] sm:$0xf]
    %v2731 = vld [vmem:[#allocation30 + $0x34] sm:$0xf]
    %v2732 = vld [vmem:[#allocation30 + $0x38] sm:$0xf]
    %v2733 = vld [vmem:[#allocation30 + $0x3c] sm:$0xf]
    %v2734 = vld [vmem:[#allocation30 + $0x40] sm:$0xf]
    %v2735 = vld [vmem:[#allocation30 + $0x44] sm:$0xf]
    %v2736 = vld [vmem:[#allocation30 + $0x48] sm:$0xf]
    %v2737 = vld [vmem:[#allocation30 + $0x4c] sm:$0xf]
    %v2738 = vld [vmem:[#allocation30 + $0x50] sm:$0xf]
    %v2739 = vld [vmem:[#allocation30 + $0x54] sm:$0xf]
    %v2740 = vld [vmem:[#allocation30 + $0x58] sm:$0xf]
    %v2741 = vld [vmem:[#allocation30 + $0x5c] sm:$0xf]
    %v2742 = vld [vmem:[#allocation30 + $0x60] sm:$0xf]
    %v2743 = vld [vmem:[#allocation30 + $0x64] sm:$0xf]
    %v2744 = vld [vmem:[#allocation30 + $0x68] sm:$0xf]
    %v2745 = vld [vmem:[#allocation30 + $0x6c] sm:$0xf]
    %v2746 = vld [vmem:[#allocation30 + $0x70] sm:$0xf]
    %v2747 = vld [vmem:[#allocation30 + $0x74] sm:$0xf]
    %v2748 = vld [vmem:[#allocation30 + $0x78] sm:$0xf]
    %v2749 = vld [vmem:[#allocation30 + $0x7c] sm:$0xf]
    %v2750 = vld [vmem:[#allocation30 + $0x80] sm:$0xf]
    %v2751 = vld [vmem:[#allocation30 + $0x84] sm:$0xf]
    %v2752 = vld [vmem:[#allocation30 + $0x88] sm:$0xf]
    %v2753 = vld [vmem:[#allocation30 + $0x8c] sm:$0xf]
    %v2754 = vld [vmem:[#allocation30 + $0x90] sm:$0xf]
    %v2755 = vld [vmem:[#allocation30 + $0x94] sm:$0xf]
    %v2756 = vld [vmem:[#allocation30 + $0x98] sm:$0xf]
    %v2757 = vld [vmem:[#allocation30 + $0x9c] sm:$0xf]
    %v2758 = vld [vmem:[#allocation30 + $0xa0] sm:$0xf]
    %v2759 = vld [vmem:[#allocation30 + $0xa4] sm:$0xf]
    %v2760 = vld [vmem:[#allocation30 + $0xa8] sm:$0xf]
    %v2761 = vld [vmem:[#allocation30 + $0xac] sm:$0xf]
    %v2762 = vld [vmem:[#allocation30 + $0xb0] sm:$0xf]
    %v2763 = vld [vmem:[#allocation30 + $0xb4] sm:$0xf]
    %v2764 = vld [vmem:[#allocation30 + $0xb8] sm:$0xf]
    %v2765 = vld [vmem:[#allocation30 + $0xbc] sm:$0xf]
    %v2766 = vld [vmem:[#allocation30 + $0xc0] sm:$0xf]
    %v2767 = vld [vmem:[#allocation30 + $0xc4] sm:$0xf]
    %v2768 = vld [vmem:[#allocation30 + $0xc8] sm:$0xf]
    %v2769 = vld [vmem:[#allocation30 + $0xcc] sm:$0xf]
    %v2770 = vld [vmem:[#allocation30 + $0xd0] sm:$0xf]
    %v2771 = vld [vmem:[#allocation30 + $0xd4] sm:$0xf]
    %v2772 = vld [vmem:[#allocation30 + $0xd8] sm:$0xf]
    %v2773 = vld [vmem:[#allocation30 + $0xdc] sm:$0xf]
    %v2774 = vld [vmem:[#allocation30 + $0xe0] sm:$0xf]
    %v2775 = vld [vmem:[#allocation30 + $0xe4] sm:$0xf]
    %v2776 = vld [vmem:[#allocation30 + $0xe8] sm:$0xf]
    %v2777 = vld [vmem:[#allocation30 + $0xec] sm:$0xf]
    %v2778 = vld [vmem:[#allocation30 + $0xf0] sm:$0xf]
    %v2779 = vld [vmem:[#allocation30 + $0xf4] sm:$0xf]
    %v2780 = vld [vmem:[#allocation30 + $0xf8] sm:$0xf]
    %v2781 = vld [vmem:[#allocation30 + $0xfc] sm:$0xf]
    %v2846 = vunpack.c.l.b16 %v2718
    %v2847 = vunpack.c.l.b16 %v2719
    %v2848 = vunpack.c.l.b16 %v2720
    %v2849 = vunpack.c.l.b16 %v2721
    %v2850 = vunpack.c.l.b16 %v2722
    %v2851 = vunpack.c.l.b16 %v2723
    %v2852 = vunpack.c.l.b16 %v2724
    %v2853 = vunpack.c.l.b16 %v2725
    %v2854 = vunpack.c.l.b16 %v2726
    %v2855 = vunpack.c.l.b16 %v2727
    %v2856 = vunpack.c.l.b16 %v2728
    %v2857 = vunpack.c.l.b16 %v2729
    %v2858 = vunpack.c.l.b16 %v2730
    %v2859 = vunpack.c.l.b16 %v2731
    %v2860 = vunpack.c.l.b16 %v2732
    %v2861 = vunpack.c.l.b16 %v2733
    %v2862 = vunpack.c.l.b16 %v2734
    %v2863 = vunpack.c.l.b16 %v2735
    %v2864 = vunpack.c.l.b16 %v2736
    %v2865 = vunpack.c.l.b16 %v2737
    %v2866 = vunpack.c.l.b16 %v2738
    %v2867 = vunpack.c.l.b16 %v2739
    %v2868 = vunpack.c.l.b16 %v2740
    %v2869 = vunpack.c.l.b16 %v2741
    %v2870 = vunpack.c.l.b16 %v2742
    %v2871 = vunpack.c.l.b16 %v2743
    %v2872 = vunpack.c.l.b16 %v2744
    %v2873 = vunpack.c.l.b16 %v2745
    %v2874 = vunpack.c.l.b16 %v2746
    %v2875 = vunpack.c.l.b16 %v2747
    %v2876 = vunpack.c.l.b16 %v2748
    %v2877 = vunpack.c.l.b16 %v2749
    %v2878 = vunpack.c.l.b16 %v2750
    %v2879 = vunpack.c.l.b16 %v2751
    %v2880 = vunpack.c.l.b16 %v2752
    %v2881 = vunpack.c.l.b16 %v2753
    %v2882 = vunpack.c.l.b16 %v2754
    %v2883 = vunpack.c.l.b16 %v2755
    %v2884 = vunpack.c.l.b16 %v2756
    %v2885 = vunpack.c.l.b16 %v2757
    %v2886 = vunpack.c.l.b16 %v2758
    %v2887 = vunpack.c.l.b16 %v2759
    %v2888 = vunpack.c.l.b16 %v2760
    %v2889 = vunpack.c.l.b16 %v2761
    %v2890 = vunpack.c.l.b16 %v2762
    %v2891 = vunpack.c.l.b16 %v2763
    %v2892 = vunpack.c.l.b16 %v2764
    %v2893 = vunpack.c.l.b16 %v2765
    %v2894 = vunpack.c.l.b16 %v2766
    %v2895 = vunpack.c.l.b16 %v2767
    %v2896 = vunpack.c.l.b16 %v2768
    %v2897 = vunpack.c.l.b16 %v2769
    %v2898 = vunpack.c.l.b16 %v2770
    %v2899 = vunpack.c.l.b16 %v2771
    %v2900 = vunpack.c.l.b16 %v2772
    %v2901 = vunpack.c.l.b16 %v2773
    %v2902 = vunpack.c.l.b16 %v2774
    %v2903 = vunpack.c.l.b16 %v2775
    %v2904 = vunpack.c.l.b16 %v2776
    %v2905 = vunpack.c.l.b16 %v2777
    %v2906 = vunpack.c.l.b16 %v2778
    %v2907 = vunpack.c.l.b16 %v2779
    %v2908 = vunpack.c.l.b16 %v2780
    %v2909 = vunpack.c.l.b16 %v2781
    %v2910 = vpack.c.b16 %v2847, %v2846
    %v2911 = vpack.c.b16 %v2849, %v2848
    %v2912 = vpack.c.b16 %v2851, %v2850
    %v2913 = vpack.c.b16 %v2853, %v2852
    %v2914 = vpack.c.b16 %v2855, %v2854
    %v2915 = vpack.c.b16 %v2857, %v2856
    %v2916 = vpack.c.b16 %v2859, %v2858
    %v2917 = vpack.c.b16 %v2861, %v2860
    %v2918 = vpack.c.b16 %v2863, %v2862
    %v2919 = vpack.c.b16 %v2865, %v2864
    %v2920 = vpack.c.b16 %v2867, %v2866
    %v2921 = vpack.c.b16 %v2869, %v2868
    %v2922 = vpack.c.b16 %v2871, %v2870
    %v2923 = vpack.c.b16 %v2873, %v2872
    %v2924 = vpack.c.b16 %v2875, %v2874
    %v2925 = vpack.c.b16 %v2877, %v2876
    %v2926 = vpack.c.b16 %v2879, %v2878
    %v2927 = vpack.c.b16 %v2881, %v2880
    %v2928 = vpack.c.b16 %v2883, %v2882
    %v2929 = vpack.c.b16 %v2885, %v2884
    %v2930 = vpack.c.b16 %v2887, %v2886
    %v2931 = vpack.c.b16 %v2889, %v2888
    %v2932 = vpack.c.b16 %v2891, %v2890
    %v2933 = vpack.c.b16 %v2893, %v2892
    %v2934 = vpack.c.b16 %v2895, %v2894
    %v2935 = vpack.c.b16 %v2897, %v2896
    %v2936 = vpack.c.b16 %v2899, %v2898
    %v2937 = vpack.c.b16 %v2901, %v2900
    %v2938 = vpack.c.b16 %v2903, %v2902
    %v2939 = vpack.c.b16 %v2905, %v2904
    %v2940 = vpack.c.b16 %v2907, %v2906
    %v2941 = vpack.c.b16 %v2909, %v2908
    %2974 = vmatprep.subr.bf16.mxu0 0
    %2975 = vmatpush1.bf16.msra.mxu0 %v2910
    %2976 = vmatprep.subr.bf16.mxu0 0
    %2977 = vmatpush1.bf16.msra.mxu0 %v2911
    %2978 = vmatprep.subr.bf16.mxu0 0
    %2979 = vmatpush1.bf16.msra.mxu0 %v2912
    %2980 = vmatprep.subr.bf16.mxu0 0
    %2981 = vmatpush1.bf16.msra.mxu0 %v2913
    %2982 = vmatprep.subr.bf16.mxu0 0
    %2983 = vmatpush1.bf16.msra.mxu0 %v2914
    %2984 = vmatprep.subr.bf16.mxu0 0
    %2985 = vmatpush1.bf16.msra.mxu0 %v2915
    %2986 = vmatprep.subr.bf16.mxu0 0
    %2987 = vmatpush1.bf16.msra.mxu0 %v2916
    %2988 = vmatprep.subr.bf16.mxu0 0
    %2989 = vmatpush1.bf16.msra.mxu0 %v2917
    %2990 = vmatprep.subr.bf16.mxu0 0
    %2991 = vmatpush1.bf16.msra.mxu0 %v2918
    %2992 = vmatprep.subr.bf16.mxu0 0
    %2993 = vmatpush1.bf16.msra.mxu0 %v2919
    %2994 = vmatprep.subr.bf16.mxu0 0
    %2995 = vmatpush1.bf16.msra.mxu0 %v2920
    %2996 = vmatprep.subr.bf16.mxu0 0
    %2997 = vmatpush1.bf16.msra.mxu0 %v2921
    %2998 = vmatprep.subr.bf16.mxu0 0
    %2999 = vmatpush1.bf16.msra.mxu0 %v2922
    %3000 = vmatprep.subr.bf16.mxu0 0
    %3001 = vmatpush1.bf16.msra.mxu0 %v2923
    %3002 = vmatprep.subr.bf16.mxu0 0
    %3003 = vmatpush1.bf16.msra.mxu0 %v2924
    %3004 = vmatprep.subr.bf16.mxu0 0
    %3005 = vmatpush1.bf16.msra.mxu0 %v2925
    %3006 = vmatprep.mubr.bf16.mxu0 %v2703
    %3007 = vmatmul.mubr.bf16.gmra.mrb[0].mxu0 %v2702
    %v3008 = vpop.f32.mrb[0].mxu0
    %v3009 = vadd.f32 0.0, %v3008
    %v3010 = vpop.f32.mrb[0].mxu0
    %v3011 = vpop.f32.mrb[0].mxu0
    %v3012 = vadd.f32 0.0, %v3011
    %v3013 = vpop.f32.mrb[0].mxu0
    %3014 = vmatprep.mubr.bf16.mxu0 %v2707
    %3015 = vmatmul.mubr.bf16.gmra.mrb[0].mxu0 %v2706
    %v3016 = vpop.f32.mrb[0].mxu0
    %v3017 = vadd.f32 0.0, %v3016
    %v3018 = vpop.f32.mrb[0].mxu0
    %v3019 = vpop.f32.mrb[0].mxu0
    %v3020 = vadd.f32 0.0, %v3019
    %v3021 = vpop.f32.mrb[0].mxu0
    %3022 = vmatprep.mubr.bf16.mxu0 %v2711
    %3023 = vmatmul.mubr.bf16.gmra.mrb[0].mxu0 %v2710
    %v3024 = vpop.f32.mrb[0].mxu0
    %v3025 = vadd.f32 0.0, %v3024
    %v3026 = vpop.f32.mrb[0].mxu0
    %v3027 = vpop.f32.mrb[0].mxu0
    %v3028 = vadd.f32 0.0, %v3027
    %v3029 = vpop.f32.mrb[0].mxu0
    %3030 = vmatprep.mubr.bf16.mxu0 %v2715
    %3031 = vmatmul.mubr.bf16.gmra.mrb[0].mxu0 %v2714
    %v3032 = vpop.f32.mrb[0].mxu0
    %v3033 = vadd.f32 0.0, %v3032
    %v3034 = vpop.f32.mrb[0].mxu0
    %v3035 = vpop.f32.mrb[0].mxu0
    %v3036 = vadd.f32 0.0, %v3035
    %v3037 = vpop.f32.mrb[0].mxu0
    %3038 = vdwg.mxu0
    %3039 = vmatprep.subr.bf16.mxu0 0
    %3040 = vmatpush1.bf16.msra.mxu0 %v2926
    %3041 = vmatprep.subr.bf16.mxu0 0
    %3042 = vmatpush1.bf16.msra.mxu0 %v2927
    %3043 = vmatprep.subr.bf16.mxu0 0
    %3044 = vmatpush1.bf16.msra.mxu0 %v2928
    %3045 = vmatprep.subr.bf16.mxu0 0
    %3046 = vmatpush1.bf16.msra.mxu0 %v2929
    %3047 = vmatprep.subr.bf16.mxu0 0
    %3048 = vmatpush1.bf16.msra.mxu0 %v2930
    %3049 = vmatprep.subr.bf16.mxu0 0
    %3050 = vmatpush1.bf16.msra.mxu0 %v2931
    %3051 = vmatprep.subr.bf16.mxu0 0
    %3052 = vmatpush1.bf16.msra.mxu0 %v2932
    %3053 = vmatprep.subr.bf16.mxu0 0
    %3054 = vmatpush1.bf16.msra.mxu0 %v2933
    %3055 = vmatprep.subr.bf16.mxu0 0
    %3056 = vmatpush1.bf16.msra.mxu0 %v2934
    %3057 = vmatprep.subr.bf16.mxu0 0
    %3058 = vmatpush1.bf16.msra.mxu0 %v2935
    %3059 = vmatprep.subr.bf16.mxu0 0
    %3060 = vmatpush1.bf16.msra.mxu0 %v2936
    %3061 = vmatprep.subr.bf16.mxu0 0
    %3062 = vmatpush1.bf16.msra.mxu0 %v2937
    %3063 = vmatprep.subr.bf16.mxu0 0
    %3064 = vmatpush1.bf16.msra.mxu0 %v2938
    %3065 = vmatprep.subr.bf16.mxu0 0
    %3066 = vmatpush1.bf16.msra.mxu0 %v2939
    %3067 = vmatprep.subr.bf16.mxu0 0
    %3068 = vmatpush1.bf16.msra.mxu0 %v2940
    %3069 = vmatprep.subr.bf16.mxu0 0
    %3070 = vmatpush1.bf16.msra.mxu0 %v2941
    %3071 = vmatprep.mubr.bf16.mxu0 %v2705
    %3072 = vmatmul.mubr.bf16.gmra.mrb[0].mxu0 %v2704
    %v3073 = vpop.f32.mrb[0].mxu0
    %v3074 = vadd.f32 %v3009, %v3073
    %v3075 = vpop.f32.mrb[0].mxu0
    %v3076 = vpop.f32.mrb[0].mxu0
    %v3077 = vadd.f32 %v3012, %v3076
    %v3078 = vpop.f32.mrb[0].mxu0
    %3079 = vmatprep.mubr.bf16.mxu0 %v2709
    %3080 = vmatmul.mubr.bf16.gmra.mrb[0].mxu0 %v2708
    %v3081 = vpop.f32.mrb[0].mxu0
    %v3082 = vadd.f32 %v3017, %v3081
    %v3083 = vpop.f32.mrb[0].mxu0
    %v3084 = vpop.f32.mrb[0].mxu0
    %v3085 = vadd.f32 %v3020, %v3084
    %v3086 = vpop.f32.mrb[0].mxu0
    %3087 = vmatprep.mubr.bf16.mxu0 %v2713
    %3088 = vmatmul.mubr.bf16.gmra.mrb[0].mxu0 %v2712
    %v3089 = vpop.f32.mrb[0].mxu0
    %v3090 = vadd.f32 %v3025, %v3089
    %v3091 = vpop.f32.mrb[0].mxu0
    %v3092 = vpop.f32.mrb[0].mxu0
    %v3093 = vadd.f32 %v3028, %v3092
    %v3094 = vpop.f32.mrb[0].mxu0
    %3095 = vmatprep.mubr.bf16.mxu0 %v2717
    %3096 = vmatmul.mubr.bf16.gmra.mrb[0].mxu0 %v2716
    %v3097 = vpop.f32.mrb[0].mxu0
    %v3098 = vadd.f32 %v3033, %v3097
    %v3099 = vpop.f32.mrb[0].mxu0
    %v3100 = vpop.f32.mrb[0].mxu0
    %v3101 = vadd.f32 %v3036, %v3100
    %v3102 = vpop.f32.mrb[0].mxu0
    %3103 = vdwg.mxu0
    %v3104 = vadd.f32 %v1924, %v3074
    %v3105 = vadd.f32 %v1925, %v3077
    %v3106 = vadd.f32 %v1926, %v3082
    %v3107 = vadd.f32 %v1927, %v3085
    %v3108 = vadd.f32 %v1928, %v3090
    %v3109 = vadd.f32 %v1929, %v3093
    %v3110 = vadd.f32 %v1930, %v3098
    %v3111 = vadd.f32 %v1931, %v3101
    %v3112 = vld [vmem:[#allocation32] sm:$0x1]
    %v3114 = vlaneseq
    %v3115 = vshrl.u32 %v3114, 7
    %v3116 = vsub.s32 0, %v3115
    %v3117 = vrot.slane %v3112, %v3116
    %v3119 = vadd.f32 %v3104, %v3117
    %v3120 = vadd.f32 %v3105, %v3117
    %v3121 = vadd.f32 %v3106, %v3117
    %v3122 = vadd.f32 %v3107, %v3117
    %v3123 = vadd.f32 %v3108, %v3117
    %v3124 = vadd.f32 %v3109, %v3117
    %v3125 = vadd.f32 %v3110, %v3117
    %v3126 = vadd.f32 %v3111, %v3117
    %3127 = vst [vmem:[#allocation33] sm:$0xff] %v3119
    %3128 = vst [vmem:[#allocation33 + $0x8] sm:$0xff] %v3120
    %3129 = vst [vmem:[#allocation33 + $0x10] sm:$0xff] %v3121
    %3130 = vst [vmem:[#allocation33 + $0x18] sm:$0xff] %v3122
    %3131 = vst [vmem:[#allocation33 + $0x20] sm:$0xff] %v3123
    %3132 = vst [vmem:[#allocation33 + $0x28] sm:$0xff] %v3124
    %3133 = vst [vmem:[#allocation33 + $0x30] sm:$0xff] %v3125
    %3134 = vst [vmem:[#allocation33 + $0x38] sm:$0xff] %v3126
    // Predicated region
    $region145: #{tpu_custom_call.1} parent=1 // pred_check
      _
    $region146: #{tpu_custom_call.1} parent=1 // pred_check_branch
      %3136 = sbr.rel (0) target = $region148
    $region147: #{tpu_custom_call.1} parent=1 // pred_region
      %s3138 = ssub.s32 1024, 1024
      %3139 = vsyncadd [#allocation8], %s3138
      %s3140 = sshll.u32 [#allocation33], 4
      %s3141 = int_to_ptr.vmem [resolvable:$true] %s3140
      %3146 = dma.vmem_to_hbm [thread:$0]  %s3141, 1024, %s17, [#allocation8], 128, 128, 8
    $region148: #{tpu_custom_call.1} parent=1 // pred_fallthru
      _
    // Predicated region
    $region149: #{tpu_custom_call.1} parent=1 // pred_check
      _
    $region150: #{tpu_custom_call.1} parent=1 // pred_check_branch
      %3148 = sbr.rel (0) target = $region152
    $region151: #{tpu_custom_call.1} parent=1 // pred_region
      %3149 = dma.done [#allocation8], 1024
    $region152: #{tpu_custom_call.1} parent=1 // pred_fallthru
      _
    %3150 = vsyncpa [#allocation7], 1
    %3151 = vsyncpa [#allocation10], 1
    %3152 = vsyncpa [#allocation13], 1
    %3153 = vsyncpa [#allocation16], 1
    %3154 = vsyncpa [#allocation19], 1
    %3155 = vsyncpa [#allocation22], 1
    %3156 = vsyncpa [#allocation25], 1
    %3157 = vsyncpa [#allocation28], 1
    %3158 = vsyncpa [#allocation31], 1
    %3159 = vsyncpa [#allocation8], 1

</llo_original>
